<compile_context>
chip_gen: v6e
topology: v6e:2x2x1
jax: 0.10.0
libtpu: 0.0.40
codegen_flags: <defaults>
</compile_context>

<pallas_src>
import math
import functools

import jax
import jax.numpy as jnp
from jax.experimental import pallas as pl
from jax.experimental.pallas import tpu as pltpu


# ----------------------------------------------------------------------------
# Kernel 1: per-patch feature extraction (stand-in FE + backbone + bb_condense)
# bf16 matmul inputs, f32 accumulation, single lane-dense (tile_p, D) output.
# ----------------------------------------------------------------------------
def _feature_kernel(p_ref, wfe_ref, bfe_ref, wbb_ref, bbb_ref, wcond_ref, bcond_ref,
                    out_ref):
    patches = p_ref[...]                                                   # (TP, F) bf16
    # TODO(synk): stand-in for the frozen MISLnet feature extractor (outputs 200 dims).
    fe = jnp.tanh(jnp.dot(patches, wfe_ref[...],
                          preferred_element_type=jnp.float32) + bfe_ref[...])
    # TODO(synk): stand-in for the Xception backbone (outputs embed_dim dims).
    bb = jnp.maximum(jnp.dot(patches, wbb_ref[...],
                             preferred_element_type=jnp.float32) + bbb_ref[...], 0.0)
    # bb_condense: Linear(embed_dim, embed_dim - 200)  (exact)
    bbc = jnp.dot(bb.astype(jnp.bfloat16), wcond_ref[...],
                  preferred_element_type=jnp.float32) + bcond_ref[...]
    # torch.cat([bb, fe], dim=1) done in-register -> one lane-dense D-wide store.
    out_ref[...] = jnp.concatenate([bbc, fe], axis=1)                      # (TP, D) f32


def feature_extract(patches, w_fe, b_fe, w_bb, b_bb, w_cond, b_cond, *, tile_p=128):
    P, F = patches.shape
    FE = w_fe.shape[1]
    DC = w_cond.shape[1]
    D = DC + FE
    num_tiles = pl.cdiv(P, tile_p)
    P_pad = num_tiles * tile_p
    if P_pad != P:
        patches = jnp.pad(patches, ((0, P_pad - P), (0, 0)))
    patches = patches.astype(jnp.bfloat16)

    bb_fe = pl.pallas_call(
        _feature_kernel,
        out_shape=jax.ShapeDtypeStruct((P_pad, D), jnp.float32),
        grid=(num_tiles,),
        in_specs=[
            pl.BlockSpec((tile_p, F), lambda i: (i, 0)),
            pl.BlockSpec((F, FE), lambda i: (0, 0)),
            pl.BlockSpec((1, FE), lambda i: (0, 0)),
            pl.BlockSpec((F, D), lambda i: (0, 0)),
            pl.BlockSpec((1, D), lambda i: (0, 0)),
            pl.BlockSpec((D, DC), lambda i: (0, 0)),
            pl.BlockSpec((1, DC), lambda i: (0, 0)),
        ],
        out_specs=pl.BlockSpec((tile_p, D), lambda i: (i, 0)),
        compiler_params=pltpu.CompilerParams(dimension_semantics=("parallel",)),
    )(patches, w_fe, b_fe, w_bb, b_bb, w_cond, b_cond)
    return bb_fe[:P]


# ----------------------------------------------------------------------------
# Kernel 2: attention scaling + full classifier (stages 1-3, fused) + localizer,
# one batch element per grid step.  bf16 matmul inputs, f32 accumulation.
# ----------------------------------------------------------------------------
def _head_kernel(bbfe_ref, tmpl_ref, wc1_ref, bc1_ref, wc2_ref, bc2_ref,
                 w30_ref, w31_ref, bc3_ref,
                 loc1_ref, loc2_ref, loc3_ref, loc4_ref,
                 cls_ref, patch_ref):
    x = bbfe_ref[0]                                  # (N, D) f32
    xb = x.astype(jnp.bfloat16)
    t = tmpl_ref[...]                                # (L, D) bf16
    d = x.shape[1]

    # TODO(synk): stand-in for LongDistanceAttention: per-template dot-product
    # attention over patches, softmax over the patch axis -> lda_maps[b, l, n].
    scores = jax.lax.dot_general(xb, t, (((1,), (1,)), ((), ())),
                                 preferred_element_type=jnp.float32)      # (N, L)
    scores = scores * (1.0 / math.sqrt(d))
    m = jnp.max(scores, axis=0, keepdims=True)
    e = jnp.exp(scores - m)
    lda_t = e / jnp.sum(e, axis=0, keepdims=True)    # (N, L): softmax over patches

    # einsum('ijk,ilj->iljk') then einsum('iljk->ijk')  ==  x[n, :] * sum_l lda[l, n]
    w = jnp.sum(lda_t, axis=1, keepdims=True)        # (N, 1)
    scaled = x * w                                   # (N, D) f32
    sb = scaled.astype(jnp.bfloat16)

    # classifier stages 1-2: Linear(D,200) -> ReLU -> [Dropout=id] -> Linear(200,2)
    h1 = jnp.maximum(jnp.dot(sb, wc1_ref[...],
                             preferred_element_type=jnp.float32) + bc1_ref[...], 0.0)
    logits = jnp.dot(h1.astype(jnp.bfloat16), wc2_ref[...],
                     preferred_element_type=jnp.float32) + bc2_ref[...]   # (N, 2)

    # classifier stage 3 (fused): Flatten -> ReLU -> [Dropout=id] -> Linear(2N, 2)
    # flat[2n+c] = logits[n, c]; wc3 split into even/odd rows (w30/w31), so the
    # (1,2N)@(2N,2) matmul becomes an elementwise combine + sublane reduction.
    f = jnp.maximum(logits, 0.0)
    contrib = f[:, 0:1] * w30_ref[...] + f[:, 1:2] * w31_ref[...]         # (N, 2)
    cls_ref[0] = jnp.sum(contrib, axis=0, keepdims=True) + bc3_ref[...]   # (1, 2)

    # localizer: 1x1 conv chain == per-patch channel MLP (no bias), sigmoid output.
    h = jnp.maximum(jnp.dot(sb, loc1_ref[...], preferred_element_type=jnp.float32), 0.0)
    h = jnp.maximum(jnp.dot(h.astype(jnp.bfloat16), loc2_ref[...],
                            preferred_element_type=jnp.float32), 0.0)
    h = jnp.maximum(jnp.dot(h.astype(jnp.bfloat16), loc3_ref[...],
                            preferred_element_type=jnp.float32), 0.0)
    patch_ref[0] = jax.nn.sigmoid(jnp.dot(h.astype(jnp.bfloat16), loc4_ref[...],
                                          preferred_element_type=jnp.float32))  # (N, 1)


def head(bb_fe, templates, wc1, bc1, wc2, bc2, wc3, bc3, loc1, loc2, loc3, loc4):
    B, N, D = bb_fe.shape
    L = templates.shape[0]
    # Even/odd row split of the (2N, 2) flatten-classifier weight (plain XLA glue).
    w30 = wc3[0::2, :].astype(jnp.float32)   # (N, 2)
    w31 = wc3[1::2, :].astype(jnp.float32)   # (N, 2)

    cls, patch = pl.pallas_call(
        _head_kernel,
        out_shape=(jax.ShapeDtypeStruct((B, 1, 2), jnp.float32),
                   jax.ShapeDtypeStruct((B, N, 1), jnp.float32)),
        grid=(B,),
        in_specs=[
            pl.BlockSpec((1, N, D), lambda b: (b, 0, 0)),
            pl.BlockSpec((L, D), lambda b: (0, 0)),
            pl.BlockSpec(wc1.shape, lambda b: (0, 0)),
            pl.BlockSpec(bc1.shape, lambda b: (0, 0)),
            pl.BlockSpec(wc2.shape, lambda b: (0, 0)),
            pl.BlockSpec(bc2.shape, lambda b: (0, 0)),
            pl.BlockSpec(w30.shape, lambda b: (0, 0)),
            pl.BlockSpec(w31.shape, lambda b: (0, 0)),
            pl.BlockSpec(bc3.shape, lambda b: (0, 0)),
            pl.BlockSpec(loc1.shape, lambda b: (0, 0)),
            pl.BlockSpec(loc2.shape, lambda b: (0, 0)),
            pl.BlockSpec(loc3.shape, lambda b: (0, 0)),
            pl.BlockSpec(loc4.shape, lambda b: (0, 0)),
        ],
        out_specs=(
            pl.BlockSpec((1, 1, 2), lambda b: (b, 0, 0)),
            pl.BlockSpec((1, N, 1), lambda b: (b, 0, 0)),
        ),
        compiler_params=pltpu.CompilerParams(dimension_semantics=("parallel",)),
    )(bb_fe, templates, wc1, bc1, wc2, bc2, w30, w31, bc3, loc1, loc2, loc3, loc4)
    return cls.reshape(B, 2), patch.reshape(B, N)


# ----------------------------------------------------------------------------
# Full forward (JAX glue around the two Pallas kernels)
# ----------------------------------------------------------------------------
def spatial_attention_pretrained_fe_forward(params, x, patch_size):
    B, C, H, W = x.shape
    ps = patch_size
    nH, nW = H // ps, W // ps
    # x.unfold(2,ps,ps).unfold(3,ps,ps).permute(0,2,3,1,4,5).view(-1,C,ps,ps)
    patches = x.reshape(B, C, nH, ps, nW, ps).transpose(0, 2, 4, 1, 3, 5)
    patches = patches.reshape(B * nH * nW, C * ps * ps)

    bb_fe = feature_extract(patches,
                            params["w_fe"], params["b_fe"],
                            params["w_bb"], params["b_bb"],
                            params["w_cond"], params["b_cond"])
    D = bb_fe.shape[1]
    bb_fe = bb_fe.reshape(B, nH * nW, D)              # .view(B, -1, embed_dim)

    class_label, patch_label = head(bb_fe, params["templates"],
                                    params["wc1"], params["bc1"],
                                    params["wc2"], params["bc2"],
                                    params["wc3"], params["bc3"],
                                    params["loc1"], params["loc2"],
                                    params["loc3"], params["loc4"])
    return class_label, patch_label


def init_params(key, *, in_chans, patch_size, embed_dim, num_patches, num_forg_template):
    F = in_chans * patch_size * patch_size
    D = embed_dim
    ks = jax.random.split(key, 12)
    s = 0.02
    f32 = jnp.float32
    bf16 = jnp.bfloat16
    return {
        # matmul weights stored in bf16 (f32 accumulation inside the kernels)
        "w_fe": (jax.random.normal(ks[0], (F, 200), f32) * s).astype(bf16),
        "b_fe": jnp.zeros((1, 200), f32),
        "w_bb": (jax.random.normal(ks[1], (F, D), f32) * s).astype(bf16),
        "b_bb": jnp.zeros((1, D), f32),
        "w_cond": (jax.random.normal(ks[2], (D, D - 200), f32) * s).astype(bf16),  # bb_condense
        "b_cond": jnp.zeros((1, D - 200), f32),
        "templates": (jax.random.normal(ks[3], (num_forg_template, D), f32) * s).astype(bf16),
        "wc1": (jax.random.normal(ks[4], (D, 200), f32) * s).astype(bf16),   # LazyLinear(200)
        "bc1": jnp.zeros((1, 200), f32),
        "wc2": (jax.random.normal(ks[5], (200, 2), f32) * s).astype(bf16),   # LazyLinear(2)
        "bc2": jnp.zeros((1, 2), f32),
        "wc3": jax.random.normal(ks[6], (2 * num_patches, 2), f32) * s,      # LazyLinear(2)
        "bc3": jnp.zeros((1, 2), f32),
        "loc1": (jax.random.normal(ks[7], (D, D // 4), f32) * s).astype(bf16),  # 1x1 convs (no bias)
        "loc2": (jax.random.normal(ks[8], (D // 4, D // 8), f32) * s).astype(bf16),
        "loc3": (jax.random.normal(ks[9], (D // 8, D // 32), f32) * s).astype(bf16),
        "loc4": (jax.random.normal(ks[10], (D // 32, 1), f32) * s).astype(bf16),
    }


if __name__ == "__main__":
    B, C, H, W = 2, 3, 32, 32
    ps = 16
    D = 256          # embed_dim (> 200 so bb_condense Linear(D, D-200) is valid)
    L = 3            # num_forg_template
    N = (H // ps) * (W // ps)

    key = jax.random.PRNGKey(0)
    kx, kp = jax.random.split(key)
    x = jax.random.normal(kx, (B, C, H, W), jnp.float32)
    params = init_params(kp, in_chans=C, patch_size=ps, embed_dim=D,
                         num_patches=N, num_forg_template=L)

    fwd = jax.jit(functools.partial(spatial_attention_pretrained_fe_forward,
                                    patch_size=ps))
    class_label, patch_label = fwd(params, x)
    jax.block_until_ready((class_label, patch_label))

    assert class_label.shape == (B, 2), class_label.shape
    assert patch_label.shape == (B, N), patch_label.shape
    assert bool(jnp.all(jnp.isfinite(class_label)))
    assert bool(jnp.all(jnp.isfinite(patch_label)))
    print("KERNEL_OK")
</pallas_src>

<mosaic_0001>
module attributes {stable_mosaic.version = 11 : i64} {
  func.func @_feature_kernel(%arg0: i32, %arg1: memref<128x768xbf16, #tpu.memory_space<vmem>>, %arg2: memref<768x200xbf16, #tpu.memory_space<vmem>>, %arg3: memref<1x200xf32, #tpu.memory_space<vmem>>, %arg4: memref<768x256xbf16, #tpu.memory_space<vmem>>, %arg5: memref<1x256xf32, #tpu.memory_space<vmem>>, %arg6: memref<256x56xbf16, #tpu.memory_space<vmem>>, %arg7: memref<1x56xf32, #tpu.memory_space<vmem>>, %arg8: memref<128x256xf32, #tpu.memory_space<vmem>>) attributes {dimension_semantics = [#tpu.dimension_semantics<parallel>], iteration_bounds = array<i64: 1>, scalar_prefetch = 0 : i64, scratch_operands = 0 : i64, tpu.core_type = #tpu.core_type<tc>, window_params = [{transform_indices = @transform_0, window_bounds = array<i64: 128, 768>}, {pipeline_mode = #tpu.pipeline_mode<synchronous>, transform_indices = @transform_1, window_bounds = array<i64: 768, 200>}, {pipeline_mode = #tpu.pipeline_mode<synchronous>, transform_indices = @transform_2, window_bounds = array<i64: 1, 200>}, {pipeline_mode = #tpu.pipeline_mode<synchronous>, transform_indices = @transform_3, window_bounds = array<i64: 768, 256>}, {pipeline_mode = #tpu.pipeline_mode<synchronous>, transform_indices = @transform_4, window_bounds = array<i64: 1, 256>}, {pipeline_mode = #tpu.pipeline_mode<synchronous>, transform_indices = @transform_5, window_bounds = array<i64: 256, 56>}, {pipeline_mode = #tpu.pipeline_mode<synchronous>, transform_indices = @transform_6, window_bounds = array<i64: 1, 56>}, {transform_indices = @transform_7, window_bounds = array<i64: 128, 256>}]} {
    %c0 = arith.constant 0 : index
    %c0_0 = arith.constant 0 : index
    %0 = vector.load %arg1[%c0, %c0_0] : memref<128x768xbf16, #tpu.memory_space<vmem>>, vector<128x768xbf16>
    %c0_1 = arith.constant 0 : index
    %c0_2 = arith.constant 0 : index
    %1 = vector.load %arg2[%c0_1, %c0_2] : memref<768x200xbf16, #tpu.memory_space<vmem>>, vector<768x200xbf16>
    %cst = arith.constant dense<0.000000e+00> : vector<128x200xf32>
    %2 = tpu.matmul %0, %1, %cst {dimension_numbers = #tpu.dot_dimension_numbers<[1], [0], [0], [1], [0, 0, 1, 1], [], []>} : vector<128x768xbf16>, vector<768x200xbf16>, vector<128x200xf32> -> vector<128x200xf32>
    %c0_3 = arith.constant 0 : index
    %c0_4 = arith.constant 0 : index
    %3 = vector.load %arg3[%c0_3, %c0_4] : memref<1x200xf32, #tpu.memory_space<vmem>>, vector<1x200xf32>
    %4 = vector.broadcast %3 : vector<1x200xf32> to vector<128x200xf32>
    %5 = arith.addf %2, %4 : vector<128x200xf32>
    %6 = math.tanh %5 : vector<128x200xf32>
    %c0_5 = arith.constant 0 : index
    %c0_6 = arith.constant 0 : index
    %7 = vector.load %arg4[%c0_5, %c0_6] : memref<768x256xbf16, #tpu.memory_space<vmem>>, vector<768x256xbf16>
    %cst_7 = arith.constant dense<0.000000e+00> : vector<128x256xf32>
    %8 = tpu.matmul %0, %7, %cst_7 {dimension_numbers = #tpu.dot_dimension_numbers<[1], [0], [0], [1], [0, 0, 1, 1], [], []>} : vector<128x768xbf16>, vector<768x256xbf16>, vector<128x256xf32> -> vector<128x256xf32>
    %c0_8 = arith.constant 0 : index
    %c0_9 = arith.constant 0 : index
    %9 = vector.load %arg5[%c0_8, %c0_9] : memref<1x256xf32, #tpu.memory_space<vmem>>, vector<1x256xf32>
    %10 = vector.broadcast %9 : vector<1x256xf32> to vector<128x256xf32>
    %11 = arith.addf %8, %10 : vector<128x256xf32>
    %cst_10 = arith.constant 0.000000e+00 : f32
    %12 = vector.broadcast %cst_10 : f32 to vector<128x256xf32>
    %13 = arith.maximumf %11, %12 : vector<128x256xf32>
    %14 = arith.truncf %13 : vector<128x256xf32> to vector<128x256xbf16>
    %c0_11 = arith.constant 0 : index
    %c0_12 = arith.constant 0 : index
    %15 = vector.load %arg6[%c0_11, %c0_12] : memref<256x56xbf16, #tpu.memory_space<vmem>>, vector<256x56xbf16>
    %cst_13 = arith.constant dense<0.000000e+00> : vector<128x56xf32>
    %16 = tpu.matmul %14, %15, %cst_13 {dimension_numbers = #tpu.dot_dimension_numbers<[1], [0], [0], [1], [0, 0, 1, 1], [], []>} : vector<128x256xbf16>, vector<256x56xbf16>, vector<128x56xf32> -> vector<128x56xf32>
    %c0_14 = arith.constant 0 : index
    %c0_15 = arith.constant 0 : index
    %17 = vector.load %arg7[%c0_14, %c0_15] : memref<1x56xf32, #tpu.memory_space<vmem>>, vector<1x56xf32>
    %18 = vector.broadcast %17 : vector<1x56xf32> to vector<128x56xf32>
    %19 = arith.addf %16, %18 : vector<128x56xf32>
    %20 = tpu.concatenate %19, %6 in 1 : vector<128x56xf32>, vector<128x200xf32> -> vector<128x256xf32>
    %c0_16 = arith.constant 0 : index
    %c0_17 = arith.constant 0 : index
    %21 = vector.load %arg8[%c0_16, %c0_17] : memref<128x256xf32, #tpu.memory_space<vmem>>, vector<128x256xf32>
    tpu.vector_store %arg8[%c0_16, %c0_17], %20 {strides = array<i32>} : memref<128x256xf32, #tpu.memory_space<vmem>>, vector<128x256xf32>,
    return
  }
  func.func @transform_0(%arg0: i32) -> (i32, i32) {
    %c0_i32 = arith.constant 0 : i32
    %c0_i32_0 = arith.constant 0 : i32
    return %arg0, %c0_i32 : i32, i32
  }
  func.func @transform_1(%arg0: i32) -> (i32, i32) {
    %c0_i32 = arith.constant 0 : i32
    %c0_i32_0 = arith.constant 0 : i32
    %c0_i32_1 = arith.constant 0 : i32
    return %c0_i32, %c0_i32_0 : i32, i32
  }
  func.func @transform_2(%arg0: i32) -> (i32, i32) {
    %c0_i32 = arith.constant 0 : i32
    %c0_i32_0 = arith.constant 0 : i32
    %c0_i32_1 = arith.constant 0 : i32
    return %c0_i32, %c0_i32_0 : i32, i32
  }
  func.func @transform_3(%arg0: i32) -> (i32, i32) {
    %c0_i32 = arith.constant 0 : i32
    %c0_i32_0 = arith.constant 0 : i32
    %c0_i32_1 = arith.constant 0 : i32
    return %c0_i32, %c0_i32_0 : i32, i32
  }
  func.func @transform_4(%arg0: i32) -> (i32, i32) {
    %c0_i32 = arith.constant 0 : i32
    %c0_i32_0 = arith.constant 0 : i32
    %c0_i32_1 = arith.constant 0 : i32
    return %c0_i32, %c0_i32_0 : i32, i32
  }
  func.func @transform_5(%arg0: i32) -> (i32, i32) {
    %c0_i32 = arith.constant 0 : i32
    %c0_i32_0 = arith.constant 0 : i32
    %c0_i32_1 = arith.constant 0 : i32
    return %c0_i32, %c0_i32_0 : i32, i32
  }
  func.func @transform_6(%arg0: i32) -> (i32, i32) {
    %c0_i32 = arith.constant 0 : i32
    %c0_i32_0 = arith.constant 0 : i32
    %c0_i32_1 = arith.constant 0 : i32
    return %c0_i32, %c0_i32_0 : i32, i32
  }
  func.func @transform_7(%arg0: i32) -> (i32, i32) {
    %c0_i32 = arith.constant 0 : i32
    %c0_i32_0 = arith.constant 0 : i32
    return %arg0, %c0_i32 : i32, i32
  }
}

module attributes {stable_mosaic.version = 11 : i64} {
  func.func @_head_kernel(%arg0: i32, %arg1: memref<1x4x256xf32, #tpu.memory_space<vmem>>, %arg2: memref<3x256xbf16, #tpu.memory_space<vmem>>, %arg3: memref<256x200xbf16, #tpu.memory_space<vmem>>, %arg4: memref<1x200xf32, #tpu.memory_space<vmem>>, %arg5: memref<200x2xbf16, #tpu.memory_space<vmem>>, %arg6: memref<1x2xf32, #tpu.memory_space<vmem>>, %arg7: memref<4x2xf32, #tpu.memory_space<vmem>>, %arg8: memref<4x2xf32, #tpu.memory_space<vmem>>, %arg9: memref<1x2xf32, #tpu.memory_space<vmem>>, %arg10: memref<256x64xbf16, #tpu.memory_space<vmem>>, %arg11: memref<64x32xbf16, #tpu.memory_space<vmem>>, %arg12: memref<32x8xbf16, #tpu.memory_space<vmem>>, %arg13: memref<8x1xbf16, #tpu.memory_space<vmem>>, %arg14: memref<1x1x2xf32, #tpu.memory_space<vmem>>, %arg15: memref<1x4x1xf32, #tpu.memory_space<vmem>>) attributes {dimension_semantics = [#tpu.dimension_semantics<parallel>], iteration_bounds = array<i64: 2>, scalar_prefetch = 0 : i64, scratch_operands = 0 : i64, tpu.core_type = #tpu.core_type<tc>, window_params = [{transform_indices = @transform_0, window_bounds = array<i64: 1, 4, 256>}, {pipeline_mode = #tpu.pipeline_mode<synchronous>, transform_indices = @transform_1, window_bounds = array<i64: 3, 256>}, {pipeline_mode = #tpu.pipeline_mode<synchronous>, transform_indices = @transform_2, window_bounds = array<i64: 256, 200>}, {pipeline_mode = #tpu.pipeline_mode<synchronous>, transform_indices = @transform_3, window_bounds = array<i64: 1, 200>}, {pipeline_mode = #tpu.pipeline_mode<synchronous>, transform_indices = @transform_4, window_bounds = array<i64: 200, 2>}, {pipeline_mode = #tpu.pipeline_mode<synchronous>, transform_indices = @transform_5, window_bounds = array<i64: 1, 2>}, {pipeline_mode = #tpu.pipeline_mode<synchronous>, transform_indices = @transform_6, window_bounds = array<i64: 4, 2>}, {pipeline_mode = #tpu.pipeline_mode<synchronous>, transform_indices = @transform_7, window_bounds = array<i64: 4, 2>}, {pipeline_mode = #tpu.pipeline_mode<synchronous>, transform_indices = @transform_8, window_bounds = array<i64: 1, 2>}, {pipeline_mode = #tpu.pipeline_mode<synchronous>, transform_indices = @transform_9, window_bounds = array<i64: 256, 64>}, {pipeline_mode = #tpu.pipeline_mode<synchronous>, transform_indices = @transform_10, window_bounds = array<i64: 64, 32>}, {pipeline_mode = #tpu.pipeline_mode<synchronous>, transform_indices = @transform_11, window_bounds = array<i64: 32, 8>}, {pipeline_mode = #tpu.pipeline_mode<synchronous>, transform_indices = @transform_12, window_bounds = array<i64: 8, 1>}, {transform_indices = @transform_13, window_bounds = array<i64: 1, 1, 2>}, {transform_indices = @transform_14, window_bounds = array<i64: 1, 4, 1>}]} {
    %c0 = arith.constant 0 : index
    %c0_0 = arith.constant 0 : index
    %c0_1 = arith.constant 0 : index
    %0 = vector.load %arg1[%c0, %c0_0, %c0_1] : memref<1x4x256xf32, #tpu.memory_space<vmem>>, vector<1x4x256xf32>
    %1 = vector.shape_cast %0 : vector<1x4x256xf32> to vector<4x256xf32>
    %2 = arith.truncf %1 : vector<4x256xf32> to vector<4x256xbf16>
    %c0_2 = arith.constant 0 : index
    %c0_3 = arith.constant 0 : index
    %3 = vector.load %arg2[%c0_2, %c0_3] : memref<3x256xbf16, #tpu.memory_space<vmem>>, vector<3x256xbf16>
    %cst = arith.constant dense<0.000000e+00> : vector<4x3xf32>
    %4 = tpu.matmul %2, %3, %cst {dimension_numbers = #tpu.dot_dimension_numbers<[1], [1], [0], [0], [0, 0, 1, 0], [], []>} : vector<4x256xbf16>, vector<3x256xbf16>, vector<4x3xf32> -> vector<4x3xf32>
    %cst_4 = arith.constant 6.250000e-02 : f32
    %5 = vector.broadcast %cst_4 : f32 to vector<4x3xf32>
    %6 = arith.mulf %4, %5 : vector<4x3xf32>
    %cst_5 = arith.constant dense<0xFF800000> : vector<3xf32>
    %7 = vector.multi_reduction <maximumf>, %6, %cst_5 [0] : vector<4x3xf32> to vector<3xf32>
    %8 = vector.shape_cast %7 : vector<3xf32> to vector<1x3xf32>
    %9 = vector.broadcast %8 : vector<1x3xf32> to vector<4x3xf32>
    %10 = arith.subf %6, %9 : vector<4x3xf32>
    %11 = math.exp %10 : vector<4x3xf32>
    %cst_6 = arith.constant dense<0.000000e+00> : vector<3xf32>
    %12 = vector.multi_reduction <add>, %11, %cst_6 [0] : vector<4x3xf32> to vector<3xf32>
    %13 = vector.shape_cast %12 : vector<3xf32> to vector<1x3xf32>
    %14 = vector.broadcast %13 : vector<1x3xf32> to vector<4x3xf32>
    %15 = arith.divf %11, %14 : vector<4x3xf32>
    %cst_7 = arith.constant dense<0.000000e+00> : vector<4xf32>
    %16 = vector.multi_reduction <add>, %15, %cst_7 [1] : vector<4x3xf32> to vector<4xf32>
    %17 = vector.shape_cast %16 : vector<4xf32> to vector<4x1xf32>
    %18 = vector.broadcast %17 : vector<4x1xf32> to vector<4x256xf32>
    %19 = arith.mulf %1, %18 : vector<4x256xf32>
    %20 = arith.truncf %19 : vector<4x256xf32> to vector<4x256xbf16>
    %c0_8 = arith.constant 0 : index
    %c0_9 = arith.constant 0 : index
    %21 = vector.load %arg3[%c0_8, %c0_9] : memref<256x200xbf16, #tpu.memory_space<vmem>>, vector<256x200xbf16>
    %cst_10 = arith.constant dense<0.000000e+00> : vector<4x200xf32>
    %22 = tpu.matmul %20, %21, %cst_10 {dimension_numbers = #tpu.dot_dimension_numbers<[1], [0], [0], [1], [0, 0, 1, 1], [], []>} : vector<4x256xbf16>, vector<256x200xbf16>, vector<4x200xf32> -> vector<4x200xf32>
    %c0_11 = arith.constant 0 : index
    %c0_12 = arith.constant 0 : index
    %23 = vector.load %arg4[%c0_11, %c0_12] : memref<1x200xf32, #tpu.memory_space<vmem>>, vector<1x200xf32>
    %24 = vector.broadcast %23 : vector<1x200xf32> to vector<4x200xf32>
    %25 = arith.addf %22, %24 : vector<4x200xf32>
    %cst_13 = arith.constant 0.000000e+00 : f32
    %26 = vector.broadcast %cst_13 : f32 to vector<4x200xf32>
    %27 = arith.maximumf %25, %26 : vector<4x200xf32>
    %28 = arith.truncf %27 : vector<4x200xf32> to vector<4x200xbf16>
    %c0_14 = arith.constant 0 : index
    %c0_15 = arith.constant 0 : index
    %29 = vector.load %arg5[%c0_14, %c0_15] : memref<200x2xbf16, #tpu.memory_space<vmem>>, vector<200x2xbf16>
    %cst_16 = arith.constant dense<0.000000e+00> : vector<4x2xf32>
    %30 = tpu.matmul %28, %29, %cst_16 {dimension_numbers = #tpu.dot_dimension_numbers<[1], [0], [0], [1], [0, 0, 1, 1], [], []>} : vector<4x200xbf16>, vector<200x2xbf16>, vector<4x2xf32> -> vector<4x2xf32>
    %c0_17 = arith.constant 0 : index
    %c0_18 = arith.constant 0 : index
    %31 = vector.load %arg6[%c0_17, %c0_18] : memref<1x2xf32, #tpu.memory_space<vmem>>, vector<1x2xf32>
    %32 = vector.broadcast %31 : vector<1x2xf32> to vector<4x2xf32>
    %33 = arith.addf %30, %32 : vector<4x2xf32>
    %cst_19 = arith.constant 0.000000e+00 : f32
    %34 = vector.broadcast %cst_19 : f32 to vector<4x2xf32>
    %35 = arith.maximumf %33, %34 : vector<4x2xf32>
    %36 = vector.extract_strided_slice %35 {offsets = [0, 0], sizes = [4, 1], strides = [1, 1]} : vector<4x2xf32> to vector<4x1xf32>
    %c0_20 = arith.constant 0 : index
    %c0_21 = arith.constant 0 : index
    %37 = vector.load %arg7[%c0_20, %c0_21] : memref<4x2xf32, #tpu.memory_space<vmem>>, vector<4x2xf32>
    %38 = vector.broadcast %36 : vector<4x1xf32> to vector<4x2xf32>
    %39 = arith.mulf %38, %37 : vector<4x2xf32>
    %40 = vector.extract_strided_slice %35 {offsets = [0, 1], sizes = [4, 1], strides = [1, 1]} : vector<4x2xf32> to vector<4x1xf32>
    %c0_22 = arith.constant 0 : index
    %c0_23 = arith.constant 0 : index
    %41 = vector.load %arg8[%c0_22, %c0_23] : memref<4x2xf32, #tpu.memory_space<vmem>>, vector<4x2xf32>
    %42 = vector.broadcast %40 : vector<4x1xf32> to vector<4x2xf32>
    %43 = arith.mulf %42, %41 : vector<4x2xf32>
    %44 = arith.addf %39, %43 : vector<4x2xf32>
    %cst_24 = arith.constant dense<0.000000e+00> : vector<2xf32>
    %45 = vector.multi_reduction <add>, %44, %cst_24 [0] : vector<4x2xf32> to vector<2xf32>
    %46 = vector.shape_cast %45 : vector<2xf32> to vector<1x2xf32>
    %c0_25 = arith.constant 0 : index
    %c0_26 = arith.constant 0 : index
    %47 = vector.load %arg9[%c0_25, %c0_26] : memref<1x2xf32, #tpu.memory_space<vmem>>, vector<1x2xf32>
    %48 = arith.addf %46, %47 : vector<1x2xf32>
    %c0_27 = arith.constant 0 : index
    %c0_28 = arith.constant 0 : index
    %c0_29 = arith.constant 0 : index
    %49 = vector.load %arg14[%c0_27, %c0_28, %c0_29] : memref<1x1x2xf32, #tpu.memory_space<vmem>>, vector<1x1x2xf32>
    %50 = vector.shape_cast %49 : vector<1x1x2xf32> to vector<1x2xf32>
    %51 = vector.shape_cast %48 : vector<1x2xf32> to vector<1x1x2xf32>
    tpu.vector_store %arg14[%c0_27, %c0_28, %c0_29], %51 {strides = array<i32>} : memref<1x1x2xf32, #tpu.memory_space<vmem>>, vector<1x1x2xf32>,
    %c0_30 = arith.constant 0 : index
    %c0_31 = arith.constant 0 : index
    %52 = vector.load %arg10[%c0_30, %c0_31] : memref<256x64xbf16, #tpu.memory_space<vmem>>, vector<256x64xbf16>
    %cst_32 = arith.constant dense<0.000000e+00> : vector<4x64xf32>
    %53 = tpu.matmul %20, %52, %cst_32 {dimension_numbers = #tpu.dot_dimension_numbers<[1], [0], [0], [1], [0, 0, 1, 1], [], []>} : vector<4x256xbf16>, vector<256x64xbf16>, vector<4x64xf32> -> vector<4x64xf32>
    %cst_33 = arith.constant 0.000000e+00 : f32
    %54 = vector.broadcast %cst_33 : f32 to vector<4x64xf32>
    %55 = arith.maximumf %53, %54 : vector<4x64xf32>
    %56 = arith.truncf %55 : vector<4x64xf32> to vector<4x64xbf16>
    %c0_34 = arith.constant 0 : index
    %c0_35 = arith.constant 0 : index
    %57 = vector.load %arg11[%c0_34, %c0_35] : memref<64x32xbf16, #tpu.memory_space<vmem>>, vector<64x32xbf16>
    %cst_36 = arith.constant dense<0.000000e+00> : vector<4x32xf32>
    %58 = tpu.matmul %56, %57, %cst_36 {dimension_numbers = #tpu.dot_dimension_numbers<[1], [0], [0], [1], [0, 0, 1, 1], [], []>} : vector<4x64xbf16>, vector<64x32xbf16>, vector<4x32xf32> -> vector<4x32xf32>
    %cst_37 = arith.constant 0.000000e+00 : f32
    %59 = vector.broadcast %cst_37 : f32 to vector<4x32xf32>
    %60 = arith.maximumf %58, %59 : vector<4x32xf32>
    %61 = arith.truncf %60 : vector<4x32xf32> to vector<4x32xbf16>
    %c0_38 = arith.constant 0 : index
    %c0_39 = arith.constant 0 : index
    %62 = vector.load %arg12[%c0_38, %c0_39] : memref<32x8xbf16, #tpu.memory_space<vmem>>, vector<32x8xbf16>
    %cst_40 = arith.constant dense<0.000000e+00> : vector<4x8xf32>
    %63 = tpu.matmul %61, %62, %cst_40 {dimension_numbers = #tpu.dot_dimension_numbers<[1], [0], [0], [1], [0, 0, 1, 1], [], []>} : vector<4x32xbf16>, vector<32x8xbf16>, vector<4x8xf32> -> vector<4x8xf32>
    %cst_41 = arith.constant 0.000000e+00 : f32
    %64 = vector.broadcast %cst_41 : f32 to vector<4x8xf32>
    %65 = arith.maximumf %63, %64 : vector<4x8xf32>
    %66 = arith.truncf %65 : vector<4x8xf32> to vector<4x8xbf16>
    %c0_42 = arith.constant 0 : index
    %c0_43 = arith.constant 0 : index
    %67 = vector.load %arg13[%c0_42, %c0_43] : memref<8x1xbf16, #tpu.memory_space<vmem>>, vector<8x1xbf16>
    %cst_44 = arith.constant dense<0.000000e+00> : vector<4x1xf32>
    %68 = tpu.matmul %66, %67, %cst_44 {dimension_numbers = #tpu.dot_dimension_numbers<[1], [0], [0], [1], [0, 0, 1, 1], [], []>} : vector<4x8xbf16>, vector<8x1xbf16>, vector<4x1xf32> -> vector<4x1xf32>
    %69 = arith.negf %68 : vector<4x1xf32>
    %70 = math.exp %69 : vector<4x1xf32>
    %cst_45 = arith.constant 1.000000e+00 : f32
    %71 = vector.broadcast %cst_45 : f32 to vector<4x1xf32>
    %72 = arith.addf %71, %70 : vector<4x1xf32>
    %73 = arith.divf %71, %72 : vector<4x1xf32>
    %c0_46 = arith.constant 0 : index
    %c0_47 = arith.constant 0 : index
    %c0_48 = arith.constant 0 : index
    %74 = vector.load %arg15[%c0_46, %c0_47, %c0_48] : memref<1x4x1xf32, #tpu.memory_space<vmem>>, vector<1x4x1xf32>
    %75 = vector.shape_cast %74 : vector<1x4x1xf32> to vector<4x1xf32>
    %76 = vector.shape_cast %73 : vector<4x1xf32> to vector<1x4x1xf32>
    tpu.vector_store %arg15[%c0_46, %c0_47, %c0_48], %76 {strides = array<i32>} : memref<1x4x1xf32, #tpu.memory_space<vmem>>, vector<1x4x1xf32>,
    return
  }
  func.func @transform_0(%arg0: i32) -> (i32, i32, i32) {
    %c0_i32 = arith.constant 0 : i32
    %c0_i32_0 = arith.constant 0 : i32
    %c0_i32_1 = arith.constant 0 : i32
    return %arg0, %c0_i32, %c0_i32_0 : i32, i32, i32
  }
  func.func @transform_1(%arg0: i32) -> (i32, i32) {
    %c0_i32 = arith.constant 0 : i32
    %c0_i32_0 = arith.constant 0 : i32
    %c0_i32_1 = arith.constant 0 : i32
    return %c0_i32, %c0_i32_0 : i32, i32
  }
  func.func @transform_2(%arg0: i32) -> (i32, i32) {
    %c0_i32 = arith.constant 0 : i32
    %c0_i32_0 = arith.constant 0 : i32
    %c0_i32_1 = arith.constant 0 : i32
    return %c0_i32, %c0_i32_0 : i32, i32
  }
  func.func @transform_3(%arg0: i32) -> (i32, i32) {
    %c0_i32 = arith.constant 0 : i32
    %c0_i32_0 = arith.constant 0 : i32
    %c0_i32_1 = arith.constant 0 : i32
    return %c0_i32, %c0_i32_0 : i32, i32
  }
  func.func @transform_4(%arg0: i32) -> (i32, i32) {
    %c0_i32 = arith.constant 0 : i32
    %c0_i32_0 = arith.constant 0 : i32
    %c0_i32_1 = arith.constant 0 : i32
    return %c0_i32, %c0_i32_0 : i32, i32
  }
  func.func @transform_5(%arg0: i32) -> (i32, i32) {
    %c0_i32 = arith.constant 0 : i32
    %c0_i32_0 = arith.constant 0 : i32
    %c0_i32_1 = arith.constant 0 : i32
    return %c0_i32, %c0_i32_0 : i32, i32
  }
  func.func @transform_6(%arg0: i32) -> (i32, i32) {
    %c0_i32 = arith.constant 0 : i32
    %c0_i32_0 = arith.constant 0 : i32
    %c0_i32_1 = arith.constant 0 : i32
    return %c0_i32, %c0_i32_0 : i32, i32
  }
  func.func @transform_7(%arg0: i32) -> (i32, i32) {
    %c0_i32 = arith.constant 0 : i32
    %c0_i32_0 = arith.constant 0 : i32
    %c0_i32_1 = arith.constant 0 : i32
    return %c0_i32, %c0_i32_0 : i32, i32
  }
  func.func @transform_8(%arg0: i32) -> (i32, i32) {
    %c0_i32 = arith.constant 0 : i32
    %c0_i32_0 = arith.constant 0 : i32
    %c0_i32_1 = arith.constant 0 : i32
    return %c0_i32, %c0_i32_0 : i32, i32
  }
  func.func @transform_9(%arg0: i32) -> (i32, i32) {
    %c0_i32 = arith.constant 0 : i32
    %c0_i32_0 = arith.constant 0 : i32
    %c0_i32_1 = arith.constant 0 : i32
    return %c0_i32, %c0_i32_0 : i32, i32
  }
  func.func @transform_10(%arg0: i32) -> (i32, i32) {
    %c0_i32 = arith.constant 0 : i32
    %c0_i32_0 = arith.constant 0 : i32
    %c0_i32_1 = arith.constant 0 : i32
    return %c0_i32, %c0_i32_0 : i32, i32
  }
  func.func @transform_11(%arg0: i32) -> (i32, i32) {
    %c0_i32 = arith.constant 0 : i32
    %c0_i32_0 = arith.constant 0 : i32
    %c0_i32_1 = arith.constant 0 : i32
    return %c0_i32, %c0_i32_0 : i32, i32
  }
  func.func @transform_12(%arg0: i32) -> (i32, i32) {
    %c0_i32 = arith.constant 0 : i32
    %c0_i32_0 = arith.constant 0 : i32
    %c0_i32_1 = arith.constant 0 : i32
    return %c0_i32, %c0_i32_0 : i32, i32
  }
  func.func @transform_13(%arg0: i32) -> (i32, i32, i32) {
    %c0_i32 = arith.constant 0 : i32
    %c0_i32_0 = arith.constant 0 : i32
    %c0_i32_1 = arith.constant 0 : i32
    return %arg0, %c0_i32, %c0_i32_0 : i32, i32, i32
  }
  func.func @transform_14(%arg0: i32) -> (i32, i32, i32) {
    %c0_i32 = arith.constant 0 : i32
    %c0_i32_0 = arith.constant 0 : i32
    %c0_i32_1 = arith.constant 0 : i32
    return %arg0, %c0_i32, %c0_i32_0 : i32, i32, i32
  }
}

</mosaic_0001>

<llo_original>
// kernel: spatial_attention_pretrained_fe_forward.3
$region0: #{spatial_attention_pretrained_fe_forward.3}
  #allocation0 [shape = 'u32[]', space=smem, size = 0x4, offset = 0x4, fixed_abs, tag = 'smem constant byte address 0x4 - core index']
  #allocation1 [shape = 'u32[144,128]{1,0:T(1,128)}', space=vmem, size = 0x12000, scoped, tag = 'internal scratch']
  %s0 = inlined_call_operand.vmem [shape: f32[2,4,256], index: 0, kind: input, shape index: {}]
  %s1 = inlined_call_operand.vmem [shape: bf16[3,256], index: 1, kind: input, shape index: {}]
  %s2 = inlined_call_operand.vmem [shape: bf16[256,200], index: 2, kind: input, shape index: {}]
  %s3 = inlined_call_operand.vmem [shape: f32[1,200], index: 3, kind: input, shape index: {}]
  %s4 = inlined_call_operand.vmem [shape: bf16[200,2], index: 4, kind: input, shape index: {}]
  %s5 = inlined_call_operand.vmem [shape: f32[1,2], index: 5, kind: input, shape index: {}]
  %s6 = inlined_call_operand.vmem [shape: f32[4,2], index: 6, kind: input, shape index: {}]
  %s7 = inlined_call_operand.vmem [shape: f32[4,2], index: 7, kind: input, shape index: {}]
  %s8 = inlined_call_operand.vmem [shape: f32[1,2], index: 8, kind: input, shape index: {}]
  %s9 = inlined_call_operand.vmem [shape: bf16[256,64], index: 9, kind: input, shape index: {}]
  %s10 = inlined_call_operand.vmem [shape: bf16[64,32], index: 10, kind: input, shape index: {}]
  %s11 = inlined_call_operand.vmem [shape: bf16[32,8], index: 11, kind: input, shape index: {}]
  %s12 = inlined_call_operand.vmem [shape: bf16[8,1], index: 12, kind: input, shape index: {}]
  %s13 = inlined_call_operand.hbm [shape: f32[2,1,2], index: 13, kind: output, shape index: {0}]
  %s14 = inlined_call_operand.vmem [shape: f32[2,4,1], index: 14, kind: output, shape index: {1}]
  %15 = xla_tuple %s13, %s14
  %s16 = sld [smem:[#allocation0]]
  $region93: #{spatial_attention_pretrained_fe_forward.3} parent=0
    _
  %s18 = ssub.s32 1, %s16
  %s19 = scalar_select 0, %s18, %s16
  $region1: #{spatial_attention_pretrained_fe_forward.3} parent=0
    #allocation2 [shape = 'u8[1024]{0}', space=vmem, size = 0x400, scoped, tag = 'output window, operand 0']
    #allocation3 [shape = 's32[2]{0}', space=sflag, size = 0x8, scoped, tag = 'scoped memory for spatial_attention_pretrained_fe_forward.3']
    %20 = vsyncpa [#allocation3], 0
    %s21 = scalar_lea.sflag [#allocation3], 1
    %22 = vsyncpa %s21, 0
    loop: start=0, step=1, limit=4
    $region2: #{spatial_attention_pretrained_fe_forward.3} parent=1 // loop_pre_header
      _
    $region3: #{spatial_attention_pretrained_fe_forward.3} parent=1 // loop_header
      %s24 = sphi 0, %s28
      %p25 = scmp.ge.s32.totalorder %s24, 4
      %s34 = sphi 0, %s36
      %s37 = sphi 0, %s34
      %s38 = sphi 0, %s37
      %s54 = sphi 0, %s38
      %s58 = sphi 0, %s58
      %s60 = sphi 0, %s58
      %s61 = sphi 0, %s60
      %s75 = sphi 0, %s61
      %s79 = sphi 0, %s79
      %s81 = sphi 0, %s79
      %s82 = sphi 0, %s81
      %s96 = sphi 0, %s82
      %s100 = sphi 0, %s100
      %s102 = sphi 0, %s100
      %s103 = sphi 0, %s102
      %s117 = sphi 0, %s103
      %s121 = sphi 0, %s121
      %s123 = sphi 0, %s121
      %s124 = sphi 0, %s123
      %s138 = sphi 0, %s124
      %s142 = sphi 0, %s142
      %s144 = sphi 0, %s142
      %s145 = sphi 0, %s144
      %s159 = sphi 0, %s145
      %s163 = sphi 0, %s163
      %s165 = sphi 0, %s163
      %s166 = sphi 0, %s165
      %s180 = sphi 0, %s166
      %s184 = sphi 0, %s184
      %s186 = sphi 0, %s184
      %s187 = sphi 0, %s186
      %s201 = sphi 0, %s187
      %s205 = sphi 0, %s205
      %s207 = sphi 0, %s205
      %s208 = sphi 0, %s207
      %s222 = sphi 0, %s208
      %s226 = sphi 0, %s226
      %s228 = sphi 0, %s226
      %s229 = sphi 0, %s228
      %s243 = sphi 0, %s229
      %s247 = sphi 0, %s247
      %s249 = sphi 0, %s247
      %s250 = sphi 0, %s249
      %s264 = sphi 0, %s250
      %s268 = sphi 0, %s268
      %s270 = sphi 0, %s268
      %s271 = sphi 0, %s270
      %s285 = sphi 0, %s271
      %s289 = sphi 0, %s289
      %s291 = sphi 0, %s289
      %s292 = sphi 0, %s291
      %s306 = sphi 0, %s292
      %s312 = sphi 0, %s314
      %s315 = sphi 0, %s312
      %s316 = sphi 0, %s315
      %s332 = sphi 0, %s316
      %s338 = sphi 0, %s340
      %s341 = sphi 0, %s338
      %s342 = sphi 0, %s341
      %s358 = sphi 0, %s342
    $region4: #{spatial_attention_pretrained_fe_forward.3} parent=1 // loop_header_branch
      %27 = sbr.rel (%p25) target = $region8
    $region5: #{spatial_attention_pretrained_fe_forward.3} parent=1 // loop_body
      %s29 = ssub.s32 %s24, 1
      %s30 = ssub.s32 %s24, 2
      %s31 = sadd.s32 %s24, 1
      %s32 = ssub.s32 %s24, %s31
      %p33 = scmp.eq.s32.totalorder %s32, 0
      %s35 = sadd.s32 %s34, 1
      %s36 = scalar_select %p33, %s34, %s35
      %p39 = pneg %p33
      %p40 = scmp.eq.s32.totalorder %s24, 1
      %p41 = por %p39, %p40
      %p42 = scmp.ne.s32.totalorder %s34, %s37
      %p43 = scmp.eq.s32.totalorder %s24, 0
      %p44 = por %p42, %p43
      %p45 = scmp.ne.s32.totalorder %s34, %s37
      %p46 = scmp.eq.s32.totalorder %s29, 1
      %p47 = por %p45, %p46
      %p48 = scmp.ne.s32.totalorder %s37, %s38
      %p49 = scmp.eq.s32.totalorder %s29, 0
      %p50 = por %p48, %p49
      %p51 = scmp.ne.s32.totalorder %s37, %s38
      %p52 = scmp.eq.s32.totalorder %s30, 1
      %p53 = por %p51, %p52
      %p55 = scmp.ne.s32.totalorder %s38, %s54
      %p56 = scmp.eq.s32.totalorder %s30, 0
      %p57 = por %p55, %p56
      %s59 = sadd.s32 %s58, 1
      %p62 = scmp.eq.s32.totalorder %s24, 1
      %p63 = scmp.ne.s32.totalorder %s58, %s60
      %p64 = scmp.eq.s32.totalorder %s24, 0
      %p65 = por %p63, %p64
      %p66 = scmp.ne.s32.totalorder %s58, %s60
      %p67 = scmp.eq.s32.totalorder %s29, 1
      %p68 = por %p66, %p67
      %p69 = scmp.ne.s32.totalorder %s60, %s61
      %p70 = scmp.eq.s32.totalorder %s29, 0
      %p71 = por %p69, %p70
      %p72 = scmp.ne.s32.totalorder %s60, %s61
      %p73 = scmp.eq.s32.totalorder %s30, 1
      %p74 = por %p72, %p73
      %p76 = scmp.ne.s32.totalorder %s61, %s75
      %p77 = scmp.eq.s32.totalorder %s30, 0
      %p78 = por %p76, %p77
      %s80 = sadd.s32 %s79, 1
      %p83 = scmp.eq.s32.totalorder %s24, 1
      %p84 = scmp.ne.s32.totalorder %s79, %s81
      %p85 = scmp.eq.s32.totalorder %s24, 0
      %p86 = por %p84, %p85
      %p87 = scmp.ne.s32.totalorder %s79, %s81
      %p88 = scmp.eq.s32.totalorder %s29, 1
      %p89 = por %p87, %p88
      %p90 = scmp.ne.s32.totalorder %s81, %s82
      %p91 = scmp.eq.s32.totalorder %s29, 0
      %p92 = por %p90, %p91
      %p93 = scmp.ne.s32.totalorder %s81, %s82
      %p94 = scmp.eq.s32.totalorder %s30, 1
      %p95 = por %p93, %p94
      %p97 = scmp.ne.s32.totalorder %s82, %s96
      %p98 = scmp.eq.s32.totalorder %s30, 0
      %p99 = por %p97, %p98
      %s101 = sadd.s32 %s100, 1
      %p104 = scmp.eq.s32.totalorder %s24, 1
      %p105 = scmp.ne.s32.totalorder %s100, %s102
      %p106 = scmp.eq.s32.totalorder %s24, 0
      %p107 = por %p105, %p106
      %p108 = scmp.ne.s32.totalorder %s100, %s102
      %p109 = scmp.eq.s32.totalorder %s29, 1
      %p110 = por %p108, %p109
      %p111 = scmp.ne.s32.totalorder %s102, %s103
      %p112 = scmp.eq.s32.totalorder %s29, 0
      %p113 = por %p111, %p112
      %p114 = scmp.ne.s32.totalorder %s102, %s103
      %p115 = scmp.eq.s32.totalorder %s30, 1
      %p116 = por %p114, %p115
      %p118 = scmp.ne.s32.totalorder %s103, %s117
      %p119 = scmp.eq.s32.totalorder %s30, 0
      %p120 = por %p118, %p119
      %s122 = sadd.s32 %s121, 1
      %p125 = scmp.eq.s32.totalorder %s24, 1
      %p126 = scmp.ne.s32.totalorder %s121, %s123
      %p127 = scmp.eq.s32.totalorder %s24, 0
      %p128 = por %p126, %p127
      %p129 = scmp.ne.s32.totalorder %s121, %s123
      %p130 = scmp.eq.s32.totalorder %s29, 1
      %p131 = por %p129, %p130
      %p132 = scmp.ne.s32.totalorder %s123, %s124
      %p133 = scmp.eq.s32.totalorder %s29, 0
      %p134 = por %p132, %p133
      %p135 = scmp.ne.s32.totalorder %s123, %s124
      %p136 = scmp.eq.s32.totalorder %s30, 1
      %p137 = por %p135, %p136
      %p139 = scmp.ne.s32.totalorder %s124, %s138
      %p140 = scmp.eq.s32.totalorder %s30, 0
      %p141 = por %p139, %p140
      %s143 = sadd.s32 %s142, 1
      %p146 = scmp.eq.s32.totalorder %s24, 1
      %p147 = scmp.ne.s32.totalorder %s142, %s144
      %p148 = scmp.eq.s32.totalorder %s24, 0
      %p149 = por %p147, %p148
      %p150 = scmp.ne.s32.totalorder %s142, %s144
      %p151 = scmp.eq.s32.totalorder %s29, 1
      %p152 = por %p150, %p151
      %p153 = scmp.ne.s32.totalorder %s144, %s145
      %p154 = scmp.eq.s32.totalorder %s29, 0
      %p155 = por %p153, %p154
      %p156 = scmp.ne.s32.totalorder %s144, %s145
      %p157 = scmp.eq.s32.totalorder %s30, 1
      %p158 = por %p156, %p157
      %p160 = scmp.ne.s32.totalorder %s145, %s159
      %p161 = scmp.eq.s32.totalorder %s30, 0
      %p162 = por %p160, %p161
      %s164 = sadd.s32 %s163, 1
      %p167 = scmp.eq.s32.totalorder %s24, 1
      %p168 = scmp.ne.s32.totalorder %s163, %s165
      %p169 = scmp.eq.s32.totalorder %s24, 0
      %p170 = por %p168, %p169
      %p171 = scmp.ne.s32.totalorder %s163, %s165
      %p172 = scmp.eq.s32.totalorder %s29, 1
      %p173 = por %p171, %p172
      %p174 = scmp.ne.s32.totalorder %s165, %s166
      %p175 = scmp.eq.s32.totalorder %s29, 0
      %p176 = por %p174, %p175
      %p177 = scmp.ne.s32.totalorder %s165, %s166
      %p178 = scmp.eq.s32.totalorder %s30, 1
      %p179 = por %p177, %p178
      %p181 = scmp.ne.s32.totalorder %s166, %s180
      %p182 = scmp.eq.s32.totalorder %s30, 0
      %p183 = por %p181, %p182
      %s185 = sadd.s32 %s184, 1
      %p188 = scmp.eq.s32.totalorder %s24, 1
      %p189 = scmp.ne.s32.totalorder %s184, %s186
      %p190 = scmp.eq.s32.totalorder %s24, 0
      %p191 = por %p189, %p190
      %p192 = scmp.ne.s32.totalorder %s184, %s186
      %p193 = scmp.eq.s32.totalorder %s29, 1
      %p194 = por %p192, %p193
      %p195 = scmp.ne.s32.totalorder %s186, %s187
      %p196 = scmp.eq.s32.totalorder %s29, 0
      %p197 = por %p195, %p196
      %p198 = scmp.ne.s32.totalorder %s186, %s187
      %p199 = scmp.eq.s32.totalorder %s30, 1
      %p200 = por %p198, %p199
      %p202 = scmp.ne.s32.totalorder %s187, %s201
      %p203 = scmp.eq.s32.totalorder %s30, 0
      %p204 = por %p202, %p203
      %s206 = sadd.s32 %s205, 1
      %p209 = scmp.eq.s32.totalorder %s24, 1
      %p210 = scmp.ne.s32.totalorder %s205, %s207
      %p211 = scmp.eq.s32.totalorder %s24, 0
      %p212 = por %p210, %p211
      %p213 = scmp.ne.s32.totalorder %s205, %s207
      %p214 = scmp.eq.s32.totalorder %s29, 1
      %p215 = por %p213, %p214
      %p216 = scmp.ne.s32.totalorder %s207, %s208
      %p217 = scmp.eq.s32.totalorder %s29, 0
      %p218 = por %p216, %p217
      %p219 = scmp.ne.s32.totalorder %s207, %s208
      %p220 = scmp.eq.s32.totalorder %s30, 1
      %p221 = por %p219, %p220
      %p223 = scmp.ne.s32.totalorder %s208, %s222
      %p224 = scmp.eq.s32.totalorder %s30, 0
      %p225 = por %p223, %p224
      %s227 = sadd.s32 %s226, 1
      %p230 = scmp.eq.s32.totalorder %s24, 1
      %p231 = scmp.ne.s32.totalorder %s226, %s228
      %p232 = scmp.eq.s32.totalorder %s24, 0
      %p233 = por %p231, %p232
      %p234 = scmp.ne.s32.totalorder %s226, %s228
      %p235 = scmp.eq.s32.totalorder %s29, 1
      %p236 = por %p234, %p235
      %p237 = scmp.ne.s32.totalorder %s228, %s229
      %p238 = scmp.eq.s32.totalorder %s29, 0
      %p239 = por %p237, %p238
      %p240 = scmp.ne.s32.totalorder %s228, %s229
      %p241 = scmp.eq.s32.totalorder %s30, 1
      %p242 = por %p240, %p241
      %p244 = scmp.ne.s32.totalorder %s229, %s243
      %p245 = scmp.eq.s32.totalorder %s30, 0
      %p246 = por %p244, %p245
      %s248 = sadd.s32 %s247, 1
      %p251 = scmp.eq.s32.totalorder %s24, 1
      %p252 = scmp.ne.s32.totalorder %s247, %s249
      %p253 = scmp.eq.s32.totalorder %s24, 0
      %p254 = por %p252, %p253
      %p255 = scmp.ne.s32.totalorder %s247, %s249
      %p256 = scmp.eq.s32.totalorder %s29, 1
      %p257 = por %p255, %p256
      %p258 = scmp.ne.s32.totalorder %s249, %s250
      %p259 = scmp.eq.s32.totalorder %s29, 0
      %p260 = por %p258, %p259
      %p261 = scmp.ne.s32.totalorder %s249, %s250
      %p262 = scmp.eq.s32.totalorder %s30, 1
      %p263 = por %p261, %p262
      %p265 = scmp.ne.s32.totalorder %s250, %s264
      %p266 = scmp.eq.s32.totalorder %s30, 0
      %p267 = por %p265, %p266
      %s269 = sadd.s32 %s268, 1
      %p272 = scmp.eq.s32.totalorder %s24, 1
      %p273 = scmp.ne.s32.totalorder %s268, %s270
      %p274 = scmp.eq.s32.totalorder %s24, 0
      %p275 = por %p273, %p274
      %p276 = scmp.ne.s32.totalorder %s268, %s270
      %p277 = scmp.eq.s32.totalorder %s29, 1
      %p278 = por %p276, %p277
      %p279 = scmp.ne.s32.totalorder %s270, %s271
      %p280 = scmp.eq.s32.totalorder %s29, 0
      %p281 = por %p279, %p280
      %p282 = scmp.ne.s32.totalorder %s270, %s271
      %p283 = scmp.eq.s32.totalorder %s30, 1
      %p284 = por %p282, %p283
      %p286 = scmp.ne.s32.totalorder %s271, %s285
      %p287 = scmp.eq.s32.totalorder %s30, 0
      %p288 = por %p286, %p287
      %s290 = sadd.s32 %s289, 1
      %p293 = scmp.eq.s32.totalorder %s24, 1
      %p294 = scmp.ne.s32.totalorder %s289, %s291
      %p295 = scmp.eq.s32.totalorder %s24, 0
      %p296 = por %p294, %p295
      %p297 = scmp.ne.s32.totalorder %s289, %s291
      %p298 = scmp.eq.s32.totalorder %s29, 1
      %p299 = por %p297, %p298
      %p300 = scmp.ne.s32.totalorder %s291, %s292
      %p301 = scmp.eq.s32.totalorder %s29, 0
      %p302 = por %p300, %p301
      %p303 = scmp.ne.s32.totalorder %s291, %s292
      %p304 = scmp.eq.s32.totalorder %s30, 1
      %p305 = por %p303, %p304
      %p307 = scmp.ne.s32.totalorder %s292, %s306
      %p308 = scmp.eq.s32.totalorder %s30, 0
      %p309 = por %p307, %p308
      %s310 = ssub.s32 %s24, %s31
      %p311 = scmp.eq.s32.totalorder %s310, 0
      %s313 = sadd.s32 %s312, 1
      %s314 = scalar_select %p311, %s312, %s313
      %p317 = pneg %p311
      %p318 = scmp.eq.s32.totalorder %s24, 1
      %p319 = por %p317, %p318
      %p320 = scmp.ne.s32.totalorder %s312, %s315
      %p321 = scmp.eq.s32.totalorder %s24, 0
      %p322 = por %p320, %p321
      %p323 = scmp.ne.s32.totalorder %s312, %s315
      %p324 = scmp.eq.s32.totalorder %s29, 1
      %p325 = por %p323, %p324
      %p326 = scmp.ne.s32.totalorder %s315, %s316
      %p327 = scmp.eq.s32.totalorder %s29, 0
      %p328 = por %p326, %p327
      %p329 = scmp.ne.s32.totalorder %s315, %s316
      %p330 = scmp.eq.s32.totalorder %s30, 1
      %p331 = por %p329, %p330
      %p333 = scmp.ne.s32.totalorder %s316, %s332
      %p334 = scmp.eq.s32.totalorder %s30, 0
      %p335 = por %p333, %p334
      %s336 = ssub.s32 %s24, %s31
      %p337 = scmp.eq.s32.totalorder %s336, 0
      %s339 = sadd.s32 %s338, 1
      %s340 = scalar_select %p337, %s338, %s339
      %p343 = pneg %p337
      %p344 = scmp.eq.s32.totalorder %s24, 1
      %p345 = por %p343, %p344
      %p346 = scmp.ne.s32.totalorder %s338, %s341
      %p347 = scmp.eq.s32.totalorder %s24, 0
      %p348 = por %p346, %p347
      %p349 = scmp.ne.s32.totalorder %s338, %s341
      %p350 = scmp.eq.s32.totalorder %s29, 1
      %p351 = por %p349, %p350
      %p352 = scmp.ne.s32.totalorder %s341, %s342
      %p353 = scmp.eq.s32.totalorder %s29, 0
      %p354 = por %p352, %p353
      %p355 = scmp.ne.s32.totalorder %s341, %s342
      %p356 = scmp.eq.s32.totalorder %s30, 1
      %p357 = por %p355, %p356
      %p359 = scmp.ne.s32.totalorder %s342, %s358
      %p360 = scmp.eq.s32.totalorder %s30, 0
      %p361 = por %p359, %p360
      %p362 = scmp.le.s32.totalorder 1, %s24
      %p363 = scmp.lt.s32.totalorder %s24, 3
      %p364 = pnand %p362, %p363
      %p365 = pneg %p364
      // Predicated region
      $region9: #{spatial_attention_pretrained_fe_forward.3} parent=5 // pred_check
        _
      $region10: #{spatial_attention_pretrained_fe_forward.3} parent=5 // pred_check_branch
        %367 = sbr.rel (%p364) target = $region12
      $region11: #{spatial_attention_pretrained_fe_forward.3} parent=5 // pred_region
        %s368 = ssub.s32 %s24, 1
        // Predicated region
        $region13: #{spatial_attention_pretrained_fe_forward.3} parent=11 // pred_check
          %p369 = pneg %p71
        $region14: #{spatial_attention_pretrained_fe_forward.3} parent=11 // pred_check_branch
          %371 = sbr.rel (%p369) target = $region16
        $region15: #{spatial_attention_pretrained_fe_forward.3} parent=11 // pred_region
          _
        $region16: #{spatial_attention_pretrained_fe_forward.3} parent=11 // pred_fallthru
          _
        // Predicated region
        $region17: #{spatial_attention_pretrained_fe_forward.3} parent=11 // pred_check
          %p372 = pneg %p92
        $region18: #{spatial_attention_pretrained_fe_forward.3} parent=11 // pred_check_branch
          %374 = sbr.rel (%p372) target = $region20
        $region19: #{spatial_attention_pretrained_fe_forward.3} parent=11 // pred_region
          _
        $region20: #{spatial_attention_pretrained_fe_forward.3} parent=11 // pred_fallthru
          _
        // Predicated region
        $region21: #{spatial_attention_pretrained_fe_forward.3} parent=11 // pred_check
          %p375 = pneg %p113
        $region22: #{spatial_attention_pretrained_fe_forward.3} parent=11 // pred_check_branch
          %377 = sbr.rel (%p375) target = $region24
        $region23: #{spatial_attention_pretrained_fe_forward.3} parent=11 // pred_region
          _
        $region24: #{spatial_attention_pretrained_fe_forward.3} parent=11 // pred_fallthru
          _
        // Predicated region
        $region25: #{spatial_attention_pretrained_fe_forward.3} parent=11 // pred_check
          %p378 = pneg %p134
        $region26: #{spatial_attention_pretrained_fe_forward.3} parent=11 // pred_check_branch
          %380 = sbr.rel (%p378) target = $region28
        $region27: #{spatial_attention_pretrained_fe_forward.3} parent=11 // pred_region
          _
        $region28: #{spatial_attention_pretrained_fe_forward.3} parent=11 // pred_fallthru
          _
        // Predicated region
        $region29: #{spatial_attention_pretrained_fe_forward.3} parent=11 // pred_check
          %p381 = pneg %p155
        $region30: #{spatial_attention_pretrained_fe_forward.3} parent=11 // pred_check_branch
          %383 = sbr.rel (%p381) target = $region32
        $region31: #{spatial_attention_pretrained_fe_forward.3} parent=11 // pred_region
          _
        $region32: #{spatial_attention_pretrained_fe_forward.3} parent=11 // pred_fallthru
          _
        // Predicated region
        $region33: #{spatial_attention_pretrained_fe_forward.3} parent=11 // pred_check
          %p384 = pneg %p176
        $region34: #{spatial_attention_pretrained_fe_forward.3} parent=11 // pred_check_branch
          %386 = sbr.rel (%p384) target = $region36
        $region35: #{spatial_attention_pretrained_fe_forward.3} parent=11 // pred_region
          _
        $region36: #{spatial_attention_pretrained_fe_forward.3} parent=11 // pred_fallthru
          _
        // Predicated region
        $region37: #{spatial_attention_pretrained_fe_forward.3} parent=11 // pred_check
          %p387 = pneg %p197
        $region38: #{spatial_attention_pretrained_fe_forward.3} parent=11 // pred_check_branch
          %389 = sbr.rel (%p387) target = $region40
        $region39: #{spatial_attention_pretrained_fe_forward.3} parent=11 // pred_region
          _
        $region40: #{spatial_attention_pretrained_fe_forward.3} parent=11 // pred_fallthru
          _
        // Predicated region
        $region41: #{spatial_attention_pretrained_fe_forward.3} parent=11 // pred_check
          %p390 = pneg %p218
        $region42: #{spatial_attention_pretrained_fe_forward.3} parent=11 // pred_check_branch
          %392 = sbr.rel (%p390) target = $region44
        $region43: #{spatial_attention_pretrained_fe_forward.3} parent=11 // pred_region
          _
        $region44: #{spatial_attention_pretrained_fe_forward.3} parent=11 // pred_fallthru
          _
        // Predicated region
        $region45: #{spatial_attention_pretrained_fe_forward.3} parent=11 // pred_check
          %p393 = pneg %p239
        $region46: #{spatial_attention_pretrained_fe_forward.3} parent=11 // pred_check_branch
          %395 = sbr.rel (%p393) target = $region48
        $region47: #{spatial_attention_pretrained_fe_forward.3} parent=11 // pred_region
          _
        $region48: #{spatial_attention_pretrained_fe_forward.3} parent=11 // pred_fallthru
          _
        // Predicated region
        $region49: #{spatial_attention_pretrained_fe_forward.3} parent=11 // pred_check
          %p396 = pneg %p260
        $region50: #{spatial_attention_pretrained_fe_forward.3} parent=11 // pred_check_branch
          %398 = sbr.rel (%p396) target = $region52
        $region51: #{spatial_attention_pretrained_fe_forward.3} parent=11 // pred_region
          _
        $region52: #{spatial_attention_pretrained_fe_forward.3} parent=11 // pred_fallthru
          _
        // Predicated region
        $region53: #{spatial_attention_pretrained_fe_forward.3} parent=11 // pred_check
          %p399 = pneg %p281
        $region54: #{spatial_attention_pretrained_fe_forward.3} parent=11 // pred_check_branch
          %401 = sbr.rel (%p399) target = $region56
        $region55: #{spatial_attention_pretrained_fe_forward.3} parent=11 // pred_region
          _
        $region56: #{spatial_attention_pretrained_fe_forward.3} parent=11 // pred_fallthru
          _
        // Predicated region
        $region57: #{spatial_attention_pretrained_fe_forward.3} parent=11 // pred_check
          %p402 = pneg %p302
        $region58: #{spatial_attention_pretrained_fe_forward.3} parent=11 // pred_check_branch
          %404 = sbr.rel (%p402) target = $region60
        $region59: #{spatial_attention_pretrained_fe_forward.3} parent=11 // pred_region
          _
        $region60: #{spatial_attention_pretrained_fe_forward.3} parent=11 // pred_fallthru
          _
      $region12: #{spatial_attention_pretrained_fe_forward.3} parent=5 // pred_fallthru
        _
      %p405 = scmp.lt.s32.totalorder %s24, 2
      // Predicated region
      $region61: #{spatial_attention_pretrained_fe_forward.3} parent=5 // pred_check
        %p406 = pneg %p405
      $region62: #{spatial_attention_pretrained_fe_forward.3} parent=5 // pred_check_branch
        %408 = sbr.rel (%p406) target = $region64
      $region63: #{spatial_attention_pretrained_fe_forward.3} parent=5 // pred_region
        // Predicated region
        $region65: #{spatial_attention_pretrained_fe_forward.3} parent=63 // pred_check
          %p409 = pneg %p44
        $region66: #{spatial_attention_pretrained_fe_forward.3} parent=63 // pred_check_branch
          %411 = sbr.rel (%p409) target = $region68
        $region67: #{spatial_attention_pretrained_fe_forward.3} parent=63 // pred_region
          %p412 = scmp.lt.s32.totalorder %s24, 1
          %s413 = scalar_select %p412, %s24, 1
          %s414 = smul.addr %s413, 2
          %s415 = smul.addr %s414, 4
          %s416 = scalar_lea.vmem %s0, %s415
        $region68: #{spatial_attention_pretrained_fe_forward.3} parent=63 // pred_fallthru
          _
      $region64: #{spatial_attention_pretrained_fe_forward.3} parent=5 // pred_fallthru
        _
      %p417 = scmp.le.s32.totalorder 1, %s24
      %p418 = scmp.lt.s32.totalorder %s24, 3
      %p419 = pnand %p417, %p418
      %p420 = pneg %p419
      // Predicated region
      $region69: #{spatial_attention_pretrained_fe_forward.3} parent=5 // pred_check
        _
      $region70: #{spatial_attention_pretrained_fe_forward.3} parent=5 // pred_check_branch
        %422 = sbr.rel (%p419) target = $region72
      $region71: #{spatial_attention_pretrained_fe_forward.3} parent=5 // pred_region
        %s423 = ssub.s32 %s24, 1
        %p424 = scmp.lt.s32.totalorder %s29, 1
        %s425 = scalar_select %p424, %s29, 1
        %s426 = smul.addr %s425, 2
        %s427 = smul.addr %s426, 4
        %s428 = scalar_lea.vmem %s0, %s427
        %p429 = pneg %p50
        %p430 = pneg %p47
        %p431 = pneg %p71
        %p432 = pneg %p68
        %p433 = pneg %p92
        %p434 = pneg %p89
        %p435 = pneg %p113
        %p436 = pneg %p110
        %p437 = pneg %p134
        %p438 = pneg %p131
        %p439 = pneg %p155
        %p440 = pneg %p152
        %p441 = pneg %p176
        %p442 = pneg %p173
        %p443 = pneg %p197
        %p444 = pneg %p194
        %p445 = pneg %p218
        %p446 = pneg %p215
        %p447 = pneg %p239
        %p448 = pneg %p236
        %p449 = pneg %p260
        %p450 = pneg %p257
        %p451 = pneg %p281
        %p452 = pneg %p278
        %p453 = pneg %p302
        %p454 = pneg %p299
        %p455 = pneg %p328
        %p456 = pneg %p325
        %s457 = sand.u32 %s315, 1
        %s458 = scalar_lea.sflag [#allocation3], %s457
        %s459 = sand.u32 %s315, 1
        %s460 = scalar_lea.vmem [#allocation2], %s459
        %p461 = pneg %p354
        %p462 = pneg %p351
        %p463 = scmp.lt.s32.totalorder %s29, 1
        %s464 = scalar_select %p463, %s29, 1
        %s465 = smul.addr %s464, 4
        %s466 = scalar_lea.vmem %s14, %s465
        %p467 = scmp.lt.s32.totalorder %s29, 1
        %s468 = scalar_select %p467, %s29, 1
        %s469 = smul.addr %s468, 2
        %s470 = smul.addr %s469, 4
        %s471 = scalar_lea.vmem %s0, %s470
        %p472 = scmp.lt.s32.totalorder %s29, 1
        %s473 = scalar_select %p472, %s29, 1
        %s474 = smul.addr %s473, 4
        %s475 = scalar_lea.vmem %s14, %s474
        %v477 = vld [vmem:[%s471] sm:$0xff]
        %v479 = vcombine.high %v477, %v477
        %v481 = vpack.c.bf16 %v477, %v477
        %v482 = vpack.c.bf16 %v479, %v479
        %v483 = vld [vmem:[%s1] sm:$0xf]
        %v486 = vunpack.c.l.s4 1983009808
        %v487 = vunpack.c.0.s8 %v486
        %v488 = vlaneseq
        %v489 = vshrl.u32 %v488, 7
        %v490 = vsub.s32 %v487, %v489
        %v491 = vrot.slane %v483, %v490
        %v492 = vcombine.high %v491, %v491
        %495 = vmatprep.subr.bf16.mxu0 0
        %496 = vmatpush1.bf16.xpose.msra.mxu0 0
        %497 = vmatprep.subr.bf16.mxu0 0
        %498 = vmatpush1.bf16.xpose.msra.mxu0 0
        %499 = vmatprep.subr.bf16.mxu0 0
        %500 = vmatpush1.bf16.xpose.msra.mxu0 0
        %501 = vmatprep.subr.bf16.mxu0 0
        %502 = vmatpush1.bf16.xpose.msra.mxu0 0
        %503 = vmatprep.subr.bf16.mxu0 0
        %504 = vmatpush1.bf16.xpose.msra.mxu0 0
        %505 = vmatprep.subr.bf16.mxu0 0
        %506 = vmatpush1.bf16.xpose.msra.mxu0 0
        %507 = vmatprep.subr.bf16.mxu0 0
        %508 = vmatpush1.bf16.xpose.msra.mxu0 0
        %509 = vmatprep.subr.bf16.mxu0 %v492
        %510 = vmatpush1.bf16.xpose.msra.mxu0 %v491
        %511 = vmatprep.subr.bf16.mxu0 0
        %512 = vmatpush2.bf16.xpose.msra.mxu0 0
        %513 = vmatprep.subr.bf16.mxu0 0
        %514 = vmatpush2.bf16.xpose.msra.mxu0 0
        %515 = vmatprep.subr.bf16.mxu0 0
        %516 = vmatpush2.bf16.xpose.msra.mxu0 0
        %517 = vmatprep.subr.bf16.mxu0 0
        %518 = vmatpush2.bf16.xpose.msra.mxu0 0
        %519 = vmatprep.subr.bf16.mxu0 0
        %520 = vmatpush2.bf16.xpose.msra.mxu0 0
        %521 = vmatprep.subr.bf16.mxu0 0
        %522 = vmatpush2.bf16.xpose.msra.mxu0 0
        %523 = vmatprep.subr.bf16.mxu0 0
        %524 = vmatpush2.bf16.xpose.msra.mxu0 0
        %525 = vmatprep.subr.bf16.mxu0 0
        %526 = vmatpush2.bf16.xpose.msra.mxu0 0
        %527 = vmatprep.mubr.bf16.mxu0 %v482
        %528 = vmatmul.mubr.bf16.gmra.mxu0 %v481
        %v529 = vpop.f32.mrf.mxu0
        %v530 = vadd.f32 0.0, %v529
        %v531 = vpop.f32.mrf.mxu0
        %v532 = vpop.f32.mrf.mxu0
        %v533 = vpop.f32.mrf.mxu0
        %534 = vdwg.mxu0
        %v535 = vmul.f32 %v530, 0.0625
        %vm536 = vcmask 19456
        %v537 = vsel %vm536, %v535, -inf
        %v538 = vrot.slane %v537, 4
        %v539 = vmax.f32 %v537, %v538
        %v540 = vrot.slane %v539, 2
        %v541 = vmax.f32 %v539, %v540
        %v542 = vrot.slane %v541, 1
        %v543 = vmax.f32 %v541, %v542
        %v544 = vsub.f32 %v535, %v543
        %v545 = vmul.f32 %v544, 1.442695
        %v546 = vpow.pop %v545
        %v547 = vsel %vm536, %v546, 0.0
        %v548 = vrot.slane %v547, 4
        %v549 = vadd.f32 %v547, %v548
        %v550 = vrot.slane %v549, 2
        %v551 = vadd.f32 %v549, %v550
        %v552 = vrot.slane %v551, 1
        %v553 = vadd.f32 %v551, %v552
        %v554 = vrcp.pop %v553
        %v555 = vmul.f32 %v546, %v554
        %v556 = vsel %vm536, %v555, 0.0
        %557 = vadd.xlane.f32.xlu0 %v556
        %v558 = vpop.xlane.xlu0 %557
        %v561 = vunpack.c.l.s4 839922192
        %v562 = vunpack.c.0.s8 %v561
        %v563 = vlaneseq
        %v564 = vshrl.u32 %v563, 7
        %v565 = vsub.s32 %v562, %v564
        %v566 = vrot.slane %v558, %v565
        %v568 = vmul.f32 %v477, %v566
        %v570 = vcombine.high %v568, %v568
        %v572 = vpack.c.bf16 %v568, %v568
        %v573 = vpack.c.bf16 %v570, %v570
        %v574 = vld [vmem:[%s2] sm:$0xff]
        %v575 = vld [vmem:[%s2 + $0x8] sm:$0xff]
        %v576 = vld [vmem:[%s2 + $0x10] sm:$0xff]
        %v577 = vld [vmem:[%s2 + $0x18] sm:$0xff]
        %v578 = vld [vmem:[%s2 + $0x20] sm:$0xff]
        %v579 = vld [vmem:[%s2 + $0x28] sm:$0xff]
        %v580 = vld [vmem:[%s2 + $0x30] sm:$0xff]
        %v581 = vld [vmem:[%s2 + $0x38] sm:$0xff]
        %v582 = vld [vmem:[%s2 + $0x40] sm:$0xff]
        %v583 = vld [vmem:[%s2 + $0x48] sm:$0xff]
        %v584 = vld [vmem:[%s2 + $0x50] sm:$0xff]
        %v585 = vld [vmem:[%s2 + $0x58] sm:$0xff]
        %v586 = vld [vmem:[%s2 + $0x60] sm:$0xff]
        %v587 = vld [vmem:[%s2 + $0x68] sm:$0xff]
        %v588 = vld [vmem:[%s2 + $0x70] sm:$0xff]
        %v589 = vld [vmem:[%s2 + $0x78] sm:$0xff]
        %v590 = vld [vmem:[%s2 + $0x80] sm:$0xff]
        %v591 = vld [vmem:[%s2 + $0x88] sm:$0xff]
        %v592 = vld [vmem:[%s2 + $0x90] sm:$0xff]
        %v593 = vld [vmem:[%s2 + $0x98] sm:$0xff]
        %v594 = vld [vmem:[%s2 + $0xa0] sm:$0xff]
        %v595 = vld [vmem:[%s2 + $0xa8] sm:$0xff]
        %v596 = vld [vmem:[%s2 + $0xb0] sm:$0xff]
        %v597 = vld [vmem:[%s2 + $0xb8] sm:$0xff]
        %v598 = vld [vmem:[%s2 + $0xc0] sm:$0xff]
        %v599 = vld [vmem:[%s2 + $0xc8] sm:$0xff]
        %v600 = vld [vmem:[%s2 + $0xd0] sm:$0xff]
        %v601 = vld [vmem:[%s2 + $0xd8] sm:$0xff]
        %v602 = vld [vmem:[%s2 + $0xe0] sm:$0xff]
        %v603 = vld [vmem:[%s2 + $0xe8] sm:$0xff]
        %v604 = vld [vmem:[%s2 + $0xf0] sm:$0xff]
        %v605 = vld [vmem:[%s2 + $0xf8] sm:$0xff]
        %v606 = vld [vmem:[%s3] sm:$0x3]
        %v608 = vlaneseq
        %v609 = vshrl.u32 %v608, 7
        %v610 = vsub.s32 0, %v609
        %v611 = vrot.slane %v606, %v610
        %v612 = vlaneseq
        %v613 = vshrl.u32 %v612, 7
        %v614 = vsub.s32 1, %v613
        %v615 = vrot.slane %v606, %v614
        %v650 = vunpack.c.l.b16 %v574
        %v651 = vunpack.c.h.b16 %v574
        %v652 = vunpack.c.l.b16 %v575
        %v653 = vunpack.c.h.b16 %v575
        %v654 = vunpack.c.l.b16 %v576
        %v655 = vunpack.c.h.b16 %v576
        %v656 = vunpack.c.l.b16 %v577
        %v657 = vunpack.c.h.b16 %v577
        %v658 = vunpack.c.l.b16 %v578
        %v659 = vunpack.c.h.b16 %v578
        %v660 = vunpack.c.l.b16 %v579
        %v661 = vunpack.c.h.b16 %v579
        %v662 = vunpack.c.l.b16 %v580
        %v663 = vunpack.c.h.b16 %v580
        %v664 = vunpack.c.l.b16 %v581
        %v665 = vunpack.c.h.b16 %v581
        %v666 = vunpack.c.l.b16 %v582
        %v667 = vunpack.c.h.b16 %v582
        %v668 = vunpack.c.l.b16 %v583
        %v669 = vunpack.c.h.b16 %v583
        %v670 = vunpack.c.l.b16 %v584
        %v671 = vunpack.c.h.b16 %v584
        %v672 = vunpack.c.l.b16 %v585
        %v673 = vunpack.c.h.b16 %v585
        %v674 = vunpack.c.l.b16 %v586
        %v675 = vunpack.c.h.b16 %v586
        %v676 = vunpack.c.l.b16 %v587
        %v677 = vunpack.c.h.b16 %v587
        %v678 = vunpack.c.l.b16 %v588
        %v679 = vunpack.c.h.b16 %v588
        %v680 = vunpack.c.l.b16 %v589
        %v681 = vunpack.c.h.b16 %v589
        %v682 = vunpack.c.l.b16 %v590
        %v683 = vunpack.c.h.b16 %v590
        %v684 = vunpack.c.l.b16 %v591
        %v685 = vunpack.c.h.b16 %v591
        %v686 = vunpack.c.l.b16 %v592
        %v687 = vunpack.c.h.b16 %v592
        %v688 = vunpack.c.l.b16 %v593
        %v689 = vunpack.c.h.b16 %v593
        %v690 = vunpack.c.l.b16 %v594
        %v691 = vunpack.c.h.b16 %v594
        %v692 = vunpack.c.l.b16 %v595
        %v693 = vunpack.c.h.b16 %v595
        %v694 = vunpack.c.l.b16 %v596
        %v695 = vunpack.c.h.b16 %v596
        %v696 = vunpack.c.l.b16 %v597
        %v697 = vunpack.c.h.b16 %v597
        %v698 = vunpack.c.l.b16 %v598
        %v699 = vunpack.c.h.b16 %v598
        %v700 = vunpack.c.l.b16 %v599
        %v701 = vunpack.c.h.b16 %v599
        %v702 = vunpack.c.l.b16 %v600
        %v703 = vunpack.c.h.b16 %v600
        %v704 = vunpack.c.l.b16 %v601
        %v705 = vunpack.c.h.b16 %v601
        %v706 = vunpack.c.l.b16 %v602
        %v707 = vunpack.c.h.b16 %v602
        %v708 = vunpack.c.l.b16 %v603
        %v709 = vunpack.c.h.b16 %v603
        %v710 = vunpack.c.l.b16 %v604
        %v711 = vunpack.c.h.b16 %v604
        %v712 = vunpack.c.l.b16 %v605
        %v713 = vunpack.c.h.b16 %v605
        %v714 = vpack.c.b16 %v652, %v650
        %v715 = vpack.c.b16 %v653, %v651
        %v716 = vpack.c.b16 %v656, %v654
        %v717 = vpack.c.b16 %v657, %v655
        %v718 = vpack.c.b16 %v660, %v658
        %v719 = vpack.c.b16 %v661, %v659
        %v720 = vpack.c.b16 %v664, %v662
        %v721 = vpack.c.b16 %v665, %v663
        %v722 = vpack.c.b16 %v668, %v666
        %v723 = vpack.c.b16 %v669, %v667
        %v724 = vpack.c.b16 %v672, %v670
        %v725 = vpack.c.b16 %v673, %v671
        %v726 = vpack.c.b16 %v676, %v674
        %v727 = vpack.c.b16 %v677, %v675
        %v728 = vpack.c.b16 %v680, %v678
        %v729 = vpack.c.b16 %v681, %v679
        %v730 = vpack.c.b16 %v684, %v682
        %v731 = vpack.c.b16 %v685, %v683
        %v732 = vpack.c.b16 %v688, %v686
        %v733 = vpack.c.b16 %v689, %v687
        %v734 = vpack.c.b16 %v692, %v690
        %v735 = vpack.c.b16 %v693, %v691
        %v736 = vpack.c.b16 %v696, %v694
        %v737 = vpack.c.b16 %v697, %v695
        %v738 = vpack.c.b16 %v700, %v698
        %v739 = vpack.c.b16 %v701, %v699
        %v740 = vpack.c.b16 %v704, %v702
        %v741 = vpack.c.b16 %v705, %v703
        %v742 = vpack.c.b16 %v708, %v706
        %v743 = vpack.c.b16 %v709, %v707
        %v744 = vpack.c.b16 %v712, %v710
        %v745 = vpack.c.b16 %v713, %v711
        %778 = vmatprep.subr.bf16.mxu0 %v729
        %779 = vmatpush1.bf16.msra.mxu0 %v728
        %780 = vmatprep.subr.bf16.mxu0 %v727
        %781 = vmatpush1.bf16.msra.mxu0 %v726
        %782 = vmatprep.subr.bf16.mxu0 %v725
        %783 = vmatpush1.bf16.msra.mxu0 %v724
        %784 = vmatprep.subr.bf16.mxu0 %v723
        %785 = vmatpush1.bf16.msra.mxu0 %v722
        %786 = vmatprep.subr.bf16.mxu0 %v721
        %787 = vmatpush1.bf16.msra.mxu0 %v720
        %788 = vmatprep.subr.bf16.mxu0 %v719
        %789 = vmatpush1.bf16.msra.mxu0 %v718
        %790 = vmatprep.subr.bf16.mxu0 %v717
        %791 = vmatpush1.bf16.msra.mxu0 %v716
        %792 = vmatprep.subr.bf16.mxu0 %v715
        %793 = vmatpush1.bf16.msra.mxu0 %v714
        %794 = vmatprep.subr.bf16.mxu0 %v745
        %795 = vmatpush2.bf16.msra.mxu0 %v744
        %796 = vmatprep.subr.bf16.mxu0 %v743
        %797 = vmatpush2.bf16.msra.mxu0 %v742
        %798 = vmatprep.subr.bf16.mxu0 %v741
        %799 = vmatpush2.bf16.msra.mxu0 %v740
        %800 = vmatprep.subr.bf16.mxu0 %v739
        %801 = vmatpush2.bf16.msra.mxu0 %v738
        %802 = vmatprep.subr.bf16.mxu0 %v737
        %803 = vmatpush2.bf16.msra.mxu0 %v736
        %804 = vmatprep.subr.bf16.mxu0 %v735
        %805 = vmatpush2.bf16.msra.mxu0 %v734
        %806 = vmatprep.subr.bf16.mxu0 %v733
        %807 = vmatpush2.bf16.msra.mxu0 %v732
        %808 = vmatprep.subr.bf16.mxu0 %v731
        %809 = vmatpush2.bf16.msra.mxu0 %v730
        %810 = vmatprep.mubr.bf16.mxu0 %v573
        %811 = vmatmul.mubr.bf16.gmra.mxu0 %v572
        %v812 = vpop.f32.mrf.mxu0
        %v813 = vadd.f32 %v611, %v812
        %v814 = vpop.f32.mrf.mxu0
        %v815 = vadd.f32 %v615, %v814
        %v816 = vpop.f32.mrf.mxu0
        %v817 = vpop.f32.mrf.mxu0
        %818 = vdwg.mxu0
        %v819 = vmax.f32 %v813, 0.0
        %v820 = vmax.f32 %v815, 0.0
        %v821 = vpack.c.bf16 %v819, %v819
        %v822 = vpack.c.bf16 %v820, %v820
        %v823 = vld [vmem:[%s4] sm:$0xf]
        %v824 = vld [vmem:[%s4 + $0x4] sm:$0xf]
        %v825 = vld [vmem:[%s4 + $0x8] sm:$0xf]
        %v826 = vld [vmem:[%s4 + $0xc] sm:$0xf]
        %v827 = vld [vmem:[%s4 + $0x10] sm:$0xf]
        %v828 = vld [vmem:[%s4 + $0x14] sm:$0xf]
        %v829 = vld [vmem:[%s4 + $0x18] sm:$0xf]
        %v830 = vld [vmem:[%s4 + $0x1c] sm:$0xf]
        %v831 = vld [vmem:[%s4 + $0x20] sm:$0xf]
        %v832 = vld [vmem:[%s4 + $0x24] sm:$0xf]
        %v833 = vld [vmem:[%s4 + $0x28] sm:$0xf]
        %v834 = vld [vmem:[%s4 + $0x2c] sm:$0xf]
        %v835 = vld [vmem:[%s4 + $0x30] sm:$0xf]
        %v836 = vld [vmem:[%s4 + $0x34] sm:$0xf]
        %v837 = vld [vmem:[%s4 + $0x38] sm:$0xf]
        %v838 = vld [vmem:[%s4 + $0x3c] sm:$0xf]
        %v839 = vld [vmem:[%s4 + $0x40] sm:$0xf]
        %v840 = vld [vmem:[%s4 + $0x44] sm:$0xf]
        %v841 = vld [vmem:[%s4 + $0x48] sm:$0xf]
        %v842 = vld [vmem:[%s4 + $0x4c] sm:$0xf]
        %v843 = vld [vmem:[%s4 + $0x50] sm:$0xf]
        %v844 = vld [vmem:[%s4 + $0x54] sm:$0xf]
        %v845 = vld [vmem:[%s4 + $0x58] sm:$0xf]
        %v846 = vld [vmem:[%s4 + $0x5c] sm:$0xf]
        %v847 = vld [vmem:[%s4 + $0x60] sm:$0xf]
        %v848 = vld [vmem:[%s5] sm:$0x1]
        %v850 = vlaneseq
        %v851 = vshrl.u32 %v850, 7
        %v852 = vsub.s32 0, %v851
        %v853 = vrot.slane %v848, %v852
        %v880 = vunpack.c.l.b16 %v823
        %v881 = vunpack.c.l.b16 %v824
        %v882 = vunpack.c.l.b16 %v825
        %v883 = vunpack.c.l.b16 %v826
        %v884 = vunpack.c.l.b16 %v827
        %v885 = vunpack.c.l.b16 %v828
        %v886 = vunpack.c.l.b16 %v829
        %v887 = vunpack.c.l.b16 %v830
        %v888 = vunpack.c.l.b16 %v831
        %v889 = vunpack.c.l.b16 %v832
        %v890 = vunpack.c.l.b16 %v833
        %v891 = vunpack.c.l.b16 %v834
        %v892 = vunpack.c.l.b16 %v835
        %v893 = vunpack.c.l.b16 %v836
        %v894 = vunpack.c.l.b16 %v837
        %v895 = vunpack.c.l.b16 %v838
        %v896 = vunpack.c.l.b16 %v839
        %v897 = vunpack.c.l.b16 %v840
        %v898 = vunpack.c.l.b16 %v841
        %v899 = vunpack.c.l.b16 %v842
        %v900 = vunpack.c.l.b16 %v843
        %v901 = vunpack.c.l.b16 %v844
        %v902 = vunpack.c.l.b16 %v845
        %v903 = vunpack.c.l.b16 %v846
        %v904 = vunpack.c.l.b16 %v847
        %v905 = vpack.c.b16 %v881, %v880
        %v906 = vpack.c.b16 %v883, %v882
        %v907 = vpack.c.b16 %v885, %v884
        %v908 = vpack.c.b16 %v887, %v886
        %v909 = vpack.c.b16 %v889, %v888
        %v910 = vpack.c.b16 %v891, %v890
        %v911 = vpack.c.b16 %v893, %v892
        %v912 = vpack.c.b16 %v895, %v894
        %v913 = vpack.c.b16 %v897, %v896
        %v914 = vpack.c.b16 %v899, %v898
        %v915 = vpack.c.b16 %v901, %v900
        %v916 = vpack.c.b16 %v903, %v902
        %v917 = vpack.c.b16 %v904, %v904
        %vm930 = vcmask 588800
        %v932 = vsel %vm930, %v822, 0
        %vm934 = vcmask 1043456
        %v936 = vsel %vm934, %v917, 0
        %938 = vmatprep.subr.bf16.mxu0 0
        %939 = vmatpush1.bf16.msra.mxu0 %v912
        %940 = vmatprep.subr.bf16.mxu0 0
        %941 = vmatpush1.bf16.msra.mxu0 %v911
        %942 = vmatprep.subr.bf16.mxu0 0
        %943 = vmatpush1.bf16.msra.mxu0 %v910
        %944 = vmatprep.subr.bf16.mxu0 0
        %945 = vmatpush1.bf16.msra.mxu0 %v909
        %946 = vmatprep.subr.bf16.mxu0 0
        %947 = vmatpush1.bf16.msra.mxu0 %v908
        %948 = vmatprep.subr.bf16.mxu0 0
        %949 = vmatpush1.bf16.msra.mxu0 %v907
        %950 = vmatprep.subr.bf16.mxu0 0
        %951 = vmatpush1.bf16.msra.mxu0 %v906
        %952 = vmatprep.subr.bf16.mxu0 0
        %953 = vmatpush1.bf16.msra.mxu0 %v905
        %954 = vmatprep.subr.bf16.mxu0 0
        %955 = vmatpush2.bf16.msra.mxu0 0
        %956 = vmatprep.subr.bf16.mxu0 0
        %957 = vmatpush2.bf16.msra.mxu0 0
        %958 = vmatprep.subr.bf16.mxu0 0
        %959 = vmatpush2.bf16.msra.mxu0 0
        %960 = vmatprep.subr.bf16.mxu0 0
        %961 = vmatpush2.bf16.msra.mxu0 %v936
        %962 = vmatprep.subr.bf16.mxu0 0
        %963 = vmatpush2.bf16.msra.mxu0 %v916
        %964 = vmatprep.subr.bf16.mxu0 0
        %965 = vmatpush2.bf16.msra.mxu0 %v915
        %966 = vmatprep.subr.bf16.mxu0 0
        %967 = vmatpush2.bf16.msra.mxu0 %v914
        %968 = vmatprep.subr.bf16.mxu0 0
        %969 = vmatpush2.bf16.msra.mxu0 %v913
        %970 = vmatprep.mubr.bf16.mxu0 %v932
        %971 = vmatmul.mubr.bf16.gmra.mxu0 %v821
        %v972 = vpop.f32.mrf.mxu0
        %v973 = vadd.f32 %v853, %v972
        %v974 = vpop.f32.mrf.mxu0
        %v975 = vpop.f32.mrf.mxu0
        %v976 = vpop.f32.mrf.mxu0
        %977 = vdwg.mxu0
        %v978 = vmax.f32 %v973, 0.0
        %v979 = vld [vmem:[%s6] sm:$0xf]
        %981 = vset.pattern.permute.xlu0 0
        %982 = vperm.xlu0 %981, %v978
        %v983 = vpop.permute.xlu0 %982
        %v985 = vmul.f32 %v983, %v979
        %v986 = vld [vmem:[%s7] sm:$0xf]
        %987 = vset.pattern.permute.xlu0 1
        %988 = vperm.xlu0 %987, %v978
        %v989 = vpop.permute.xlu0 %988
        %v991 = vmul.f32 %v989, %v986
        %v992 = vadd.f32 %v985, %v991
        %vm993 = vcmask 11264
        %v994 = vsel %vm993, %v992, 0.0
        %v995 = vrot.slane %v994, 4
        %v996 = vadd.f32 %v994, %v995
        %v997 = vrot.slane %v996, 2
        %v998 = vadd.f32 %v996, %v997
        %v999 = vrot.slane %v998, 1
        %v1000 = vadd.f32 %v998, %v999
        %v1001 = vld [vmem:[%s8] sm:$0x1]
        %v1002 = vadd.f32 %v1000, %v1001
        %vm1003 = vcmask 8192
        %1004 = vst.msk [vmem:[%s460] sm:$0x1] %vm1003, %v1002
        %v1005 = vld [vmem:[%s9] sm:$0xf]
        %v1006 = vld [vmem:[%s9 + $0x4] sm:$0xf]
        %v1007 = vld [vmem:[%s9 + $0x8] sm:$0xf]
        %v1008 = vld [vmem:[%s9 + $0xc] sm:$0xf]
        %v1009 = vld [vmem:[%s9 + $0x10] sm:$0xf]
        %v1010 = vld [vmem:[%s9 + $0x14] sm:$0xf]
        %v1011 = vld [vmem:[%s9 + $0x18] sm:$0xf]
        %v1012 = vld [vmem:[%s9 + $0x1c] sm:$0xf]
        %v1013 = vld [vmem:[%s9 + $0x20] sm:$0xf]
        %v1014 = vld [vmem:[%s9 + $0x24] sm:$0xf]
        %v1015 = vld [vmem:[%s9 + $0x28] sm:$0xf]
        %v1016 = vld [vmem:[%s9 + $0x2c] sm:$0xf]
        %v1017 = vld [vmem:[%s9 + $0x30] sm:$0xf]
        %v1018 = vld [vmem:[%s9 + $0x34] sm:$0xf]
        %v1019 = vld [vmem:[%s9 + $0x38] sm:$0xf]
        %v1020 = vld [vmem:[%s9 + $0x3c] sm:$0xf]
        %v1021 = vld [vmem:[%s9 + $0x40] sm:$0xf]
        %v1022 = vld [vmem:[%s9 + $0x44] sm:$0xf]
        %v1023 = vld [vmem:[%s9 + $0x48] sm:$0xf]
        %v1024 = vld [vmem:[%s9 + $0x4c] sm:$0xf]
        %v1025 = vld [vmem:[%s9 + $0x50] sm:$0xf]
        %v1026 = vld [vmem:[%s9 + $0x54] sm:$0xf]
        %v1027 = vld [vmem:[%s9 + $0x58] sm:$0xf]
        %v1028 = vld [vmem:[%s9 + $0x5c] sm:$0xf]
        %v1029 = vld [vmem:[%s9 + $0x60] sm:$0xf]
        %v1030 = vld [vmem:[%s9 + $0x64] sm:$0xf]
        %v1031 = vld [vmem:[%s9 + $0x68] sm:$0xf]
        %v1032 = vld [vmem:[%s9 + $0x6c] sm:$0xf]
        %v1033 = vld [vmem:[%s9 + $0x70] sm:$0xf]
        %v1034 = vld [vmem:[%s9 + $0x74] sm:$0xf]
        %v1035 = vld [vmem:[%s9 + $0x78] sm:$0xf]
        %v1036 = vld [vmem:[%s9 + $0x7c] sm:$0xf]
        %v1069 = vunpack.c.l.b16 %v1005
        %v1070 = vunpack.c.l.b16 %v1006
        %v1071 = vunpack.c.l.b16 %v1007
        %v1072 = vunpack.c.l.b16 %v1008
        %v1073 = vunpack.c.l.b16 %v1009
        %v1074 = vunpack.c.l.b16 %v1010
        %v1075 = vunpack.c.l.b16 %v1011
        %v1076 = vunpack.c.l.b16 %v1012
        %v1077 = vunpack.c.l.b16 %v1013
        %v1078 = vunpack.c.l.b16 %v1014
        %v1079 = vunpack.c.l.b16 %v1015
        %v1080 = vunpack.c.l.b16 %v1016
        %v1081 = vunpack.c.l.b16 %v1017
        %v1082 = vunpack.c.l.b16 %v1018
        %v1083 = vunpack.c.l.b16 %v1019
        %v1084 = vunpack.c.l.b16 %v1020
        %v1085 = vunpack.c.l.b16 %v1021
        %v1086 = vunpack.c.l.b16 %v1022
        %v1087 = vunpack.c.l.b16 %v1023
        %v1088 = vunpack.c.l.b16 %v1024
        %v1089 = vunpack.c.l.b16 %v1025
        %v1090 = vunpack.c.l.b16 %v1026
        %v1091 = vunpack.c.l.b16 %v1027
        %v1092 = vunpack.c.l.b16 %v1028
        %v1093 = vunpack.c.l.b16 %v1029
        %v1094 = vunpack.c.l.b16 %v1030
        %v1095 = vunpack.c.l.b16 %v1031
        %v1096 = vunpack.c.l.b16 %v1032
        %v1097 = vunpack.c.l.b16 %v1033
        %v1098 = vunpack.c.l.b16 %v1034
        %v1099 = vunpack.c.l.b16 %v1035
        %v1100 = vunpack.c.l.b16 %v1036
        %v1101 = vpack.c.b16 %v1070, %v1069
        %v1102 = vpack.c.b16 %v1072, %v1071
        %v1103 = vpack.c.b16 %v1074, %v1073
        %v1104 = vpack.c.b16 %v1076, %v1075
        %v1105 = vpack.c.b16 %v1078, %v1077
        %v1106 = vpack.c.b16 %v1080, %v1079
        %v1107 = vpack.c.b16 %v1082, %v1081
        %v1108 = vpack.c.b16 %v1084, %v1083
        %v1109 = vpack.c.b16 %v1086, %v1085
        %v1110 = vpack.c.b16 %v1088, %v1087
        %v1111 = vpack.c.b16 %v1090, %v1089
        %v1112 = vpack.c.b16 %v1092, %v1091
        %v1113 = vpack.c.b16 %v1094, %v1093
        %v1114 = vpack.c.b16 %v1096, %v1095
        %v1115 = vpack.c.b16 %v1098, %v1097
        %v1116 = vpack.c.b16 %v1100, %v1099
        %1133 = vmatprep.subr.bf16.mxu0 0
        %1134 = vmatpush1.bf16.msra.mxu0 %v1108
        %1135 = vmatprep.subr.bf16.mxu0 0
        %1136 = vmatpush1.bf16.msra.mxu0 %v1107
        %1137 = vmatprep.subr.bf16.mxu0 0
        %1138 = vmatpush1.bf16.msra.mxu0 %v1106
        %1139 = vmatprep.subr.bf16.mxu0 0
        %1140 = vmatpush1.bf16.msra.mxu0 %v1105
        %1141 = vmatprep.subr.bf16.mxu0 0
        %1142 = vmatpush1.bf16.msra.mxu0 %v1104
        %1143 = vmatprep.subr.bf16.mxu0 0
        %1144 = vmatpush1.bf16.msra.mxu0 %v1103
        %1145 = vmatprep.subr.bf16.mxu0 0
        %1146 = vmatpush1.bf16.msra.mxu0 %v1102
        %1147 = vmatprep.subr.bf16.mxu0 0
        %1148 = vmatpush1.bf16.msra.mxu0 %v1101
        %1149 = vmatprep.subr.bf16.mxu0 0
        %1150 = vmatpush2.bf16.msra.mxu0 %v1116
        %1151 = vmatprep.subr.bf16.mxu0 0
        %1152 = vmatpush2.bf16.msra.mxu0 %v1115
        %1153 = vmatprep.subr.bf16.mxu0 0
        %1154 = vmatpush2.bf16.msra.mxu0 %v1114
        %1155 = vmatprep.subr.bf16.mxu0 0
        %1156 = vmatpush2.bf16.msra.mxu0 %v1113
        %1157 = vmatprep.subr.bf16.mxu0 0
        %1158 = vmatpush2.bf16.msra.mxu0 %v1112
        %1159 = vmatprep.subr.bf16.mxu0 0
        %1160 = vmatpush2.bf16.msra.mxu0 %v1111
        %1161 = vmatprep.subr.bf16.mxu0 0
        %1162 = vmatpush2.bf16.msra.mxu0 %v1110
        %1163 = vmatprep.subr.bf16.mxu0 0
        %1164 = vmatpush2.bf16.msra.mxu0 %v1109
        %1165 = vmatprep.mubr.bf16.mxu0 %v573
        %1166 = vmatmul.mubr.bf16.gmra.mxu0 %v572
        %v1167 = vpop.f32.mrf.mxu0
        %v1168 = vadd.f32 0.0, %v1167
        %v1169 = vpop.f32.mrf.mxu0
        %v1170 = vpop.f32.mrf.mxu0
        %v1171 = vpop.f32.mrf.mxu0
        %1172 = vdwg.mxu0
        %v1173 = vmax.f32 %v1168, 0.0
        %v1174 = vpack.c.bf16 %v1173, %v1173
        %v1175 = vld [vmem:[%s10] sm:$0xf]
        %v1176 = vld [vmem:[%s10 + $0x4] sm:$0xf]
        %v1177 = vld [vmem:[%s10 + $0x8] sm:$0xf]
        %v1178 = vld [vmem:[%s10 + $0xc] sm:$0xf]
        %v1179 = vld [vmem:[%s10 + $0x10] sm:$0xf]
        %v1180 = vld [vmem:[%s10 + $0x14] sm:$0xf]
        %v1181 = vld [vmem:[%s10 + $0x18] sm:$0xf]
        %v1182 = vld [vmem:[%s10 + $0x1c] sm:$0xf]
        %v1191 = vunpack.c.l.b16 %v1175
        %v1192 = vunpack.c.l.b16 %v1176
        %v1193 = vunpack.c.l.b16 %v1177
        %v1194 = vunpack.c.l.b16 %v1178
        %v1195 = vunpack.c.l.b16 %v1179
        %v1196 = vunpack.c.l.b16 %v1180
        %v1197 = vunpack.c.l.b16 %v1181
        %v1198 = vunpack.c.l.b16 %v1182
        %v1199 = vpack.c.b16 %v1192, %v1191
        %v1200 = vpack.c.b16 %v1194, %v1193
        %v1201 = vpack.c.b16 %v1196, %v1195
        %v1202 = vpack.c.b16 %v1198, %v1197
        %vm1207 = vcmask 523264
        %v1209 = vsel %vm1207, %v1174, 0
        %1211 = vmatprep.subr.bf16.mxu0 0
        %1212 = vmatpush1.bf16.msra.mxu0 0
        %1213 = vmatprep.subr.bf16.mxu0 0
        %1214 = vmatpush1.bf16.msra.mxu0 0
        %1215 = vmatprep.subr.bf16.mxu0 0
        %1216 = vmatpush1.bf16.msra.mxu0 0
        %1217 = vmatprep.subr.bf16.mxu0 0
        %1218 = vmatpush1.bf16.msra.mxu0 0
        %1219 = vmatprep.subr.bf16.mxu0 0
        %1220 = vmatpush1.bf16.msra.mxu0 %v1202
        %1221 = vmatprep.subr.bf16.mxu0 0
        %1222 = vmatpush1.bf16.msra.mxu0 %v1201
        %1223 = vmatprep.subr.bf16.mxu0 0
        %1224 = vmatpush1.bf16.msra.mxu0 %v1200
        %1225 = vmatprep.subr.bf16.mxu0 0
        %1226 = vmatpush1.bf16.msra.mxu0 %v1199
        %1227 = vmatprep.subr.bf16.mxu0 0
        %1228 = vmatpush2.bf16.msra.mxu0 0
        %1229 = vmatprep.subr.bf16.mxu0 0
        %1230 = vmatpush2.bf16.msra.mxu0 0
        %1231 = vmatprep.subr.bf16.mxu0 0
        %1232 = vmatpush2.bf16.msra.mxu0 0
        %1233 = vmatprep.subr.bf16.mxu0 0
        %1234 = vmatpush2.bf16.msra.mxu0 0
        %1235 = vmatprep.subr.bf16.mxu0 0
        %1236 = vmatpush2.bf16.msra.mxu0 0
        %1237 = vmatprep.subr.bf16.mxu0 0
        %1238 = vmatpush2.bf16.msra.mxu0 0
        %1239 = vmatprep.subr.bf16.mxu0 0
        %1240 = vmatpush2.bf16.msra.mxu0 0
        %1241 = vmatprep.subr.bf16.mxu0 0
        %1242 = vmatpush2.bf16.msra.mxu0 0
        %1243 = vmatprep.mubr.bf16.mxu0 0
        %1244 = vmatmul.mubr.bf16.gmra.mxu0 %v1209
        %v1245 = vpop.f32.mrf.mxu0
        %v1246 = vadd.f32 0.0, %v1245
        %v1247 = vpop.f32.mrf.mxu0
        %v1248 = vpop.f32.mrf.mxu0
        %v1249 = vpop.f32.mrf.mxu0
        %1250 = vdwg.mxu0
        %v1251 = vmax.f32 %v1246, 0.0
        %v1252 = vpack.c.bf16 %v1251, %v1251
        %v1253 = vld [vmem:[%s11] sm:$0xf]
        %v1254 = vld [vmem:[%s11 + $0x4] sm:$0xf]
        %v1255 = vld [vmem:[%s11 + $0x8] sm:$0xf]
        %v1256 = vld [vmem:[%s11 + $0xc] sm:$0xf]
        %v1261 = vunpack.c.l.b16 %v1253
        %v1262 = vunpack.c.l.b16 %v1254
        %v1263 = vunpack.c.l.b16 %v1255
        %v1264 = vunpack.c.l.b16 %v1256
        %v1265 = vpack.c.b16 %v1262, %v1261
        %v1266 = vpack.c.b16 %v1264, %v1263
        %vm1269 = vcmask 261120
        %v1271 = vsel %vm1269, %v1252, 0
        %1273 = vmatprep.subr.bf16.mxu0 0
        %1274 = vmatpush1.bf16.msra.mxu0 0
        %1275 = vmatprep.subr.bf16.mxu0 0
        %1276 = vmatpush1.bf16.msra.mxu0 0
        %1277 = vmatprep.subr.bf16.mxu0 0
        %1278 = vmatpush1.bf16.msra.mxu0 0
        %1279 = vmatprep.subr.bf16.mxu0 0
        %1280 = vmatpush1.bf16.msra.mxu0 0
        %1281 = vmatprep.subr.bf16.mxu0 0
        %1282 = vmatpush1.bf16.msra.mxu0 0
        %1283 = vmatprep.subr.bf16.mxu0 0
        %1284 = vmatpush1.bf16.msra.mxu0 0
        %1285 = vmatprep.subr.bf16.mxu0 0
        %1286 = vmatpush1.bf16.msra.mxu0 %v1266
        %1287 = vmatprep.subr.bf16.mxu0 0
        %1288 = vmatpush1.bf16.msra.mxu0 %v1265
        %1289 = vmatprep.subr.bf16.mxu0 0
        %1290 = vmatpush2.bf16.msra.mxu0 0
        %1291 = vmatprep.subr.bf16.mxu0 0
        %1292 = vmatpush2.bf16.msra.mxu0 0
        %1293 = vmatprep.subr.bf16.mxu0 0
        %1294 = vmatpush2.bf16.msra.mxu0 0
        %1295 = vmatprep.subr.bf16.mxu0 0
        %1296 = vmatpush2.bf16.msra.mxu0 0
        %1297 = vmatprep.subr.bf16.mxu0 0
        %1298 = vmatpush2.bf16.msra.mxu0 0
        %1299 = vmatprep.subr.bf16.mxu0 0
        %1300 = vmatpush2.bf16.msra.mxu0 0
        %1301 = vmatprep.subr.bf16.mxu0 0
        %1302 = vmatpush2.bf16.msra.mxu0 0
        %1303 = vmatprep.subr.bf16.mxu0 0
        %1304 = vmatpush2.bf16.msra.mxu0 0
        %1305 = vmatprep.mubr.bf16.mxu0 0
        %1306 = vmatmul.mubr.bf16.gmra.mxu0 %v1271
        %v1307 = vpop.f32.mrf.mxu0
        %v1308 = vadd.f32 0.0, %v1307
        %v1309 = vpop.f32.mrf.mxu0
        %v1310 = vpop.f32.mrf.mxu0
        %v1311 = vpop.f32.mrf.mxu0
        %1312 = vdwg.mxu0
        %v1313 = vmax.f32 %v1308, 0.0
        %v1314 = vpack.c.bf16 %v1313, %v1313
        %v1315 = vld [vmem:[%s12] sm:$0xf]
        %vm1316 = vcmask 64512
        %v1318 = vsel %vm1316, %v1314, 0
        %v1321 = vsel %vm934, %v1315, 0
        %1323 = vmatprep.subr.bf16.mxu0 0
        %1324 = vmatpush1.bf16.msra.mxu0 0
        %1325 = vmatprep.subr.bf16.mxu0 0
        %1326 = vmatpush1.bf16.msra.mxu0 0
        %1327 = vmatprep.subr.bf16.mxu0 0
        %1328 = vmatpush1.bf16.msra.mxu0 0
        %1329 = vmatprep.subr.bf16.mxu0 0
        %1330 = vmatpush1.bf16.msra.mxu0 0
        %1331 = vmatprep.subr.bf16.mxu0 0
        %1332 = vmatpush1.bf16.msra.mxu0 0
        %1333 = vmatprep.subr.bf16.mxu0 0
        %1334 = vmatpush1.bf16.msra.mxu0 0
        %1335 = vmatprep.subr.bf16.mxu0 0
        %1336 = vmatpush1.bf16.msra.mxu0 0
        %1337 = vmatprep.subr.bf16.mxu0 0
        %1338 = vmatpush1.bf16.msra.mxu0 %v1321
        %1339 = vmatprep.subr.bf16.mxu0 0
        %1340 = vmatpush2.bf16.msra.mxu0 0
        %1341 = vmatprep.subr.bf16.mxu0 0
        %1342 = vmatpush2.bf16.msra.mxu0 0
        %1343 = vmatprep.subr.bf16.mxu0 0
        %1344 = vmatpush2.bf16.msra.mxu0 0
        %1345 = vmatprep.subr.bf16.mxu0 0
        %1346 = vmatpush2.bf16.msra.mxu0 0
        %1347 = vmatprep.subr.bf16.mxu0 0
        %1348 = vmatpush2.bf16.msra.mxu0 0
        %1349 = vmatprep.subr.bf16.mxu0 0
        %1350 = vmatpush2.bf16.msra.mxu0 0
        %1351 = vmatprep.subr.bf16.mxu0 0
        %1352 = vmatpush2.bf16.msra.mxu0 0
        %1353 = vmatprep.subr.bf16.mxu0 0
        %1354 = vmatpush2.bf16.msra.mxu0 0
        %1355 = vmatprep.mubr.bf16.mxu0 0
        %1356 = vmatmul.mubr.bf16.gmra.mxu0 %v1318
        %v1357 = vpop.f32.mrf.mxu0
        %v1358 = vadd.f32 0.0, %v1357
        %v1359 = vpop.f32.mrf.mxu0
        %v1360 = vpop.f32.mrf.mxu0
        %v1361 = vpop.f32.mrf.mxu0
        %1362 = vdwg.mxu0
        %v1363 = vxor.u32 %v1358, 2147483648
        %v1364 = vmul.f32 %v1363, 1.442695
        %v1365 = vpow.pop %v1364
        %v1366 = vadd.f32 %v1365, 1.0
        %v1367 = vrcp.pop %v1366
        %v1368 = vmul.f32 1.0, %v1367
        %vm1369 = vcmask 3072
        %1370 = vst.msk [vmem:[%s475] sm:$0xf] %vm1369, %v1368
        %s1371 = sand.u32 %s315, 1
        %s1372 = scalar_lea.sflag [#allocation3], %s1371
        %s1373 = sand.u32 %s315, 1
        %s1374 = scalar_lea.vmem [#allocation2], %s1373
        %p1375 = scmp.lt.s32.totalorder %s29, 1
        %s1376 = scalar_select %p1375, %s29, 1
        %s1377 = smul.addr %s1376, 4
        %s1378 = scalar_lea.vmem %s14, %s1377
        // Predicated region
        $region73: #{spatial_attention_pretrained_fe_forward.3} parent=71 // pred_check
          %p1379 = pneg %p325
        $region74: #{spatial_attention_pretrained_fe_forward.3} parent=71 // pred_check_branch
          %1381 = sbr.rel (%p1379) target = $region76
        $region75: #{spatial_attention_pretrained_fe_forward.3} parent=71 // pred_region
          %s1383 = ssub.s32 16, 16
          %1384 = vsyncadd %s1372, %s1383
          %s1385 = smul.addr %s29, 16
          %s1386 = scalar_lea.hbm %s13, %s1385
          %s1388 = sshll.u32 %s1374, 4
          %s1389 = int_to_ptr.vmem [resolvable:$true] %s1388
          %1391 = dma.vmem_to_hbm [thread:$0]  %s1389, 16, %s1386, %s1372
        $region76: #{spatial_attention_pretrained_fe_forward.3} parent=71 // pred_fallthru
          _
        // Predicated region
        $region77: #{spatial_attention_pretrained_fe_forward.3} parent=71 // pred_check
          %p1392 = pneg %p351
        $region78: #{spatial_attention_pretrained_fe_forward.3} parent=71 // pred_check_branch
          %1394 = sbr.rel (%p1392) target = $region80
        $region79: #{spatial_attention_pretrained_fe_forward.3} parent=71 // pred_region
          _
        $region80: #{spatial_attention_pretrained_fe_forward.3} parent=71 // pred_fallthru
          _
      $region72: #{spatial_attention_pretrained_fe_forward.3} parent=5 // pred_fallthru
        _
      %p1395 = scmp.le.s32.totalorder 2, %s24
      // Predicated region
      $region81: #{spatial_attention_pretrained_fe_forward.3} parent=5 // pred_check
        %p1396 = pneg %p1395
      $region82: #{spatial_attention_pretrained_fe_forward.3} parent=5 // pred_check_branch
        %1398 = sbr.rel (%p1396) target = $region84
      $region83: #{spatial_attention_pretrained_fe_forward.3} parent=5 // pred_region
        %s1399 = ssub.s32 %s24, 2
        // Predicated region
        $region85: #{spatial_attention_pretrained_fe_forward.3} parent=83 // pred_check
          %p1400 = pneg %p331
        $region86: #{spatial_attention_pretrained_fe_forward.3} parent=83 // pred_check_branch
          %1402 = sbr.rel (%p1400) target = $region88
        $region87: #{spatial_attention_pretrained_fe_forward.3} parent=83 // pred_region
          %s1403 = sand.u32 %s316, 1
          %s1404 = scalar_lea.sflag [#allocation3], %s1403
          %s1405 = sand.u32 %s316, 1
          %s1406 = scalar_lea.vmem [#allocation2], %s1405
          %1407 = dma.done %s1404, 16
        $region88: #{spatial_attention_pretrained_fe_forward.3} parent=83 // pred_fallthru
          _
        // Predicated region
        $region89: #{spatial_attention_pretrained_fe_forward.3} parent=83 // pred_check
          %p1408 = pneg %p357
        $region90: #{spatial_attention_pretrained_fe_forward.3} parent=83 // pred_check_branch
          %1410 = sbr.rel (%p1408) target = $region92
        $region91: #{spatial_attention_pretrained_fe_forward.3} parent=83 // pred_region
          %p1411 = scmp.lt.s32.totalorder %s30, 1
          %s1412 = scalar_select %p1411, %s30, 1
          %s1413 = smul.addr %s1412, 4
          %s1414 = scalar_lea.vmem %s14, %s1413
        $region92: #{spatial_attention_pretrained_fe_forward.3} parent=83 // pred_fallthru
          _
      $region84: #{spatial_attention_pretrained_fe_forward.3} parent=5 // pred_fallthru
        _
    $region6: #{spatial_attention_pretrained_fe_forward.3} parent=1 // loop_footer
      %s28 = sadd.s32 1, %s24
    $region7: #{spatial_attention_pretrained_fe_forward.3} parent=1 // loop_footer_branch
      %23 = sbr.rel target = $region3
    $region8: #{spatial_attention_pretrained_fe_forward.3} parent=1 // loop_exit
      _
    %1415 = vsyncpa [#allocation3], 1
    %s1416 = scalar_lea.sflag [#allocation3], 1
    %1417 = vsyncpa %s1416, 1

// kernel: spatial_attention_pretrained_fe_forward.2
$region0: #{spatial_attention_pretrained_fe_forward.2}
  #allocation0 [shape = 'u32[]', space=smem, size = 0x4, offset = 0x4, fixed_abs, tag = 'smem constant byte address 0x4 - core index']
  #allocation1 [shape = 'u32[144,128]{1,0:T(1,128)}', space=vmem, size = 0x12000, scoped, tag = 'internal scratch']
  %s0 = inlined_call_operand.vmem [shape: bf16[128,768], index: 0, kind: input, shape index: {}]
  %s1 = inlined_call_operand.vmem [shape: bf16[768,200], index: 1, kind: input, shape index: {}]
  %s2 = inlined_call_operand.vmem [shape: f32[1,200], index: 2, kind: input, shape index: {}]
  %s3 = inlined_call_operand.vmem [shape: bf16[768,256], index: 3, kind: input, shape index: {}]
  %s4 = inlined_call_operand.vmem [shape: f32[1,256], index: 4, kind: input, shape index: {}]
  %s5 = inlined_call_operand.vmem [shape: bf16[256,56], index: 5, kind: input, shape index: {}]
  %s6 = inlined_call_operand.vmem [shape: f32[1,56], index: 6, kind: input, shape index: {}]
  %s7 = inlined_call_operand.vmem [shape: f32[128,256], index: 7, kind: output, shape index: {}]
  %s8 = sld [smem:[#allocation0]]
  $region38: #{spatial_attention_pretrained_fe_forward.2} parent=0
    _
  %s10 = ssub.s32 1, %s8
  %s11 = scalar_select 0, %s10, %s8
  // Predicated region
  $region2: #{spatial_attention_pretrained_fe_forward.2} parent=0 // pred_check
    _
  $region3: #{spatial_attention_pretrained_fe_forward.2} parent=0 // pred_check_branch
    %13 = sbr.rel (0) target = $region5
  $region4: #{spatial_attention_pretrained_fe_forward.2} parent=0 // pred_region
    _
  $region5: #{spatial_attention_pretrained_fe_forward.2} parent=0 // pred_fallthru
    _
  // Predicated region
  $region6: #{spatial_attention_pretrained_fe_forward.2} parent=0 // pred_check
    _
  $region7: #{spatial_attention_pretrained_fe_forward.2} parent=0 // pred_check_branch
    %15 = sbr.rel (0) target = $region9
  $region8: #{spatial_attention_pretrained_fe_forward.2} parent=0 // pred_region
    _
  $region9: #{spatial_attention_pretrained_fe_forward.2} parent=0 // pred_fallthru
    _
  // Predicated region
  $region10: #{spatial_attention_pretrained_fe_forward.2} parent=0 // pred_check
    _
  $region11: #{spatial_attention_pretrained_fe_forward.2} parent=0 // pred_check_branch
    %17 = sbr.rel (0) target = $region13
  $region12: #{spatial_attention_pretrained_fe_forward.2} parent=0 // pred_region
    _
  $region13: #{spatial_attention_pretrained_fe_forward.2} parent=0 // pred_fallthru
    _
  // Predicated region
  $region14: #{spatial_attention_pretrained_fe_forward.2} parent=0 // pred_check
    _
  $region15: #{spatial_attention_pretrained_fe_forward.2} parent=0 // pred_check_branch
    %19 = sbr.rel (0) target = $region17
  $region16: #{spatial_attention_pretrained_fe_forward.2} parent=0 // pred_region
    _
  $region17: #{spatial_attention_pretrained_fe_forward.2} parent=0 // pred_fallthru
    _
  // Predicated region
  $region18: #{spatial_attention_pretrained_fe_forward.2} parent=0 // pred_check
    _
  $region19: #{spatial_attention_pretrained_fe_forward.2} parent=0 // pred_check_branch
    %21 = sbr.rel (0) target = $region21
  $region20: #{spatial_attention_pretrained_fe_forward.2} parent=0 // pred_region
    _
  $region21: #{spatial_attention_pretrained_fe_forward.2} parent=0 // pred_fallthru
    _
  // Predicated region
  $region22: #{spatial_attention_pretrained_fe_forward.2} parent=0 // pred_check
    _
  $region23: #{spatial_attention_pretrained_fe_forward.2} parent=0 // pred_check_branch
    %23 = sbr.rel (0) target = $region25
  $region24: #{spatial_attention_pretrained_fe_forward.2} parent=0 // pred_region
    _
  $region25: #{spatial_attention_pretrained_fe_forward.2} parent=0 // pred_fallthru
    _
  // Predicated region
  $region26: #{spatial_attention_pretrained_fe_forward.2} parent=0 // pred_check
    _
  $region27: #{spatial_attention_pretrained_fe_forward.2} parent=0 // pred_check_branch
    %25 = sbr.rel (0) target = $region29
  $region28: #{spatial_attention_pretrained_fe_forward.2} parent=0 // pred_region
    _
  $region29: #{spatial_attention_pretrained_fe_forward.2} parent=0 // pred_fallthru
    _
  %v27 = vld [vmem:[%s0] sm:$0xff]
  %v28 = vld [vmem:[%s0 + $0x8] sm:$0xff]
  %v29 = vld [vmem:[%s0 + $0x10] sm:$0xff]
  %v30 = vld [vmem:[%s0 + $0x18] sm:$0xff]
  %v31 = vld [vmem:[%s0 + $0x20] sm:$0xff]
  %v32 = vld [vmem:[%s0 + $0x28] sm:$0xff]
  %v33 = vld [vmem:[%s0 + $0x30] sm:$0xff]
  %v34 = vld [vmem:[%s0 + $0x38] sm:$0xff]
  %v35 = vld [vmem:[%s0 + $0x40] sm:$0xff]
  %v36 = vld [vmem:[%s0 + $0x48] sm:$0xff]
  %v37 = vld [vmem:[%s0 + $0x50] sm:$0xff]
  %v38 = vld [vmem:[%s0 + $0x58] sm:$0xff]
  %v39 = vld [vmem:[%s0 + $0x60] sm:$0xff]
  %v40 = vld [vmem:[%s0 + $0x68] sm:$0xff]
  %v41 = vld [vmem:[%s0 + $0x70] sm:$0xff]
  %v42 = vld [vmem:[%s0 + $0x78] sm:$0xff]
  %v43 = vld [vmem:[%s0 + $0x80] sm:$0xff]
  %v44 = vld [vmem:[%s0 + $0x88] sm:$0xff]
  %v45 = vld [vmem:[%s0 + $0x90] sm:$0xff]
  %v46 = vld [vmem:[%s0 + $0x98] sm:$0xff]
  %v47 = vld [vmem:[%s0 + $0xa0] sm:$0xff]
  %v48 = vld [vmem:[%s0 + $0xa8] sm:$0xff]
  %v49 = vld [vmem:[%s0 + $0xb0] sm:$0xff]
  %v50 = vld [vmem:[%s0 + $0xb8] sm:$0xff]
  %v51 = vld [vmem:[%s0 + $0xc0] sm:$0xff]
  %v52 = vld [vmem:[%s0 + $0xc8] sm:$0xff]
  %v53 = vld [vmem:[%s0 + $0xd0] sm:$0xff]
  %v54 = vld [vmem:[%s0 + $0xd8] sm:$0xff]
  %v55 = vld [vmem:[%s0 + $0xe0] sm:$0xff]
  %v56 = vld [vmem:[%s0 + $0xe8] sm:$0xff]
  %v57 = vld [vmem:[%s0 + $0xf0] sm:$0xff]
  %v58 = vld [vmem:[%s0 + $0xf8] sm:$0xff]
  %v59 = vld [vmem:[%s0 + $0x100] sm:$0xff]
  %v60 = vld [vmem:[%s0 + $0x108] sm:$0xff]
  %v61 = vld [vmem:[%s0 + $0x110] sm:$0xff]
  %v62 = vld [vmem:[%s0 + $0x118] sm:$0xff]
  %v63 = vld [vmem:[%s0 + $0x120] sm:$0xff]
  %v64 = vld [vmem:[%s0 + $0x128] sm:$0xff]
  %v65 = vld [vmem:[%s0 + $0x130] sm:$0xff]
  %v66 = vld [vmem:[%s0 + $0x138] sm:$0xff]
  %v67 = vld [vmem:[%s0 + $0x140] sm:$0xff]
  %v68 = vld [vmem:[%s0 + $0x148] sm:$0xff]
  %v69 = vld [vmem:[%s0 + $0x150] sm:$0xff]
  %v70 = vld [vmem:[%s0 + $0x158] sm:$0xff]
  %v71 = vld [vmem:[%s0 + $0x160] sm:$0xff]
  %v72 = vld [vmem:[%s0 + $0x168] sm:$0xff]
  %v73 = vld [vmem:[%s0 + $0x170] sm:$0xff]
  %v74 = vld [vmem:[%s0 + $0x178] sm:$0xff]
  %v75 = vld [vmem:[%s1] sm:$0xff]
  %v76 = vld [vmem:[%s1 + $0x8] sm:$0xff]
  %v77 = vld [vmem:[%s1 + $0x10] sm:$0xff]
  %v78 = vld [vmem:[%s1 + $0x18] sm:$0xff]
  %v79 = vld [vmem:[%s1 + $0x20] sm:$0xff]
  %v80 = vld [vmem:[%s1 + $0x28] sm:$0xff]
  %v81 = vld [vmem:[%s1 + $0x30] sm:$0xff]
  %v82 = vld [vmem:[%s1 + $0x38] sm:$0xff]
  %v83 = vld [vmem:[%s1 + $0x40] sm:$0xff]
  %v84 = vld [vmem:[%s1 + $0x48] sm:$0xff]
  %v85 = vld [vmem:[%s1 + $0x50] sm:$0xff]
  %v86 = vld [vmem:[%s1 + $0x58] sm:$0xff]
  %v87 = vld [vmem:[%s1 + $0x60] sm:$0xff]
  %v88 = vld [vmem:[%s1 + $0x68] sm:$0xff]
  %v89 = vld [vmem:[%s1 + $0x70] sm:$0xff]
  %v90 = vld [vmem:[%s1 + $0x78] sm:$0xff]
  %v91 = vld [vmem:[%s1 + $0x80] sm:$0xff]
  %v92 = vld [vmem:[%s1 + $0x88] sm:$0xff]
  %v93 = vld [vmem:[%s1 + $0x90] sm:$0xff]
  %v94 = vld [vmem:[%s1 + $0x98] sm:$0xff]
  %v95 = vld [vmem:[%s1 + $0xa0] sm:$0xff]
  %v96 = vld [vmem:[%s1 + $0xa8] sm:$0xff]
  %v97 = vld [vmem:[%s1 + $0xb0] sm:$0xff]
  %v98 = vld [vmem:[%s1 + $0xb8] sm:$0xff]
  %v99 = vld [vmem:[%s1 + $0xc0] sm:$0xff]
  %v100 = vld [vmem:[%s1 + $0xc8] sm:$0xff]
  %v101 = vld [vmem:[%s1 + $0xd0] sm:$0xff]
  %v102 = vld [vmem:[%s1 + $0xd8] sm:$0xff]
  %v103 = vld [vmem:[%s1 + $0xe0] sm:$0xff]
  %v104 = vld [vmem:[%s1 + $0xe8] sm:$0xff]
  %v105 = vld [vmem:[%s1 + $0xf0] sm:$0xff]
  %v106 = vld [vmem:[%s1 + $0xf8] sm:$0xff]
  %v107 = vld [vmem:[%s1 + $0x100] sm:$0xff]
  %v108 = vld [vmem:[%s1 + $0x108] sm:$0xff]
  %v109 = vld [vmem:[%s1 + $0x110] sm:$0xff]
  %v110 = vld [vmem:[%s1 + $0x118] sm:$0xff]
  %v111 = vld [vmem:[%s1 + $0x120] sm:$0xff]
  %v112 = vld [vmem:[%s1 + $0x128] sm:$0xff]
  %v113 = vld [vmem:[%s1 + $0x130] sm:$0xff]
  %v114 = vld [vmem:[%s1 + $0x138] sm:$0xff]
  %v115 = vld [vmem:[%s1 + $0x140] sm:$0xff]
  %v116 = vld [vmem:[%s1 + $0x148] sm:$0xff]
  %v117 = vld [vmem:[%s1 + $0x150] sm:$0xff]
  %v118 = vld [vmem:[%s1 + $0x158] sm:$0xff]
  %v119 = vld [vmem:[%s1 + $0x160] sm:$0xff]
  %v120 = vld [vmem:[%s1 + $0x168] sm:$0xff]
  %v121 = vld [vmem:[%s1 + $0x170] sm:$0xff]
  %v122 = vld [vmem:[%s1 + $0x178] sm:$0xff]
  %v123 = vld [vmem:[%s1 + $0x180] sm:$0xff]
  %v124 = vld [vmem:[%s1 + $0x188] sm:$0xff]
  %v125 = vld [vmem:[%s1 + $0x190] sm:$0xff]
  %v126 = vld [vmem:[%s1 + $0x198] sm:$0xff]
  %v127 = vld [vmem:[%s1 + $0x1a0] sm:$0xff]
  %v128 = vld [vmem:[%s1 + $0x1a8] sm:$0xff]
  %v129 = vld [vmem:[%s1 + $0x1b0] sm:$0xff]
  %v130 = vld [vmem:[%s1 + $0x1b8] sm:$0xff]
  %v131 = vld [vmem:[%s1 + $0x1c0] sm:$0xff]
  %v132 = vld [vmem:[%s1 + $0x1c8] sm:$0xff]
  %v133 = vld [vmem:[%s1 + $0x1d0] sm:$0xff]
  %v134 = vld [vmem:[%s1 + $0x1d8] sm:$0xff]
  %v135 = vld [vmem:[%s1 + $0x1e0] sm:$0xff]
  %v136 = vld [vmem:[%s1 + $0x1e8] sm:$0xff]
  %v137 = vld [vmem:[%s1 + $0x1f0] sm:$0xff]
  %v138 = vld [vmem:[%s1 + $0x1f8] sm:$0xff]
  %v139 = vld [vmem:[%s1 + $0x200] sm:$0xff]
  %v140 = vld [vmem:[%s1 + $0x208] sm:$0xff]
  %v141 = vld [vmem:[%s1 + $0x210] sm:$0xff]
  %v142 = vld [vmem:[%s1 + $0x218] sm:$0xff]
  %v143 = vld [vmem:[%s1 + $0x220] sm:$0xff]
  %v144 = vld [vmem:[%s1 + $0x228] sm:$0xff]
  %v145 = vld [vmem:[%s1 + $0x230] sm:$0xff]
  %v146 = vld [vmem:[%s1 + $0x238] sm:$0xff]
  %v147 = vld [vmem:[%s1 + $0x240] sm:$0xff]
  %v148 = vld [vmem:[%s1 + $0x248] sm:$0xff]
  %v149 = vld [vmem:[%s1 + $0x250] sm:$0xff]
  %v150 = vld [vmem:[%s1 + $0x258] sm:$0xff]
  %v151 = vld [vmem:[%s1 + $0x260] sm:$0xff]
  %v152 = vld [vmem:[%s1 + $0x268] sm:$0xff]
  %v153 = vld [vmem:[%s1 + $0x270] sm:$0xff]
  %v154 = vld [vmem:[%s1 + $0x278] sm:$0xff]
  %v155 = vld [vmem:[%s1 + $0x280] sm:$0xff]
  %v156 = vld [vmem:[%s1 + $0x288] sm:$0xff]
  %v157 = vld [vmem:[%s1 + $0x290] sm:$0xff]
  %v158 = vld [vmem:[%s1 + $0x298] sm:$0xff]
  %v159 = vld [vmem:[%s1 + $0x2a0] sm:$0xff]
  %v160 = vld [vmem:[%s1 + $0x2a8] sm:$0xff]
  %v161 = vld [vmem:[%s1 + $0x2b0] sm:$0xff]
  %v162 = vld [vmem:[%s1 + $0x2b8] sm:$0xff]
  %v163 = vld [vmem:[%s1 + $0x2c0] sm:$0xff]
  %v164 = vld [vmem:[%s1 + $0x2c8] sm:$0xff]
  %v165 = vld [vmem:[%s1 + $0x2d0] sm:$0xff]
  %v166 = vld [vmem:[%s1 + $0x2d8] sm:$0xff]
  %v167 = vld [vmem:[%s1 + $0x2e0] sm:$0xff]
  %v168 = vld [vmem:[%s1 + $0x2e8] sm:$0xff]
  %v169 = vld [vmem:[%s1 + $0x2f0] sm:$0xff]
  %v170 = vld [vmem:[%s1 + $0x2f8] sm:$0xff]
  %v171 = vld [vmem:[%s2] sm:$0x3]
  %v173 = vlaneseq
  %v174 = vshrl.u32 %v173, 7
  %v175 = vsub.s32 0, %v174
  %v176 = vrot.slane %v171, %v175
  %v177 = vlaneseq
  %v178 = vshrl.u32 %v177, 7
  %v179 = vsub.s32 1, %v178
  %v180 = vrot.slane %v171, %v179
  %v231 = vunpack.c.l.b16 %v27
  %v232 = vunpack.c.h.b16 %v27
  %v233 = vunpack.c.l.b16 %v28
  %v234 = vunpack.c.h.b16 %v28
  %v235 = vunpack.c.l.b16 %v29
  %v236 = vunpack.c.h.b16 %v29
  %v237 = vunpack.c.l.b16 %v30
  %v238 = vunpack.c.h.b16 %v30
  %v239 = vunpack.c.l.b16 %v31
  %v240 = vunpack.c.h.b16 %v31
  %v241 = vunpack.c.l.b16 %v32
  %v242 = vunpack.c.h.b16 %v32
  %v243 = vunpack.c.l.b16 %v33
  %v244 = vunpack.c.h.b16 %v33
  %v245 = vunpack.c.l.b16 %v34
  %v246 = vunpack.c.h.b16 %v34
  %v247 = vunpack.c.l.b16 %v35
  %v248 = vunpack.c.h.b16 %v35
  %v249 = vunpack.c.l.b16 %v36
  %v250 = vunpack.c.h.b16 %v36
  %v251 = vunpack.c.l.b16 %v37
  %v252 = vunpack.c.h.b16 %v37
  %v253 = vunpack.c.l.b16 %v38
  %v254 = vunpack.c.h.b16 %v38
  %v255 = vunpack.c.l.b16 %v39
  %v256 = vunpack.c.h.b16 %v39
  %v257 = vunpack.c.l.b16 %v40
  %v258 = vunpack.c.h.b16 %v40
  %v259 = vunpack.c.l.b16 %v41
  %v260 = vunpack.c.h.b16 %v41
  %v261 = vunpack.c.l.b16 %v42
  %v262 = vunpack.c.h.b16 %v42
  %v263 = vunpack.c.l.b16 %v43
  %v264 = vunpack.c.h.b16 %v43
  %v265 = vunpack.c.l.b16 %v44
  %v266 = vunpack.c.h.b16 %v44
  %v267 = vunpack.c.l.b16 %v45
  %v268 = vunpack.c.h.b16 %v45
  %v269 = vunpack.c.l.b16 %v46
  %v270 = vunpack.c.h.b16 %v46
  %v271 = vunpack.c.l.b16 %v47
  %v272 = vunpack.c.h.b16 %v47
  %v273 = vunpack.c.l.b16 %v48
  %v274 = vunpack.c.h.b16 %v48
  %v275 = vunpack.c.l.b16 %v49
  %v276 = vunpack.c.h.b16 %v49
  %v277 = vunpack.c.l.b16 %v50
  %v278 = vunpack.c.h.b16 %v50
  %v279 = vunpack.c.l.b16 %v51
  %v280 = vunpack.c.h.b16 %v51
  %v281 = vunpack.c.l.b16 %v52
  %v282 = vunpack.c.h.b16 %v52
  %v283 = vunpack.c.l.b16 %v53
  %v284 = vunpack.c.h.b16 %v53
  %v285 = vunpack.c.l.b16 %v54
  %v286 = vunpack.c.h.b16 %v54
  %v287 = vunpack.c.l.b16 %v55
  %v288 = vunpack.c.h.b16 %v55
  %v289 = vunpack.c.l.b16 %v56
  %v290 = vunpack.c.h.b16 %v56
  %v291 = vunpack.c.l.b16 %v57
  %v292 = vunpack.c.h.b16 %v57
  %v293 = vunpack.c.l.b16 %v58
  %v294 = vunpack.c.h.b16 %v58
  %v295 = vunpack.c.l.b16 %v59
  %v296 = vunpack.c.h.b16 %v59
  %v297 = vunpack.c.l.b16 %v60
  %v298 = vunpack.c.h.b16 %v60
  %v299 = vunpack.c.l.b16 %v61
  %v300 = vunpack.c.h.b16 %v61
  %v301 = vunpack.c.l.b16 %v62
  %v302 = vunpack.c.h.b16 %v62
  %v303 = vunpack.c.l.b16 %v63
  %v304 = vunpack.c.h.b16 %v63
  %v305 = vunpack.c.l.b16 %v64
  %v306 = vunpack.c.h.b16 %v64
  %v307 = vunpack.c.l.b16 %v65
  %v308 = vunpack.c.h.b16 %v65
  %v309 = vunpack.c.l.b16 %v66
  %v310 = vunpack.c.h.b16 %v66
  %v311 = vunpack.c.l.b16 %v67
  %v312 = vunpack.c.h.b16 %v67
  %v313 = vunpack.c.l.b16 %v68
  %v314 = vunpack.c.h.b16 %v68
  %v315 = vunpack.c.l.b16 %v69
  %v316 = vunpack.c.h.b16 %v69
  %v317 = vunpack.c.l.b16 %v70
  %v318 = vunpack.c.h.b16 %v70
  %v319 = vunpack.c.l.b16 %v71
  %v320 = vunpack.c.h.b16 %v71
  %v321 = vunpack.c.l.b16 %v72
  %v322 = vunpack.c.h.b16 %v72
  %v323 = vunpack.c.l.b16 %v73
  %v324 = vunpack.c.h.b16 %v73
  %v325 = vunpack.c.l.b16 %v74
  %v326 = vunpack.c.h.b16 %v74
  %v327 = vpack.c.b16 %v237, %v231
  %v328 = vpack.c.b16 %v238, %v232
  %v329 = vpack.c.b16 %v239, %v233
  %v330 = vpack.c.b16 %v240, %v234
  %v331 = vpack.c.b16 %v241, %v235
  %v332 = vpack.c.b16 %v242, %v236
  %v333 = vpack.c.b16 %v249, %v243
  %v334 = vpack.c.b16 %v250, %v244
  %v335 = vpack.c.b16 %v251, %v245
  %v336 = vpack.c.b16 %v252, %v246
  %v337 = vpack.c.b16 %v253, %v247
  %v338 = vpack.c.b16 %v254, %v248
  %v339 = vpack.c.b16 %v261, %v255
  %v340 = vpack.c.b16 %v262, %v256
  %v341 = vpack.c.b16 %v263, %v257
  %v342 = vpack.c.b16 %v264, %v258
  %v343 = vpack.c.b16 %v265, %v259
  %v344 = vpack.c.b16 %v266, %v260
  %v345 = vpack.c.b16 %v273, %v267
  %v346 = vpack.c.b16 %v274, %v268
  %v347 = vpack.c.b16 %v275, %v269
  %v348 = vpack.c.b16 %v276, %v270
  %v349 = vpack.c.b16 %v277, %v271
  %v350 = vpack.c.b16 %v278, %v272
  %v351 = vpack.c.b16 %v285, %v279
  %v352 = vpack.c.b16 %v286, %v280
  %v353 = vpack.c.b16 %v287, %v281
  %v354 = vpack.c.b16 %v288, %v282
  %v355 = vpack.c.b16 %v289, %v283
  %v356 = vpack.c.b16 %v290, %v284
  %v357 = vpack.c.b16 %v297, %v291
  %v358 = vpack.c.b16 %v298, %v292
  %v359 = vpack.c.b16 %v299, %v293
  %v360 = vpack.c.b16 %v300, %v294
  %v361 = vpack.c.b16 %v301, %v295
  %v362 = vpack.c.b16 %v302, %v296
  %v363 = vpack.c.b16 %v309, %v303
  %v364 = vpack.c.b16 %v310, %v304
  %v365 = vpack.c.b16 %v311, %v305
  %v366 = vpack.c.b16 %v312, %v306
  %v367 = vpack.c.b16 %v313, %v307
  %v368 = vpack.c.b16 %v314, %v308
  %v369 = vpack.c.b16 %v321, %v315
  %v370 = vpack.c.b16 %v322, %v316
  %v371 = vpack.c.b16 %v323, %v317
  %v372 = vpack.c.b16 %v324, %v318
  %v373 = vpack.c.b16 %v325, %v319
  %v374 = vpack.c.b16 %v326, %v320
  %v519 = vunpack.c.l.b16 %v75
  %v520 = vunpack.c.h.b16 %v75
  %v521 = vunpack.c.l.b16 %v76
  %v522 = vunpack.c.h.b16 %v76
  %v523 = vunpack.c.l.b16 %v77
  %v524 = vunpack.c.h.b16 %v77
  %v525 = vunpack.c.l.b16 %v78
  %v526 = vunpack.c.h.b16 %v78
  %v527 = vunpack.c.l.b16 %v79
  %v528 = vunpack.c.h.b16 %v79
  %v529 = vunpack.c.l.b16 %v80
  %v530 = vunpack.c.h.b16 %v80
  %v531 = vunpack.c.l.b16 %v81
  %v532 = vunpack.c.h.b16 %v81
  %v533 = vunpack.c.l.b16 %v82
  %v534 = vunpack.c.h.b16 %v82
  %v535 = vunpack.c.l.b16 %v83
  %v536 = vunpack.c.h.b16 %v83
  %v537 = vunpack.c.l.b16 %v84
  %v538 = vunpack.c.h.b16 %v84
  %v539 = vunpack.c.l.b16 %v85
  %v540 = vunpack.c.h.b16 %v85
  %v541 = vunpack.c.l.b16 %v86
  %v542 = vunpack.c.h.b16 %v86
  %v543 = vunpack.c.l.b16 %v87
  %v544 = vunpack.c.h.b16 %v87
  %v545 = vunpack.c.l.b16 %v88
  %v546 = vunpack.c.h.b16 %v88
  %v547 = vunpack.c.l.b16 %v89
  %v548 = vunpack.c.h.b16 %v89
  %v549 = vunpack.c.l.b16 %v90
  %v550 = vunpack.c.h.b16 %v90
  %v551 = vunpack.c.l.b16 %v91
  %v552 = vunpack.c.h.b16 %v91
  %v553 = vunpack.c.l.b16 %v92
  %v554 = vunpack.c.h.b16 %v92
  %v555 = vunpack.c.l.b16 %v93
  %v556 = vunpack.c.h.b16 %v93
  %v557 = vunpack.c.l.b16 %v94
  %v558 = vunpack.c.h.b16 %v94
  %v559 = vunpack.c.l.b16 %v95
  %v560 = vunpack.c.h.b16 %v95
  %v561 = vunpack.c.l.b16 %v96
  %v562 = vunpack.c.h.b16 %v96
  %v563 = vunpack.c.l.b16 %v97
  %v564 = vunpack.c.h.b16 %v97
  %v565 = vunpack.c.l.b16 %v98
  %v566 = vunpack.c.h.b16 %v98
  %v567 = vunpack.c.l.b16 %v99
  %v568 = vunpack.c.h.b16 %v99
  %v569 = vunpack.c.l.b16 %v100
  %v570 = vunpack.c.h.b16 %v100
  %v571 = vunpack.c.l.b16 %v101
  %v572 = vunpack.c.h.b16 %v101
  %v573 = vunpack.c.l.b16 %v102
  %v574 = vunpack.c.h.b16 %v102
  %v575 = vunpack.c.l.b16 %v103
  %v576 = vunpack.c.h.b16 %v103
  %v577 = vunpack.c.l.b16 %v104
  %v578 = vunpack.c.h.b16 %v104
  %v579 = vunpack.c.l.b16 %v105
  %v580 = vunpack.c.h.b16 %v105
  %v581 = vunpack.c.l.b16 %v106
  %v582 = vunpack.c.h.b16 %v106
  %v583 = vunpack.c.l.b16 %v107
  %v584 = vunpack.c.h.b16 %v107
  %v585 = vunpack.c.l.b16 %v108
  %v586 = vunpack.c.h.b16 %v108
  %v587 = vunpack.c.l.b16 %v109
  %v588 = vunpack.c.h.b16 %v109
  %v589 = vunpack.c.l.b16 %v110
  %v590 = vunpack.c.h.b16 %v110
  %v591 = vunpack.c.l.b16 %v111
  %v592 = vunpack.c.h.b16 %v111
  %v593 = vunpack.c.l.b16 %v112
  %v594 = vunpack.c.h.b16 %v112
  %v595 = vunpack.c.l.b16 %v113
  %v596 = vunpack.c.h.b16 %v113
  %v597 = vunpack.c.l.b16 %v114
  %v598 = vunpack.c.h.b16 %v114
  %v599 = vunpack.c.l.b16 %v115
  %v600 = vunpack.c.h.b16 %v115
  %v601 = vunpack.c.l.b16 %v116
  %v602 = vunpack.c.h.b16 %v116
  %v603 = vunpack.c.l.b16 %v117
  %v604 = vunpack.c.h.b16 %v117
  %v605 = vunpack.c.l.b16 %v118
  %v606 = vunpack.c.h.b16 %v118
  %v607 = vunpack.c.l.b16 %v119
  %v608 = vunpack.c.h.b16 %v119
  %v609 = vunpack.c.l.b16 %v120
  %v610 = vunpack.c.h.b16 %v120
  %v611 = vunpack.c.l.b16 %v121
  %v612 = vunpack.c.h.b16 %v121
  %v613 = vunpack.c.l.b16 %v122
  %v614 = vunpack.c.h.b16 %v122
  %v615 = vunpack.c.l.b16 %v123
  %v616 = vunpack.c.h.b16 %v123
  %v617 = vunpack.c.l.b16 %v124
  %v618 = vunpack.c.h.b16 %v124
  %v619 = vunpack.c.l.b16 %v125
  %v620 = vunpack.c.h.b16 %v125
  %v621 = vunpack.c.l.b16 %v126
  %v622 = vunpack.c.h.b16 %v126
  %v623 = vunpack.c.l.b16 %v127
  %v624 = vunpack.c.h.b16 %v127
  %v625 = vunpack.c.l.b16 %v128
  %v626 = vunpack.c.h.b16 %v128
  %v627 = vunpack.c.l.b16 %v129
  %v628 = vunpack.c.h.b16 %v129
  %v629 = vunpack.c.l.b16 %v130
  %v630 = vunpack.c.h.b16 %v130
  %v631 = vunpack.c.l.b16 %v131
  %v632 = vunpack.c.h.b16 %v131
  %v633 = vunpack.c.l.b16 %v132
  %v634 = vunpack.c.h.b16 %v132
  %v635 = vunpack.c.l.b16 %v133
  %v636 = vunpack.c.h.b16 %v133
  %v637 = vunpack.c.l.b16 %v134
  %v638 = vunpack.c.h.b16 %v134
  %v639 = vunpack.c.l.b16 %v135
  %v640 = vunpack.c.h.b16 %v135
  %v641 = vunpack.c.l.b16 %v136
  %v642 = vunpack.c.h.b16 %v136
  %v643 = vunpack.c.l.b16 %v137
  %v644 = vunpack.c.h.b16 %v137
  %v645 = vunpack.c.l.b16 %v138
  %v646 = vunpack.c.h.b16 %v138
  %v647 = vunpack.c.l.b16 %v139
  %v648 = vunpack.c.h.b16 %v139
  %v649 = vunpack.c.l.b16 %v140
  %v650 = vunpack.c.h.b16 %v140
  %v651 = vunpack.c.l.b16 %v141
  %v652 = vunpack.c.h.b16 %v141
  %v653 = vunpack.c.l.b16 %v142
  %v654 = vunpack.c.h.b16 %v142
  %v655 = vunpack.c.l.b16 %v143
  %v656 = vunpack.c.h.b16 %v143
  %v657 = vunpack.c.l.b16 %v144
  %v658 = vunpack.c.h.b16 %v144
  %v659 = vunpack.c.l.b16 %v145
  %v660 = vunpack.c.h.b16 %v145
  %v661 = vunpack.c.l.b16 %v146
  %v662 = vunpack.c.h.b16 %v146
  %v663 = vunpack.c.l.b16 %v147
  %v664 = vunpack.c.h.b16 %v147
  %v665 = vunpack.c.l.b16 %v148
  %v666 = vunpack.c.h.b16 %v148
  %v667 = vunpack.c.l.b16 %v149
  %v668 = vunpack.c.h.b16 %v149
  %v669 = vunpack.c.l.b16 %v150
  %v670 = vunpack.c.h.b16 %v150
  %v671 = vunpack.c.l.b16 %v151
  %v672 = vunpack.c.h.b16 %v151
  %v673 = vunpack.c.l.b16 %v152
  %v674 = vunpack.c.h.b16 %v152
  %v675 = vunpack.c.l.b16 %v153
  %v676 = vunpack.c.h.b16 %v153
  %v677 = vunpack.c.l.b16 %v154
  %v678 = vunpack.c.h.b16 %v154
  %v679 = vunpack.c.l.b16 %v155
  %v680 = vunpack.c.h.b16 %v155
  %v681 = vunpack.c.l.b16 %v156
  %v682 = vunpack.c.h.b16 %v156
  %v683 = vunpack.c.l.b16 %v157
  %v684 = vunpack.c.h.b16 %v157
  %v685 = vunpack.c.l.b16 %v158
  %v686 = vunpack.c.h.b16 %v158
  %v687 = vunpack.c.l.b16 %v159
  %v688 = vunpack.c.h.b16 %v159
  %v689 = vunpack.c.l.b16 %v160
  %v690 = vunpack.c.h.b16 %v160
  %v691 = vunpack.c.l.b16 %v161
  %v692 = vunpack.c.h.b16 %v161
  %v693 = vunpack.c.l.b16 %v162
  %v694 = vunpack.c.h.b16 %v162
  %v695 = vunpack.c.l.b16 %v163
  %v696 = vunpack.c.h.b16 %v163
  %v697 = vunpack.c.l.b16 %v164
  %v698 = vunpack.c.h.b16 %v164
  %v699 = vunpack.c.l.b16 %v165
  %v700 = vunpack.c.h.b16 %v165
  %v701 = vunpack.c.l.b16 %v166
  %v702 = vunpack.c.h.b16 %v166
  %v703 = vunpack.c.l.b16 %v167
  %v704 = vunpack.c.h.b16 %v167
  %v705 = vunpack.c.l.b16 %v168
  %v706 = vunpack.c.h.b16 %v168
  %v707 = vunpack.c.l.b16 %v169
  %v708 = vunpack.c.h.b16 %v169
  %v709 = vunpack.c.l.b16 %v170
  %v710 = vunpack.c.h.b16 %v170
  %v711 = vpack.c.b16 %v521, %v519
  %v712 = vpack.c.b16 %v522, %v520
  %v713 = vpack.c.b16 %v525, %v523
  %v714 = vpack.c.b16 %v526, %v524
  %v715 = vpack.c.b16 %v529, %v527
  %v716 = vpack.c.b16 %v530, %v528
  %v717 = vpack.c.b16 %v533, %v531
  %v718 = vpack.c.b16 %v534, %v532
  %v719 = vpack.c.b16 %v537, %v535
  %v720 = vpack.c.b16 %v538, %v536
  %v721 = vpack.c.b16 %v541, %v539
  %v722 = vpack.c.b16 %v542, %v540
  %v723 = vpack.c.b16 %v545, %v543
  %v724 = vpack.c.b16 %v546, %v544
  %v725 = vpack.c.b16 %v549, %v547
  %v726 = vpack.c.b16 %v550, %v548
  %v727 = vpack.c.b16 %v553, %v551
  %v728 = vpack.c.b16 %v554, %v552
  %v729 = vpack.c.b16 %v557, %v555
  %v730 = vpack.c.b16 %v558, %v556
  %v731 = vpack.c.b16 %v561, %v559
  %v732 = vpack.c.b16 %v562, %v560
  %v733 = vpack.c.b16 %v565, %v563
  %v734 = vpack.c.b16 %v566, %v564
  %v735 = vpack.c.b16 %v569, %v567
  %v736 = vpack.c.b16 %v570, %v568
  %v737 = vpack.c.b16 %v573, %v571
  %v738 = vpack.c.b16 %v574, %v572
  %v739 = vpack.c.b16 %v577, %v575
  %v740 = vpack.c.b16 %v578, %v576
  %v741 = vpack.c.b16 %v581, %v579
  %v742 = vpack.c.b16 %v582, %v580
  %v743 = vpack.c.b16 %v585, %v583
  %v744 = vpack.c.b16 %v586, %v584
  %v745 = vpack.c.b16 %v589, %v587
  %v746 = vpack.c.b16 %v590, %v588
  %v747 = vpack.c.b16 %v593, %v591
  %v748 = vpack.c.b16 %v594, %v592
  %v749 = vpack.c.b16 %v597, %v595
  %v750 = vpack.c.b16 %v598, %v596
  %v751 = vpack.c.b16 %v601, %v599
  %v752 = vpack.c.b16 %v602, %v600
  %v753 = vpack.c.b16 %v605, %v603
  %v754 = vpack.c.b16 %v606, %v604
  %v755 = vpack.c.b16 %v609, %v607
  %v756 = vpack.c.b16 %v610, %v608
  %v757 = vpack.c.b16 %v613, %v611
  %v758 = vpack.c.b16 %v614, %v612
  %v759 = vpack.c.b16 %v617, %v615
  %v760 = vpack.c.b16 %v618, %v616
  %v761 = vpack.c.b16 %v621, %v619
  %v762 = vpack.c.b16 %v622, %v620
  %v763 = vpack.c.b16 %v625, %v623
  %v764 = vpack.c.b16 %v626, %v624
  %v765 = vpack.c.b16 %v629, %v627
  %v766 = vpack.c.b16 %v630, %v628
  %v767 = vpack.c.b16 %v633, %v631
  %v768 = vpack.c.b16 %v634, %v632
  %v769 = vpack.c.b16 %v637, %v635
  %v770 = vpack.c.b16 %v638, %v636
  %v771 = vpack.c.b16 %v641, %v639
  %v772 = vpack.c.b16 %v642, %v640
  %v773 = vpack.c.b16 %v645, %v643
  %v774 = vpack.c.b16 %v646, %v644
  %v775 = vpack.c.b16 %v649, %v647
  %v776 = vpack.c.b16 %v650, %v648
  %v777 = vpack.c.b16 %v653, %v651
  %v778 = vpack.c.b16 %v654, %v652
  %v779 = vpack.c.b16 %v657, %v655
  %v780 = vpack.c.b16 %v658, %v656
  %v781 = vpack.c.b16 %v661, %v659
  %v782 = vpack.c.b16 %v662, %v660
  %v783 = vpack.c.b16 %v665, %v663
  %v784 = vpack.c.b16 %v666, %v664
  %v785 = vpack.c.b16 %v669, %v667
  %v786 = vpack.c.b16 %v670, %v668
  %v787 = vpack.c.b16 %v673, %v671
  %v788 = vpack.c.b16 %v674, %v672
  %v789 = vpack.c.b16 %v677, %v675
  %v790 = vpack.c.b16 %v678, %v676
  %v791 = vpack.c.b16 %v681, %v679
  %v792 = vpack.c.b16 %v682, %v680
  %v793 = vpack.c.b16 %v685, %v683
  %v794 = vpack.c.b16 %v686, %v684
  %v795 = vpack.c.b16 %v689, %v687
  %v796 = vpack.c.b16 %v690, %v688
  %v797 = vpack.c.b16 %v693, %v691
  %v798 = vpack.c.b16 %v694, %v692
  %v799 = vpack.c.b16 %v697, %v695
  %v800 = vpack.c.b16 %v698, %v696
  %v801 = vpack.c.b16 %v701, %v699
  %v802 = vpack.c.b16 %v702, %v700
  %v803 = vpack.c.b16 %v705, %v703
  %v804 = vpack.c.b16 %v706, %v704
  %v805 = vpack.c.b16 %v709, %v707
  %v806 = vpack.c.b16 %v710, %v708
  %903 = vmatprep.subr.bf16.mxu0 %v726
  %904 = vmatpush1.bf16.msra.mxu0 %v725
  %905 = vmatprep.subr.bf16.mxu0 %v724
  %906 = vmatpush1.bf16.msra.mxu0 %v723
  %907 = vmatprep.subr.bf16.mxu0 %v722
  %908 = vmatpush1.bf16.msra.mxu0 %v721
  %909 = vmatprep.subr.bf16.mxu0 %v720
  %910 = vmatpush1.bf16.msra.mxu0 %v719
  %911 = vmatprep.subr.bf16.mxu0 %v718
  %912 = vmatpush1.bf16.msra.mxu0 %v717
  %913 = vmatprep.subr.bf16.mxu0 %v716
  %914 = vmatpush1.bf16.msra.mxu0 %v715
  %915 = vmatprep.subr.bf16.mxu0 %v714
  %916 = vmatpush1.bf16.msra.mxu0 %v713
  %917 = vmatprep.subr.bf16.mxu0 %v712
  %918 = vmatpush1.bf16.msra.mxu0 %v711
  %919 = vmatprep.subr.bf16.mxu0 %v742
  %920 = vmatpush2.bf16.msra.mxu0 %v741
  %921 = vmatprep.subr.bf16.mxu0 %v740
  %922 = vmatpush2.bf16.msra.mxu0 %v739
  %923 = vmatprep.subr.bf16.mxu0 %v738
  %924 = vmatpush2.bf16.msra.mxu0 %v737
  %925 = vmatprep.subr.bf16.mxu0 %v736
  %926 = vmatpush2.bf16.msra.mxu0 %v735
  %927 = vmatprep.subr.bf16.mxu0 %v734
  %928 = vmatpush2.bf16.msra.mxu0 %v733
  %929 = vmatprep.subr.bf16.mxu0 %v732
  %930 = vmatpush2.bf16.msra.mxu0 %v731
  %931 = vmatprep.subr.bf16.mxu0 %v730
  %932 = vmatpush2.bf16.msra.mxu0 %v729
  %933 = vmatprep.subr.bf16.mxu0 %v728
  %934 = vmatpush2.bf16.msra.mxu0 %v727
  %935 = vmatprep.mubr.bf16.mxu0 %v328
  %936 = vmatmul.mubr.bf16.gmra.mxu0 %v327
  %v937 = vpop.f32.mrf.mxu0
  %v938 = vadd.f32 %v176, %v937
  %v939 = vpop.f32.mrf.mxu0
  %v940 = vadd.f32 %v180, %v939
  %v941 = vpop.f32.mrf.mxu0
  %v942 = vadd.f32 %v176, %v941
  %v943 = vpop.f32.mrf.mxu0
  %v944 = vadd.f32 %v180, %v943
  %945 = vmatprep.mubr.bf16.mxu0 %v334
  %946 = vmatmul.mubr.bf16.gmra.mxu0 %v333
  %v947 = vpop.f32.mrf.mxu0
  %v948 = vadd.f32 %v176, %v947
  %v949 = vpop.f32.mrf.mxu0
  %v950 = vadd.f32 %v180, %v949
  %v951 = vpop.f32.mrf.mxu0
  %v952 = vadd.f32 %v176, %v951
  %v953 = vpop.f32.mrf.mxu0
  %v954 = vadd.f32 %v180, %v953
  %955 = vmatprep.mubr.bf16.mxu0 %v340
  %956 = vmatmul.mubr.bf16.gmra.mxu0 %v339
  %v957 = vpop.f32.mrf.mxu0
  %v958 = vadd.f32 %v176, %v957
  %v959 = vpop.f32.mrf.mxu0
  %v960 = vadd.f32 %v180, %v959
  %v961 = vpop.f32.mrf.mxu0
  %v962 = vadd.f32 %v176, %v961
  %v963 = vpop.f32.mrf.mxu0
  %v964 = vadd.f32 %v180, %v963
  %965 = vmatprep.mubr.bf16.mxu0 %v346
  %966 = vmatmul.mubr.bf16.gmra.mxu0 %v345
  %v967 = vpop.f32.mrf.mxu0
  %v968 = vadd.f32 %v176, %v967
  %v969 = vpop.f32.mrf.mxu0
  %v970 = vadd.f32 %v180, %v969
  %v971 = vpop.f32.mrf.mxu0
  %v972 = vadd.f32 %v176, %v971
  %v973 = vpop.f32.mrf.mxu0
  %v974 = vadd.f32 %v180, %v973
  %975 = vmatprep.mubr.bf16.mxu0 %v352
  %976 = vmatmul.mubr.bf16.gmra.mxu0 %v351
  %v977 = vpop.f32.mrf.mxu0
  %v978 = vadd.f32 %v176, %v977
  %v979 = vpop.f32.mrf.mxu0
  %v980 = vadd.f32 %v180, %v979
  %v981 = vpop.f32.mrf.mxu0
  %v982 = vadd.f32 %v176, %v981
  %v983 = vpop.f32.mrf.mxu0
  %v984 = vadd.f32 %v180, %v983
  %985 = vmatprep.mubr.bf16.mxu0 %v358
  %986 = vmatmul.mubr.bf16.gmra.mxu0 %v357
  %v987 = vpop.f32.mrf.mxu0
  %v988 = vadd.f32 %v176, %v987
  %v989 = vpop.f32.mrf.mxu0
  %v990 = vadd.f32 %v180, %v989
  %v991 = vpop.f32.mrf.mxu0
  %v992 = vadd.f32 %v176, %v991
  %v993 = vpop.f32.mrf.mxu0
  %v994 = vadd.f32 %v180, %v993
  %995 = vmatprep.mubr.bf16.mxu0 %v364
  %996 = vmatmul.mubr.bf16.gmra.mxu0 %v363
  %v997 = vpop.f32.mrf.mxu0
  %v998 = vadd.f32 %v176, %v997
  %v999 = vpop.f32.mrf.mxu0
  %v1000 = vadd.f32 %v180, %v999
  %v1001 = vpop.f32.mrf.mxu0
  %v1002 = vadd.f32 %v176, %v1001
  %v1003 = vpop.f32.mrf.mxu0
  %v1004 = vadd.f32 %v180, %v1003
  %1005 = vmatprep.mubr.bf16.mxu0 %v370
  %1006 = vmatmul.mubr.bf16.gmra.mxu0 %v369
  %v1007 = vpop.f32.mrf.mxu0
  %v1008 = vadd.f32 %v176, %v1007
  %v1009 = vpop.f32.mrf.mxu0
  %v1010 = vadd.f32 %v180, %v1009
  %v1011 = vpop.f32.mrf.mxu0
  %v1012 = vadd.f32 %v176, %v1011
  %v1013 = vpop.f32.mrf.mxu0
  %v1014 = vadd.f32 %v180, %v1013
  %1015 = vdwg.mxu0
  %1016 = vmatprep.subr.bf16.mxu0 %v758
  %1017 = vmatpush1.bf16.msra.mxu0 %v757
  %1018 = vmatprep.subr.bf16.mxu0 %v756
  %1019 = vmatpush1.bf16.msra.mxu0 %v755
  %1020 = vmatprep.subr.bf16.mxu0 %v754
  %1021 = vmatpush1.bf16.msra.mxu0 %v753
  %1022 = vmatprep.subr.bf16.mxu0 %v752
  %1023 = vmatpush1.bf16.msra.mxu0 %v751
  %1024 = vmatprep.subr.bf16.mxu0 %v750
  %1025 = vmatpush1.bf16.msra.mxu0 %v749
  %1026 = vmatprep.subr.bf16.mxu0 %v748
  %1027 = vmatpush1.bf16.msra.mxu0 %v747
  %1028 = vmatprep.subr.bf16.mxu0 %v746
  %1029 = vmatpush1.bf16.msra.mxu0 %v745
  %1030 = vmatprep.subr.bf16.mxu0 %v744
  %1031 = vmatpush1.bf16.msra.mxu0 %v743
  %1032 = vmatprep.subr.bf16.mxu0 %v774
  %1033 = vmatpush2.bf16.msra.mxu0 %v773
  %1034 = vmatprep.subr.bf16.mxu0 %v772
  %1035 = vmatpush2.bf16.msra.mxu0 %v771
  %1036 = vmatprep.subr.bf16.mxu0 %v770
  %1037 = vmatpush2.bf16.msra.mxu0 %v769
  %1038 = vmatprep.subr.bf16.mxu0 %v768
  %1039 = vmatpush2.bf16.msra.mxu0 %v767
  %1040 = vmatprep.subr.bf16.mxu0 %v766
  %1041 = vmatpush2.bf16.msra.mxu0 %v765
  %1042 = vmatprep.subr.bf16.mxu0 %v764
  %1043 = vmatpush2.bf16.msra.mxu0 %v763
  %1044 = vmatprep.subr.bf16.mxu0 %v762
  %1045 = vmatpush2.bf16.msra.mxu0 %v761
  %1046 = vmatprep.subr.bf16.mxu0 %v760
  %1047 = vmatpush2.bf16.msra.mxu0 %v759
  %1048 = vmatprep.mubr.bf16.mxu0 %v330
  %1049 = vmatmul.mubr.bf16.gmra.mxu0 %v329
  %v1050 = vpop.f32.mrf.mxu0
  %v1051 = vadd.f32 %v938, %v1050
  %v1052 = vpop.f32.mrf.mxu0
  %v1053 = vadd.f32 %v940, %v1052
  %v1054 = vpop.f32.mrf.mxu0
  %v1055 = vadd.f32 %v942, %v1054
  %v1056 = vpop.f32.mrf.mxu0
  %v1057 = vadd.f32 %v944, %v1056
  %1058 = vmatprep.mubr.bf16.mxu0 %v336
  %1059 = vmatmul.mubr.bf16.gmra.mxu0 %v335
  %v1060 = vpop.f32.mrf.mxu0
  %v1061 = vadd.f32 %v948, %v1060
  %v1062 = vpop.f32.mrf.mxu0
  %v1063 = vadd.f32 %v950, %v1062
  %v1064 = vpop.f32.mrf.mxu0
  %v1065 = vadd.f32 %v952, %v1064
  %v1066 = vpop.f32.mrf.mxu0
  %v1067 = vadd.f32 %v954, %v1066
  %1068 = vmatprep.mubr.bf16.mxu0 %v342
  %1069 = vmatmul.mubr.bf16.gmra.mxu0 %v341
  %v1070 = vpop.f32.mrf.mxu0
  %v1071 = vadd.f32 %v958, %v1070
  %v1072 = vpop.f32.mrf.mxu0
  %v1073 = vadd.f32 %v960, %v1072
  %v1074 = vpop.f32.mrf.mxu0
  %v1075 = vadd.f32 %v962, %v1074
  %v1076 = vpop.f32.mrf.mxu0
  %v1077 = vadd.f32 %v964, %v1076
  %1078 = vmatprep.mubr.bf16.mxu0 %v348
  %1079 = vmatmul.mubr.bf16.gmra.mxu0 %v347
  %v1080 = vpop.f32.mrf.mxu0
  %v1081 = vadd.f32 %v968, %v1080
  %v1082 = vpop.f32.mrf.mxu0
  %v1083 = vadd.f32 %v970, %v1082
  %v1084 = vpop.f32.mrf.mxu0
  %v1085 = vadd.f32 %v972, %v1084
  %v1086 = vpop.f32.mrf.mxu0
  %v1087 = vadd.f32 %v974, %v1086
  %1088 = vmatprep.mubr.bf16.mxu0 %v354
  %1089 = vmatmul.mubr.bf16.gmra.mxu0 %v353
  %v1090 = vpop.f32.mrf.mxu0
  %v1091 = vadd.f32 %v978, %v1090
  %v1092 = vpop.f32.mrf.mxu0
  %v1093 = vadd.f32 %v980, %v1092
  %v1094 = vpop.f32.mrf.mxu0
  %v1095 = vadd.f32 %v982, %v1094
  %v1096 = vpop.f32.mrf.mxu0
  %v1097 = vadd.f32 %v984, %v1096
  %1098 = vmatprep.mubr.bf16.mxu0 %v360
  %1099 = vmatmul.mubr.bf16.gmra.mxu0 %v359
  %v1100 = vpop.f32.mrf.mxu0
  %v1101 = vadd.f32 %v988, %v1100
  %v1102 = vpop.f32.mrf.mxu0
  %v1103 = vadd.f32 %v990, %v1102
  %v1104 = vpop.f32.mrf.mxu0
  %v1105 = vadd.f32 %v992, %v1104
  %v1106 = vpop.f32.mrf.mxu0
  %v1107 = vadd.f32 %v994, %v1106
  %1108 = vmatprep.mubr.bf16.mxu0 %v366
  %1109 = vmatmul.mubr.bf16.gmra.mxu0 %v365
  %v1110 = vpop.f32.mrf.mxu0
  %v1111 = vadd.f32 %v998, %v1110
  %v1112 = vpop.f32.mrf.mxu0
  %v1113 = vadd.f32 %v1000, %v1112
  %v1114 = vpop.f32.mrf.mxu0
  %v1115 = vadd.f32 %v1002, %v1114
  %v1116 = vpop.f32.mrf.mxu0
  %v1117 = vadd.f32 %v1004, %v1116
  %1118 = vmatprep.mubr.bf16.mxu0 %v372
  %1119 = vmatmul.mubr.bf16.gmra.mxu0 %v371
  %v1120 = vpop.f32.mrf.mxu0
  %v1121 = vadd.f32 %v1008, %v1120
  %v1122 = vpop.f32.mrf.mxu0
  %v1123 = vadd.f32 %v1010, %v1122
  %v1124 = vpop.f32.mrf.mxu0
  %v1125 = vadd.f32 %v1012, %v1124
  %v1126 = vpop.f32.mrf.mxu0
  %v1127 = vadd.f32 %v1014, %v1126
  %1128 = vdwg.mxu0
  %1129 = vmatprep.subr.bf16.mxu0 %v790
  %1130 = vmatpush1.bf16.msra.mxu0 %v789
  %1131 = vmatprep.subr.bf16.mxu0 %v788
  %1132 = vmatpush1.bf16.msra.mxu0 %v787
  %1133 = vmatprep.subr.bf16.mxu0 %v786
  %1134 = vmatpush1.bf16.msra.mxu0 %v785
  %1135 = vmatprep.subr.bf16.mxu0 %v784
  %1136 = vmatpush1.bf16.msra.mxu0 %v783
  %1137 = vmatprep.subr.bf16.mxu0 %v782
  %1138 = vmatpush1.bf16.msra.mxu0 %v781
  %1139 = vmatprep.subr.bf16.mxu0 %v780
  %1140 = vmatpush1.bf16.msra.mxu0 %v779
  %1141 = vmatprep.subr.bf16.mxu0 %v778
  %1142 = vmatpush1.bf16.msra.mxu0 %v777
  %1143 = vmatprep.subr.bf16.mxu0 %v776
  %1144 = vmatpush1.bf16.msra.mxu0 %v775
  %1145 = vmatprep.subr.bf16.mxu0 %v806
  %1146 = vmatpush2.bf16.msra.mxu0 %v805
  %1147 = vmatprep.subr.bf16.mxu0 %v804
  %1148 = vmatpush2.bf16.msra.mxu0 %v803
  %1149 = vmatprep.subr.bf16.mxu0 %v802
  %1150 = vmatpush2.bf16.msra.mxu0 %v801
  %1151 = vmatprep.subr.bf16.mxu0 %v800
  %1152 = vmatpush2.bf16.msra.mxu0 %v799
  %1153 = vmatprep.subr.bf16.mxu0 %v798
  %1154 = vmatpush2.bf16.msra.mxu0 %v797
  %1155 = vmatprep.subr.bf16.mxu0 %v796
  %1156 = vmatpush2.bf16.msra.mxu0 %v795
  %1157 = vmatprep.subr.bf16.mxu0 %v794
  %1158 = vmatpush2.bf16.msra.mxu0 %v793
  %1159 = vmatprep.subr.bf16.mxu0 %v792
  %1160 = vmatpush2.bf16.msra.mxu0 %v791
  %1161 = vmatprep.mubr.bf16.mxu0 %v332
  %1162 = vmatmul.mubr.bf16.gmra.mxu0 %v331
  %v1163 = vpop.f32.mrf.mxu0
  %v1164 = vadd.f32 %v1051, %v1163
  %v1165 = vpop.f32.mrf.mxu0
  %v1166 = vadd.f32 %v1053, %v1165
  %v1167 = vpop.f32.mrf.mxu0
  %v1168 = vadd.f32 %v1055, %v1167
  %v1169 = vpop.f32.mrf.mxu0
  %v1170 = vadd.f32 %v1057, %v1169
  %1171 = vmatprep.mubr.bf16.mxu0 %v338
  %1172 = vmatmul.mubr.bf16.gmra.mxu0 %v337
  %v1173 = vpop.f32.mrf.mxu0
  %v1174 = vadd.f32 %v1061, %v1173
  %v1175 = vpop.f32.mrf.mxu0
  %v1176 = vadd.f32 %v1063, %v1175
  %v1177 = vpop.f32.mrf.mxu0
  %v1178 = vadd.f32 %v1065, %v1177
  %v1179 = vpop.f32.mrf.mxu0
  %v1180 = vadd.f32 %v1067, %v1179
  %1181 = vmatprep.mubr.bf16.mxu0 %v344
  %1182 = vmatmul.mubr.bf16.gmra.mxu0 %v343
  %v1183 = vpop.f32.mrf.mxu0
  %v1184 = vadd.f32 %v1071, %v1183
  %v1185 = vpop.f32.mrf.mxu0
  %v1186 = vadd.f32 %v1073, %v1185
  %v1187 = vpop.f32.mrf.mxu0
  %v1188 = vadd.f32 %v1075, %v1187
  %v1189 = vpop.f32.mrf.mxu0
  %v1190 = vadd.f32 %v1077, %v1189
  %1191 = vmatprep.mubr.bf16.mxu0 %v350
  %1192 = vmatmul.mubr.bf16.gmra.mxu0 %v349
  %v1193 = vpop.f32.mrf.mxu0
  %v1194 = vadd.f32 %v1081, %v1193
  %v1195 = vpop.f32.mrf.mxu0
  %v1196 = vadd.f32 %v1083, %v1195
  %v1197 = vpop.f32.mrf.mxu0
  %v1198 = vadd.f32 %v1085, %v1197
  %v1199 = vpop.f32.mrf.mxu0
  %v1200 = vadd.f32 %v1087, %v1199
  %1201 = vmatprep.mubr.bf16.mxu0 %v356
  %1202 = vmatmul.mubr.bf16.gmra.mxu0 %v355
  %v1203 = vpop.f32.mrf.mxu0
  %v1204 = vadd.f32 %v1091, %v1203
  %v1205 = vpop.f32.mrf.mxu0
  %v1206 = vadd.f32 %v1093, %v1205
  %v1207 = vpop.f32.mrf.mxu0
  %v1208 = vadd.f32 %v1095, %v1207
  %v1209 = vpop.f32.mrf.mxu0
  %v1210 = vadd.f32 %v1097, %v1209
  %1211 = vmatprep.mubr.bf16.mxu0 %v362
  %1212 = vmatmul.mubr.bf16.gmra.mxu0 %v361
  %v1213 = vpop.f32.mrf.mxu0
  %v1214 = vadd.f32 %v1101, %v1213
  %v1215 = vpop.f32.mrf.mxu0
  %v1216 = vadd.f32 %v1103, %v1215
  %v1217 = vpop.f32.mrf.mxu0
  %v1218 = vadd.f32 %v1105, %v1217
  %v1219 = vpop.f32.mrf.mxu0
  %v1220 = vadd.f32 %v1107, %v1219
  %1221 = vmatprep.mubr.bf16.mxu0 %v368
  %1222 = vmatmul.mubr.bf16.gmra.mxu0 %v367
  %v1223 = vpop.f32.mrf.mxu0
  %v1224 = vadd.f32 %v1111, %v1223
  %v1225 = vpop.f32.mrf.mxu0
  %v1226 = vadd.f32 %v1113, %v1225
  %v1227 = vpop.f32.mrf.mxu0
  %v1228 = vadd.f32 %v1115, %v1227
  %v1229 = vpop.f32.mrf.mxu0
  %v1230 = vadd.f32 %v1117, %v1229
  %1231 = vmatprep.mubr.bf16.mxu0 %v374
  %1232 = vmatmul.mubr.bf16.gmra.mxu0 %v373
  %v1233 = vpop.f32.mrf.mxu0
  %v1234 = vadd.f32 %v1121, %v1233
  %v1235 = vpop.f32.mrf.mxu0
  %v1236 = vadd.f32 %v1123, %v1235
  %v1237 = vpop.f32.mrf.mxu0
  %v1238 = vadd.f32 %v1125, %v1237
  %v1239 = vpop.f32.mrf.mxu0
  %v1240 = vadd.f32 %v1127, %v1239
  %1241 = vdwg.mxu0
  %v1242 = vtanh.pop %v1164
  %v1243 = vtanh.pop %v1166
  %v1244 = vtanh.pop %v1168
  %v1245 = vtanh.pop %v1170
  %v1246 = vtanh.pop %v1174
  %v1247 = vtanh.pop %v1176
  %v1248 = vtanh.pop %v1178
  %v1249 = vtanh.pop %v1180
  %v1250 = vtanh.pop %v1184
  %v1251 = vtanh.pop %v1186
  %v1252 = vtanh.pop %v1188
  %v1253 = vtanh.pop %v1190
  %v1254 = vtanh.pop %v1194
  %v1255 = vtanh.pop %v1196
  %v1256 = vtanh.pop %v1198
  %v1257 = vtanh.pop %v1200
  %v1258 = vtanh.pop %v1204
  %v1259 = vtanh.pop %v1206
  %v1260 = vtanh.pop %v1208
  %v1261 = vtanh.pop %v1210
  %v1262 = vtanh.pop %v1214
  %v1263 = vtanh.pop %v1216
  %v1264 = vtanh.pop %v1218
  %v1265 = vtanh.pop %v1220
  %v1266 = vtanh.pop %v1224
  %v1267 = vtanh.pop %v1226
  %v1268 = vtanh.pop %v1228
  %v1269 = vtanh.pop %v1230
  %v1270 = vtanh.pop %v1234
  %v1271 = vtanh.pop %v1236
  %v1272 = vtanh.pop %v1238
  %v1273 = vtanh.pop %v1240
  %v1274 = vld [vmem:[%s3] sm:$0xff]
  %v1275 = vld [vmem:[%s3 + $0x8] sm:$0xff]
  %v1276 = vld [vmem:[%s3 + $0x10] sm:$0xff]
  %v1277 = vld [vmem:[%s3 + $0x18] sm:$0xff]
  %v1278 = vld [vmem:[%s3 + $0x20] sm:$0xff]
  %v1279 = vld [vmem:[%s3 + $0x28] sm:$0xff]
  %v1280 = vld [vmem:[%s3 + $0x30] sm:$0xff]
  %v1281 = vld [vmem:[%s3 + $0x38] sm:$0xff]
  %v1282 = vld [vmem:[%s3 + $0x40] sm:$0xff]
  %v1283 = vld [vmem:[%s3 + $0x48] sm:$0xff]
  %v1284 = vld [vmem:[%s3 + $0x50] sm:$0xff]
  %v1285 = vld [vmem:[%s3 + $0x58] sm:$0xff]
  %v1286 = vld [vmem:[%s3 + $0x60] sm:$0xff]
  %v1287 = vld [vmem:[%s3 + $0x68] sm:$0xff]
  %v1288 = vld [vmem:[%s3 + $0x70] sm:$0xff]
  %v1289 = vld [vmem:[%s3 + $0x78] sm:$0xff]
  %v1290 = vld [vmem:[%s3 + $0x80] sm:$0xff]
  %v1291 = vld [vmem:[%s3 + $0x88] sm:$0xff]
  %v1292 = vld [vmem:[%s3 + $0x90] sm:$0xff]
  %v1293 = vld [vmem:[%s3 + $0x98] sm:$0xff]
  %v1294 = vld [vmem:[%s3 + $0xa0] sm:$0xff]
  %v1295 = vld [vmem:[%s3 + $0xa8] sm:$0xff]
  %v1296 = vld [vmem:[%s3 + $0xb0] sm:$0xff]
  %v1297 = vld [vmem:[%s3 + $0xb8] sm:$0xff]
  %v1298 = vld [vmem:[%s3 + $0xc0] sm:$0xff]
  %v1299 = vld [vmem:[%s3 + $0xc8] sm:$0xff]
  %v1300 = vld [vmem:[%s3 + $0xd0] sm:$0xff]
  %v1301 = vld [vmem:[%s3 + $0xd8] sm:$0xff]
  %v1302 = vld [vmem:[%s3 + $0xe0] sm:$0xff]
  %v1303 = vld [vmem:[%s3 + $0xe8] sm:$0xff]
  %v1304 = vld [vmem:[%s3 + $0xf0] sm:$0xff]
  %v1305 = vld [vmem:[%s3 + $0xf8] sm:$0xff]
  %v1306 = vld [vmem:[%s3 + $0x100] sm:$0xff]
  %v1307 = vld [vmem:[%s3 + $0x108] sm:$0xff]
  %v1308 = vld [vmem:[%s3 + $0x110] sm:$0xff]
  %v1309 = vld [vmem:[%s3 + $0x118] sm:$0xff]
  %v1310 = vld [vmem:[%s3 + $0x120] sm:$0xff]
  %v1311 = vld [vmem:[%s3 + $0x128] sm:$0xff]
  %v1312 = vld [vmem:[%s3 + $0x130] sm:$0xff]
  %v1313 = vld [vmem:[%s3 + $0x138] sm:$0xff]
  %v1314 = vld [vmem:[%s3 + $0x140] sm:$0xff]
  %v1315 = vld [vmem:[%s3 + $0x148] sm:$0xff]
  %v1316 = vld [vmem:[%s3 + $0x150] sm:$0xff]
  %v1317 = vld [vmem:[%s3 + $0x158] sm:$0xff]
  %v1318 = vld [vmem:[%s3 + $0x160] sm:$0xff]
  %v1319 = vld [vmem:[%s3 + $0x168] sm:$0xff]
  %v1320 = vld [vmem:[%s3 + $0x170] sm:$0xff]
  %v1321 = vld [vmem:[%s3 + $0x178] sm:$0xff]
  %v1322 = vld [vmem:[%s3 + $0x180] sm:$0xff]
  %v1323 = vld [vmem:[%s3 + $0x188] sm:$0xff]
  %v1324 = vld [vmem:[%s3 + $0x190] sm:$0xff]
  %v1325 = vld [vmem:[%s3 + $0x198] sm:$0xff]
  %v1326 = vld [vmem:[%s3 + $0x1a0] sm:$0xff]
  %v1327 = vld [vmem:[%s3 + $0x1a8] sm:$0xff]
  %v1328 = vld [vmem:[%s3 + $0x1b0] sm:$0xff]
  %v1329 = vld [vmem:[%s3 + $0x1b8] sm:$0xff]
  %v1330 = vld [vmem:[%s3 + $0x1c0] sm:$0xff]
  %v1331 = vld [vmem:[%s3 + $0x1c8] sm:$0xff]
  %v1332 = vld [vmem:[%s3 + $0x1d0] sm:$0xff]
  %v1333 = vld [vmem:[%s3 + $0x1d8] sm:$0xff]
  %v1334 = vld [vmem:[%s3 + $0x1e0] sm:$0xff]
  %v1335 = vld [vmem:[%s3 + $0x1e8] sm:$0xff]
  %v1336 = vld [vmem:[%s3 + $0x1f0] sm:$0xff]
  %v1337 = vld [vmem:[%s3 + $0x1f8] sm:$0xff]
  %v1338 = vld [vmem:[%s3 + $0x200] sm:$0xff]
  %v1339 = vld [vmem:[%s3 + $0x208] sm:$0xff]
  %v1340 = vld [vmem:[%s3 + $0x210] sm:$0xff]
  %v1341 = vld [vmem:[%s3 + $0x218] sm:$0xff]
  %v1342 = vld [vmem:[%s3 + $0x220] sm:$0xff]
  %v1343 = vld [vmem:[%s3 + $0x228] sm:$0xff]
  %v1344 = vld [vmem:[%s3 + $0x230] sm:$0xff]
  %v1345 = vld [vmem:[%s3 + $0x238] sm:$0xff]
  %v1346 = vld [vmem:[%s3 + $0x240] sm:$0xff]
  %v1347 = vld [vmem:[%s3 + $0x248] sm:$0xff]
  %v1348 = vld [vmem:[%s3 + $0x250] sm:$0xff]
  %v1349 = vld [vmem:[%s3 + $0x258] sm:$0xff]
  %v1350 = vld [vmem:[%s3 + $0x260] sm:$0xff]
  %v1351 = vld [vmem:[%s3 + $0x268] sm:$0xff]
  %v1352 = vld [vmem:[%s3 + $0x270] sm:$0xff]
  %v1353 = vld [vmem:[%s3 + $0x278] sm:$0xff]
  %v1354 = vld [vmem:[%s3 + $0x280] sm:$0xff]
  %v1355 = vld [vmem:[%s3 + $0x288] sm:$0xff]
  %v1356 = vld [vmem:[%s3 + $0x290] sm:$0xff]
  %v1357 = vld [vmem:[%s3 + $0x298] sm:$0xff]
  %v1358 = vld [vmem:[%s3 + $0x2a0] sm:$0xff]
  %v1359 = vld [vmem:[%s3 + $0x2a8] sm:$0xff]
  %v1360 = vld [vmem:[%s3 + $0x2b0] sm:$0xff]
  %v1361 = vld [vmem:[%s3 + $0x2b8] sm:$0xff]
  %v1362 = vld [vmem:[%s3 + $0x2c0] sm:$0xff]
  %v1363 = vld [vmem:[%s3 + $0x2c8] sm:$0xff]
  %v1364 = vld [vmem:[%s3 + $0x2d0] sm:$0xff]
  %v1365 = vld [vmem:[%s3 + $0x2d8] sm:$0xff]
  %v1366 = vld [vmem:[%s3 + $0x2e0] sm:$0xff]
  %v1367 = vld [vmem:[%s3 + $0x2e8] sm:$0xff]
  %v1368 = vld [vmem:[%s3 + $0x2f0] sm:$0xff]
  %v1369 = vld [vmem:[%s3 + $0x2f8] sm:$0xff]
  %v1370 = vld [vmem:[%s4] sm:$0x3]
  %v1372 = vlaneseq
  %v1373 = vshrl.u32 %v1372, 7
  %v1374 = vsub.s32 0, %v1373
  %v1375 = vrot.slane %v1370, %v1374
  %v1376 = vlaneseq
  %v1377 = vshrl.u32 %v1376, 7
  %v1378 = vsub.s32 1, %v1377
  %v1379 = vrot.slane %v1370, %v1378
  %v1478 = vunpack.c.l.b16 %v1274
  %v1479 = vunpack.c.h.b16 %v1274
  %v1480 = vunpack.c.l.b16 %v1275
  %v1481 = vunpack.c.h.b16 %v1275
  %v1482 = vunpack.c.l.b16 %v1276
  %v1483 = vunpack.c.h.b16 %v1276
  %v1484 = vunpack.c.l.b16 %v1277
  %v1485 = vunpack.c.h.b16 %v1277
  %v1486 = vunpack.c.l.b16 %v1278
  %v1487 = vunpack.c.h.b16 %v1278
  %v1488 = vunpack.c.l.b16 %v1279
  %v1489 = vunpack.c.h.b16 %v1279
  %v1490 = vunpack.c.l.b16 %v1280
  %v1491 = vunpack.c.h.b16 %v1280
  %v1492 = vunpack.c.l.b16 %v1281
  %v1493 = vunpack.c.h.b16 %v1281
  %v1494 = vunpack.c.l.b16 %v1282
  %v1495 = vunpack.c.h.b16 %v1282
  %v1496 = vunpack.c.l.b16 %v1283
  %v1497 = vunpack.c.h.b16 %v1283
  %v1498 = vunpack.c.l.b16 %v1284
  %v1499 = vunpack.c.h.b16 %v1284
  %v1500 = vunpack.c.l.b16 %v1285
  %v1501 = vunpack.c.h.b16 %v1285
  %v1502 = vunpack.c.l.b16 %v1286
  %v1503 = vunpack.c.h.b16 %v1286
  %v1504 = vunpack.c.l.b16 %v1287
  %v1505 = vunpack.c.h.b16 %v1287
  %v1506 = vunpack.c.l.b16 %v1288
  %v1507 = vunpack.c.h.b16 %v1288
  %v1508 = vunpack.c.l.b16 %v1289
  %v1509 = vunpack.c.h.b16 %v1289
  %v1510 = vunpack.c.l.b16 %v1290
  %v1511 = vunpack.c.h.b16 %v1290
  %v1512 = vunpack.c.l.b16 %v1291
  %v1513 = vunpack.c.h.b16 %v1291
  %v1514 = vunpack.c.l.b16 %v1292
  %v1515 = vunpack.c.h.b16 %v1292
  %v1516 = vunpack.c.l.b16 %v1293
  %v1517 = vunpack.c.h.b16 %v1293
  %v1518 = vunpack.c.l.b16 %v1294
  %v1519 = vunpack.c.h.b16 %v1294
  %v1520 = vunpack.c.l.b16 %v1295
  %v1521 = vunpack.c.h.b16 %v1295
  %v1522 = vunpack.c.l.b16 %v1296
  %v1523 = vunpack.c.h.b16 %v1296
  %v1524 = vunpack.c.l.b16 %v1297
  %v1525 = vunpack.c.h.b16 %v1297
  %v1526 = vunpack.c.l.b16 %v1298
  %v1527 = vunpack.c.h.b16 %v1298
  %v1528 = vunpack.c.l.b16 %v1299
  %v1529 = vunpack.c.h.b16 %v1299
  %v1530 = vunpack.c.l.b16 %v1300
  %v1531 = vunpack.c.h.b16 %v1300
  %v1532 = vunpack.c.l.b16 %v1301
  %v1533 = vunpack.c.h.b16 %v1301
  %v1534 = vunpack.c.l.b16 %v1302
  %v1535 = vunpack.c.h.b16 %v1302
  %v1536 = vunpack.c.l.b16 %v1303
  %v1537 = vunpack.c.h.b16 %v1303
  %v1538 = vunpack.c.l.b16 %v1304
  %v1539 = vunpack.c.h.b16 %v1304
  %v1540 = vunpack.c.l.b16 %v1305
  %v1541 = vunpack.c.h.b16 %v1305
  %v1542 = vunpack.c.l.b16 %v1306
  %v1543 = vunpack.c.h.b16 %v1306
  %v1544 = vunpack.c.l.b16 %v1307
  %v1545 = vunpack.c.h.b16 %v1307
  %v1546 = vunpack.c.l.b16 %v1308
  %v1547 = vunpack.c.h.b16 %v1308
  %v1548 = vunpack.c.l.b16 %v1309
  %v1549 = vunpack.c.h.b16 %v1309
  %v1550 = vunpack.c.l.b16 %v1310
  %v1551 = vunpack.c.h.b16 %v1310
  %v1552 = vunpack.c.l.b16 %v1311
  %v1553 = vunpack.c.h.b16 %v1311
  %v1554 = vunpack.c.l.b16 %v1312
  %v1555 = vunpack.c.h.b16 %v1312
  %v1556 = vunpack.c.l.b16 %v1313
  %v1557 = vunpack.c.h.b16 %v1313
  %v1558 = vunpack.c.l.b16 %v1314
  %v1559 = vunpack.c.h.b16 %v1314
  %v1560 = vunpack.c.l.b16 %v1315
  %v1561 = vunpack.c.h.b16 %v1315
  %v1562 = vunpack.c.l.b16 %v1316
  %v1563 = vunpack.c.h.b16 %v1316
  %v1564 = vunpack.c.l.b16 %v1317
  %v1565 = vunpack.c.h.b16 %v1317
  %v1566 = vunpack.c.l.b16 %v1318
  %v1567 = vunpack.c.h.b16 %v1318
  %v1568 = vunpack.c.l.b16 %v1319
  %v1569 = vunpack.c.h.b16 %v1319
  %v1570 = vunpack.c.l.b16 %v1320
  %v1571 = vunpack.c.h.b16 %v1320
  %v1572 = vunpack.c.l.b16 %v1321
  %v1573 = vunpack.c.h.b16 %v1321
  %v1574 = vunpack.c.l.b16 %v1322
  %v1575 = vunpack.c.h.b16 %v1322
  %v1576 = vunpack.c.l.b16 %v1323
  %v1577 = vunpack.c.h.b16 %v1323
  %v1578 = vunpack.c.l.b16 %v1324
  %v1579 = vunpack.c.h.b16 %v1324
  %v1580 = vunpack.c.l.b16 %v1325
  %v1581 = vunpack.c.h.b16 %v1325
  %v1582 = vunpack.c.l.b16 %v1326
  %v1583 = vunpack.c.h.b16 %v1326
  %v1584 = vunpack.c.l.b16 %v1327
  %v1585 = vunpack.c.h.b16 %v1327
  %v1586 = vunpack.c.l.b16 %v1328
  %v1587 = vunpack.c.h.b16 %v1328
  %v1588 = vunpack.c.l.b16 %v1329
  %v1589 = vunpack.c.h.b16 %v1329
  %v1590 = vunpack.c.l.b16 %v1330
  %v1591 = vunpack.c.h.b16 %v1330
  %v1592 = vunpack.c.l.b16 %v1331
  %v1593 = vunpack.c.h.b16 %v1331
  %v1594 = vunpack.c.l.b16 %v1332
  %v1595 = vunpack.c.h.b16 %v1332
  %v1596 = vunpack.c.l.b16 %v1333
  %v1597 = vunpack.c.h.b16 %v1333
  %v1598 = vunpack.c.l.b16 %v1334
  %v1599 = vunpack.c.h.b16 %v1334
  %v1600 = vunpack.c.l.b16 %v1335
  %v1601 = vunpack.c.h.b16 %v1335
  %v1602 = vunpack.c.l.b16 %v1336
  %v1603 = vunpack.c.h.b16 %v1336
  %v1604 = vunpack.c.l.b16 %v1337
  %v1605 = vunpack.c.h.b16 %v1337
  %v1606 = vunpack.c.l.b16 %v1338
  %v1607 = vunpack.c.h.b16 %v1338
  %v1608 = vunpack.c.l.b16 %v1339
  %v1609 = vunpack.c.h.b16 %v1339
  %v1610 = vunpack.c.l.b16 %v1340
  %v1611 = vunpack.c.h.b16 %v1340
  %v1612 = vunpack.c.l.b16 %v1341
  %v1613 = vunpack.c.h.b16 %v1341
  %v1614 = vunpack.c.l.b16 %v1342
  %v1615 = vunpack.c.h.b16 %v1342
  %v1616 = vunpack.c.l.b16 %v1343
  %v1617 = vunpack.c.h.b16 %v1343
  %v1618 = vunpack.c.l.b16 %v1344
  %v1619 = vunpack.c.h.b16 %v1344
  %v1620 = vunpack.c.l.b16 %v1345
  %v1621 = vunpack.c.h.b16 %v1345
  %v1622 = vunpack.c.l.b16 %v1346
  %v1623 = vunpack.c.h.b16 %v1346
  %v1624 = vunpack.c.l.b16 %v1347
  %v1625 = vunpack.c.h.b16 %v1347
  %v1626 = vunpack.c.l.b16 %v1348
  %v1627 = vunpack.c.h.b16 %v1348
  %v1628 = vunpack.c.l.b16 %v1349
  %v1629 = vunpack.c.h.b16 %v1349
  %v1630 = vunpack.c.l.b16 %v1350
  %v1631 = vunpack.c.h.b16 %v1350
  %v1632 = vunpack.c.l.b16 %v1351
  %v1633 = vunpack.c.h.b16 %v1351
  %v1634 = vunpack.c.l.b16 %v1352
  %v1635 = vunpack.c.h.b16 %v1352
  %v1636 = vunpack.c.l.b16 %v1353
  %v1637 = vunpack.c.h.b16 %v1353
  %v1638 = vunpack.c.l.b16 %v1354
  %v1639 = vunpack.c.h.b16 %v1354
  %v1640 = vunpack.c.l.b16 %v1355
  %v1641 = vunpack.c.h.b16 %v1355
  %v1642 = vunpack.c.l.b16 %v1356
  %v1643 = vunpack.c.h.b16 %v1356
  %v1644 = vunpack.c.l.b16 %v1357
  %v1645 = vunpack.c.h.b16 %v1357
  %v1646 = vunpack.c.l.b16 %v1358
  %v1647 = vunpack.c.h.b16 %v1358
  %v1648 = vunpack.c.l.b16 %v1359
  %v1649 = vunpack.c.h.b16 %v1359
  %v1650 = vunpack.c.l.b16 %v1360
  %v1651 = vunpack.c.h.b16 %v1360
  %v1652 = vunpack.c.l.b16 %v1361
  %v1653 = vunpack.c.h.b16 %v1361
  %v1654 = vunpack.c.l.b16 %v1362
  %v1655 = vunpack.c.h.b16 %v1362
  %v1656 = vunpack.c.l.b16 %v1363
  %v1657 = vunpack.c.h.b16 %v1363
  %v1658 = vunpack.c.l.b16 %v1364
  %v1659 = vunpack.c.h.b16 %v1364
  %v1660 = vunpack.c.l.b16 %v1365
  %v1661 = vunpack.c.h.b16 %v1365
  %v1662 = vunpack.c.l.b16 %v1366
  %v1663 = vunpack.c.h.b16 %v1366
  %v1664 = vunpack.c.l.b16 %v1367
  %v1665 = vunpack.c.h.b16 %v1367
  %v1666 = vunpack.c.l.b16 %v1368
  %v1667 = vunpack.c.h.b16 %v1368
  %v1668 = vunpack.c.l.b16 %v1369
  %v1669 = vunpack.c.h.b16 %v1369
  %v1670 = vpack.c.b16 %v1480, %v1478
  %v1671 = vpack.c.b16 %v1481, %v1479
  %v1672 = vpack.c.b16 %v1484, %v1482
  %v1673 = vpack.c.b16 %v1485, %v1483
  %v1674 = vpack.c.b16 %v1488, %v1486
  %v1675 = vpack.c.b16 %v1489, %v1487
  %v1676 = vpack.c.b16 %v1492, %v1490
  %v1677 = vpack.c.b16 %v1493, %v1491
  %v1678 = vpack.c.b16 %v1496, %v1494
  %v1679 = vpack.c.b16 %v1497, %v1495
  %v1680 = vpack.c.b16 %v1500, %v1498
  %v1681 = vpack.c.b16 %v1501, %v1499
  %v1682 = vpack.c.b16 %v1504, %v1502
  %v1683 = vpack.c.b16 %v1505, %v1503
  %v1684 = vpack.c.b16 %v1508, %v1506
  %v1685 = vpack.c.b16 %v1509, %v1507
  %v1686 = vpack.c.b16 %v1512, %v1510
  %v1687 = vpack.c.b16 %v1513, %v1511
  %v1688 = vpack.c.b16 %v1516, %v1514
  %v1689 = vpack.c.b16 %v1517, %v1515
  %v1690 = vpack.c.b16 %v1520, %v1518
  %v1691 = vpack.c.b16 %v1521, %v1519
  %v1692 = vpack.c.b16 %v1524, %v1522
  %v1693 = vpack.c.b16 %v1525, %v1523
  %v1694 = vpack.c.b16 %v1528, %v1526
  %v1695 = vpack.c.b16 %v1529, %v1527
  %v1696 = vpack.c.b16 %v1532, %v1530
  %v1697 = vpack.c.b16 %v1533, %v1531
  %v1698 = vpack.c.b16 %v1536, %v1534
  %v1699 = vpack.c.b16 %v1537, %v1535
  %v1700 = vpack.c.b16 %v1540, %v1538
  %v1701 = vpack.c.b16 %v1541, %v1539
  %v1702 = vpack.c.b16 %v1544, %v1542
  %v1703 = vpack.c.b16 %v1545, %v1543
  %v1704 = vpack.c.b16 %v1548, %v1546
  %v1705 = vpack.c.b16 %v1549, %v1547
  %v1706 = vpack.c.b16 %v1552, %v1550
  %v1707 = vpack.c.b16 %v1553, %v1551
  %v1708 = vpack.c.b16 %v1556, %v1554
  %v1709 = vpack.c.b16 %v1557, %v1555
  %v1710 = vpack.c.b16 %v1560, %v1558
  %v1711 = vpack.c.b16 %v1561, %v1559
  %v1712 = vpack.c.b16 %v1564, %v1562
  %v1713 = vpack.c.b16 %v1565, %v1563
  %v1714 = vpack.c.b16 %v1568, %v1566
  %v1715 = vpack.c.b16 %v1569, %v1567
  %v1716 = vpack.c.b16 %v1572, %v1570
  %v1717 = vpack.c.b16 %v1573, %v1571
  %v1718 = vpack.c.b16 %v1576, %v1574
  %v1719 = vpack.c.b16 %v1577, %v1575
  %v1720 = vpack.c.b16 %v1580, %v1578
  %v1721 = vpack.c.b16 %v1581, %v1579
  %v1722 = vpack.c.b16 %v1584, %v1582
  %v1723 = vpack.c.b16 %v1585, %v1583
  %v1724 = vpack.c.b16 %v1588, %v1586
  %v1725 = vpack.c.b16 %v1589, %v1587
  %v1726 = vpack.c.b16 %v1592, %v1590
  %v1727 = vpack.c.b16 %v1593, %v1591
  %v1728 = vpack.c.b16 %v1596, %v1594
  %v1729 = vpack.c.b16 %v1597, %v1595
  %v1730 = vpack.c.b16 %v1600, %v1598
  %v1731 = vpack.c.b16 %v1601, %v1599
  %v1732 = vpack.c.b16 %v1604, %v1602
  %v1733 = vpack.c.b16 %v1605, %v1603
  %v1734 = vpack.c.b16 %v1608, %v1606
  %v1735 = vpack.c.b16 %v1609, %v1607
  %v1736 = vpack.c.b16 %v1612, %v1610
  %v1737 = vpack.c.b16 %v1613, %v1611
  %v1738 = vpack.c.b16 %v1616, %v1614
  %v1739 = vpack.c.b16 %v1617, %v1615
  %v1740 = vpack.c.b16 %v1620, %v1618
  %v1741 = vpack.c.b16 %v1621, %v1619
  %v1742 = vpack.c.b16 %v1624, %v1622
  %v1743 = vpack.c.b16 %v1625, %v1623
  %v1744 = vpack.c.b16 %v1628, %v1626
  %v1745 = vpack.c.b16 %v1629, %v1627
  %v1746 = vpack.c.b16 %v1632, %v1630
  %v1747 = vpack.c.b16 %v1633, %v1631
  %v1748 = vpack.c.b16 %v1636, %v1634
  %v1749 = vpack.c.b16 %v1637, %v1635
  %v1750 = vpack.c.b16 %v1640, %v1638
  %v1751 = vpack.c.b16 %v1641, %v1639
  %v1752 = vpack.c.b16 %v1644, %v1642
  %v1753 = vpack.c.b16 %v1645, %v1643
  %v1754 = vpack.c.b16 %v1648, %v1646
  %v1755 = vpack.c.b16 %v1649, %v1647
  %v1756 = vpack.c.b16 %v1652, %v1650
  %v1757 = vpack.c.b16 %v1653, %v1651
  %v1758 = vpack.c.b16 %v1656, %v1654
  %v1759 = vpack.c.b16 %v1657, %v1655
  %v1760 = vpack.c.b16 %v1660, %v1658
  %v1761 = vpack.c.b16 %v1661, %v1659
  %v1762 = vpack.c.b16 %v1664, %v1662
  %v1763 = vpack.c.b16 %v1665, %v1663
  %v1764 = vpack.c.b16 %v1668, %v1666
  %v1765 = vpack.c.b16 %v1669, %v1667
  %1862 = vmatprep.subr.bf16.mxu0 %v1685
  %1863 = vmatpush1.bf16.msra.mxu0 %v1684
  %1864 = vmatprep.subr.bf16.mxu0 %v1683
  %1865 = vmatpush1.bf16.msra.mxu0 %v1682
  %1866 = vmatprep.subr.bf16.mxu0 %v1681
  %1867 = vmatpush1.bf16.msra.mxu0 %v1680
  %1868 = vmatprep.subr.bf16.mxu0 %v1679
  %1869 = vmatpush1.bf16.msra.mxu0 %v1678
  %1870 = vmatprep.subr.bf16.mxu0 %v1677
  %1871 = vmatpush1.bf16.msra.mxu0 %v1676
  %1872 = vmatprep.subr.bf16.mxu0 %v1675
  %1873 = vmatpush1.bf16.msra.mxu0 %v1674
  %1874 = vmatprep.subr.bf16.mxu0 %v1673
  %1875 = vmatpush1.bf16.msra.mxu0 %v1672
  %1876 = vmatprep.subr.bf16.mxu0 %v1671
  %1877 = vmatpush1.bf16.msra.mxu0 %v1670
  %1878 = vmatprep.subr.bf16.mxu0 %v1701
  %1879 = vmatpush2.bf16.msra.mxu0 %v1700
  %1880 = vmatprep.subr.bf16.mxu0 %v1699
  %1881 = vmatpush2.bf16.msra.mxu0 %v1698
  %1882 = vmatprep.subr.bf16.mxu0 %v1697
  %1883 = vmatpush2.bf16.msra.mxu0 %v1696
  %1884 = vmatprep.subr.bf16.mxu0 %v1695
  %1885 = vmatpush2.bf16.msra.mxu0 %v1694
  %1886 = vmatprep.subr.bf16.mxu0 %v1693
  %1887 = vmatpush2.bf16.msra.mxu0 %v1692
  %1888 = vmatprep.subr.bf16.mxu0 %v1691
  %1889 = vmatpush2.bf16.msra.mxu0 %v1690
  %1890 = vmatprep.subr.bf16.mxu0 %v1689
  %1891 = vmatpush2.bf16.msra.mxu0 %v1688
  %1892 = vmatprep.subr.bf16.mxu0 %v1687
  %1893 = vmatpush2.bf16.msra.mxu0 %v1686
  %1894 = vmatprep.mubr.bf16.mxu0 %v328
  %1895 = vmatmul.mubr.bf16.gmra.mxu0 %v327
  %v1896 = vpop.f32.mrf.mxu0
  %v1897 = vadd.f32 %v1375, %v1896
  %v1898 = vpop.f32.mrf.mxu0
  %v1899 = vadd.f32 %v1379, %v1898
  %v1900 = vpop.f32.mrf.mxu0
  %v1901 = vadd.f32 %v1375, %v1900
  %v1902 = vpop.f32.mrf.mxu0
  %v1903 = vadd.f32 %v1379, %v1902
  %1904 = vmatprep.mubr.bf16.mxu0 %v334
  %1905 = vmatmul.mubr.bf16.gmra.mxu0 %v333
  %v1906 = vpop.f32.mrf.mxu0
  %v1907 = vadd.f32 %v1375, %v1906
  %v1908 = vpop.f32.mrf.mxu0
  %v1909 = vadd.f32 %v1379, %v1908
  %v1910 = vpop.f32.mrf.mxu0
  %v1911 = vadd.f32 %v1375, %v1910
  %v1912 = vpop.f32.mrf.mxu0
  %v1913 = vadd.f32 %v1379, %v1912
  %1914 = vmatprep.mubr.bf16.mxu0 %v340
  %1915 = vmatmul.mubr.bf16.gmra.mxu0 %v339
  %v1916 = vpop.f32.mrf.mxu0
  %v1917 = vadd.f32 %v1375, %v1916
  %v1918 = vpop.f32.mrf.mxu0
  %v1919 = vadd.f32 %v1379, %v1918
  %v1920 = vpop.f32.mrf.mxu0
  %v1921 = vadd.f32 %v1375, %v1920
  %v1922 = vpop.f32.mrf.mxu0
  %v1923 = vadd.f32 %v1379, %v1922
  %1924 = vmatprep.mubr.bf16.mxu0 %v346
  %1925 = vmatmul.mubr.bf16.gmra.mxu0 %v345
  %v1926 = vpop.f32.mrf.mxu0
  %v1927 = vadd.f32 %v1375, %v1926
  %v1928 = vpop.f32.mrf.mxu0
  %v1929 = vadd.f32 %v1379, %v1928
  %v1930 = vpop.f32.mrf.mxu0
  %v1931 = vadd.f32 %v1375, %v1930
  %v1932 = vpop.f32.mrf.mxu0
  %v1933 = vadd.f32 %v1379, %v1932
  %1934 = vmatprep.mubr.bf16.mxu0 %v352
  %1935 = vmatmul.mubr.bf16.gmra.mxu0 %v351
  %v1936 = vpop.f32.mrf.mxu0
  %v1937 = vadd.f32 %v1375, %v1936
  %v1938 = vpop.f32.mrf.mxu0
  %v1939 = vadd.f32 %v1379, %v1938
  %v1940 = vpop.f32.mrf.mxu0
  %v1941 = vadd.f32 %v1375, %v1940
  %v1942 = vpop.f32.mrf.mxu0
  %v1943 = vadd.f32 %v1379, %v1942
  %1944 = vmatprep.mubr.bf16.mxu0 %v358
  %1945 = vmatmul.mubr.bf16.gmra.mxu0 %v357
  %v1946 = vpop.f32.mrf.mxu0
  %v1947 = vadd.f32 %v1375, %v1946
  %v1948 = vpop.f32.mrf.mxu0
  %v1949 = vadd.f32 %v1379, %v1948
  %v1950 = vpop.f32.mrf.mxu0
  %v1951 = vadd.f32 %v1375, %v1950
  %v1952 = vpop.f32.mrf.mxu0
  %v1953 = vadd.f32 %v1379, %v1952
  %1954 = vmatprep.mubr.bf16.mxu0 %v364
  %1955 = vmatmul.mubr.bf16.gmra.mxu0 %v363
  %v1956 = vpop.f32.mrf.mxu0
  %v1957 = vadd.f32 %v1375, %v1956
  %v1958 = vpop.f32.mrf.mxu0
  %v1959 = vadd.f32 %v1379, %v1958
  %v1960 = vpop.f32.mrf.mxu0
  %v1961 = vadd.f32 %v1375, %v1960
  %v1962 = vpop.f32.mrf.mxu0
  %v1963 = vadd.f32 %v1379, %v1962
  %1964 = vmatprep.mubr.bf16.mxu0 %v370
  %1965 = vmatmul.mubr.bf16.gmra.mxu0 %v369
  %v1966 = vpop.f32.mrf.mxu0
  %v1967 = vadd.f32 %v1375, %v1966
  %v1968 = vpop.f32.mrf.mxu0
  %v1969 = vadd.f32 %v1379, %v1968
  %v1970 = vpop.f32.mrf.mxu0
  %v1971 = vadd.f32 %v1375, %v1970
  %v1972 = vpop.f32.mrf.mxu0
  %v1973 = vadd.f32 %v1379, %v1972
  %1974 = vdwg.mxu0
  %1975 = vmatprep.subr.bf16.mxu0 %v1717
  %1976 = vmatpush1.bf16.msra.mxu0 %v1716
  %1977 = vmatprep.subr.bf16.mxu0 %v1715
  %1978 = vmatpush1.bf16.msra.mxu0 %v1714
  %1979 = vmatprep.subr.bf16.mxu0 %v1713
  %1980 = vmatpush1.bf16.msra.mxu0 %v1712
  %1981 = vmatprep.subr.bf16.mxu0 %v1711
  %1982 = vmatpush1.bf16.msra.mxu0 %v1710
  %1983 = vmatprep.subr.bf16.mxu0 %v1709
  %1984 = vmatpush1.bf16.msra.mxu0 %v1708
  %1985 = vmatprep.subr.bf16.mxu0 %v1707
  %1986 = vmatpush1.bf16.msra.mxu0 %v1706
  %1987 = vmatprep.subr.bf16.mxu0 %v1705
  %1988 = vmatpush1.bf16.msra.mxu0 %v1704
  %1989 = vmatprep.subr.bf16.mxu0 %v1703
  %1990 = vmatpush1.bf16.msra.mxu0 %v1702
  %1991 = vmatprep.subr.bf16.mxu0 %v1733
  %1992 = vmatpush2.bf16.msra.mxu0 %v1732
  %1993 = vmatprep.subr.bf16.mxu0 %v1731
  %1994 = vmatpush2.bf16.msra.mxu0 %v1730
  %1995 = vmatprep.subr.bf16.mxu0 %v1729
  %1996 = vmatpush2.bf16.msra.mxu0 %v1728
  %1997 = vmatprep.subr.bf16.mxu0 %v1727
  %1998 = vmatpush2.bf16.msra.mxu0 %v1726
  %1999 = vmatprep.subr.bf16.mxu0 %v1725
  %2000 = vmatpush2.bf16.msra.mxu0 %v1724
  %2001 = vmatprep.subr.bf16.mxu0 %v1723
  %2002 = vmatpush2.bf16.msra.mxu0 %v1722
  %2003 = vmatprep.subr.bf16.mxu0 %v1721
  %2004 = vmatpush2.bf16.msra.mxu0 %v1720
  %2005 = vmatprep.subr.bf16.mxu0 %v1719
  %2006 = vmatpush2.bf16.msra.mxu0 %v1718
  %2007 = vmatprep.mubr.bf16.mxu0 %v330
  %2008 = vmatmul.mubr.bf16.gmra.mxu0 %v329
  %v2009 = vpop.f32.mrf.mxu0
  %v2010 = vadd.f32 %v1897, %v2009
  %v2011 = vpop.f32.mrf.mxu0
  %v2012 = vadd.f32 %v1899, %v2011
  %v2013 = vpop.f32.mrf.mxu0
  %v2014 = vadd.f32 %v1901, %v2013
  %v2015 = vpop.f32.mrf.mxu0
  %v2016 = vadd.f32 %v1903, %v2015
  %2017 = vmatprep.mubr.bf16.mxu0 %v336
  %2018 = vmatmul.mubr.bf16.gmra.mxu0 %v335
  %v2019 = vpop.f32.mrf.mxu0
  %v2020 = vadd.f32 %v1907, %v2019
  %v2021 = vpop.f32.mrf.mxu0
  %v2022 = vadd.f32 %v1909, %v2021
  %v2023 = vpop.f32.mrf.mxu0
  %v2024 = vadd.f32 %v1911, %v2023
  %v2025 = vpop.f32.mrf.mxu0
  %v2026 = vadd.f32 %v1913, %v2025
  %2027 = vmatprep.mubr.bf16.mxu0 %v342
  %2028 = vmatmul.mubr.bf16.gmra.mxu0 %v341
  %v2029 = vpop.f32.mrf.mxu0
  %v2030 = vadd.f32 %v1917, %v2029
  %v2031 = vpop.f32.mrf.mxu0
  %v2032 = vadd.f32 %v1919, %v2031
  %v2033 = vpop.f32.mrf.mxu0
  %v2034 = vadd.f32 %v1921, %v2033
  %v2035 = vpop.f32.mrf.mxu0
  %v2036 = vadd.f32 %v1923, %v2035
  %2037 = vmatprep.mubr.bf16.mxu0 %v348
  %2038 = vmatmul.mubr.bf16.gmra.mxu0 %v347
  %v2039 = vpop.f32.mrf.mxu0
  %v2040 = vadd.f32 %v1927, %v2039
  %v2041 = vpop.f32.mrf.mxu0
  %v2042 = vadd.f32 %v1929, %v2041
  %v2043 = vpop.f32.mrf.mxu0
  %v2044 = vadd.f32 %v1931, %v2043
  %v2045 = vpop.f32.mrf.mxu0
  %v2046 = vadd.f32 %v1933, %v2045
  %2047 = vmatprep.mubr.bf16.mxu0 %v354
  %2048 = vmatmul.mubr.bf16.gmra.mxu0 %v353
  %v2049 = vpop.f32.mrf.mxu0
  %v2050 = vadd.f32 %v1937, %v2049
  %v2051 = vpop.f32.mrf.mxu0
  %v2052 = vadd.f32 %v1939, %v2051
  %v2053 = vpop.f32.mrf.mxu0
  %v2054 = vadd.f32 %v1941, %v2053
  %v2055 = vpop.f32.mrf.mxu0
  %v2056 = vadd.f32 %v1943, %v2055
  %2057 = vmatprep.mubr.bf16.mxu0 %v360
  %2058 = vmatmul.mubr.bf16.gmra.mxu0 %v359
  %v2059 = vpop.f32.mrf.mxu0
  %v2060 = vadd.f32 %v1947, %v2059
  %v2061 = vpop.f32.mrf.mxu0
  %v2062 = vadd.f32 %v1949, %v2061
  %v2063 = vpop.f32.mrf.mxu0
  %v2064 = vadd.f32 %v1951, %v2063
  %v2065 = vpop.f32.mrf.mxu0
  %v2066 = vadd.f32 %v1953, %v2065
  %2067 = vmatprep.mubr.bf16.mxu0 %v366
  %2068 = vmatmul.mubr.bf16.gmra.mxu0 %v365
  %v2069 = vpop.f32.mrf.mxu0
  %v2070 = vadd.f32 %v1957, %v2069
  %v2071 = vpop.f32.mrf.mxu0
  %v2072 = vadd.f32 %v1959, %v2071
  %v2073 = vpop.f32.mrf.mxu0
  %v2074 = vadd.f32 %v1961, %v2073
  %v2075 = vpop.f32.mrf.mxu0
  %v2076 = vadd.f32 %v1963, %v2075
  %2077 = vmatprep.mubr.bf16.mxu0 %v372
  %2078 = vmatmul.mubr.bf16.gmra.mxu0 %v371
  %v2079 = vpop.f32.mrf.mxu0
  %v2080 = vadd.f32 %v1967, %v2079
  %v2081 = vpop.f32.mrf.mxu0
  %v2082 = vadd.f32 %v1969, %v2081
  %v2083 = vpop.f32.mrf.mxu0
  %v2084 = vadd.f32 %v1971, %v2083
  %v2085 = vpop.f32.mrf.mxu0
  %v2086 = vadd.f32 %v1973, %v2085
  %2087 = vdwg.mxu0
  %2088 = vmatprep.subr.bf16.mxu0 %v1749
  %2089 = vmatpush1.bf16.msra.mxu0 %v1748
  %2090 = vmatprep.subr.bf16.mxu0 %v1747
  %2091 = vmatpush1.bf16.msra.mxu0 %v1746
  %2092 = vmatprep.subr.bf16.mxu0 %v1745
  %2093 = vmatpush1.bf16.msra.mxu0 %v1744
  %2094 = vmatprep.subr.bf16.mxu0 %v1743
  %2095 = vmatpush1.bf16.msra.mxu0 %v1742
  %2096 = vmatprep.subr.bf16.mxu0 %v1741
  %2097 = vmatpush1.bf16.msra.mxu0 %v1740
  %2098 = vmatprep.subr.bf16.mxu0 %v1739
  %2099 = vmatpush1.bf16.msra.mxu0 %v1738
  %2100 = vmatprep.subr.bf16.mxu0 %v1737
  %2101 = vmatpush1.bf16.msra.mxu0 %v1736
  %2102 = vmatprep.subr.bf16.mxu0 %v1735
  %2103 = vmatpush1.bf16.msra.mxu0 %v1734
  %2104 = vmatprep.subr.bf16.mxu0 %v1765
  %2105 = vmatpush2.bf16.msra.mxu0 %v1764
  %2106 = vmatprep.subr.bf16.mxu0 %v1763
  %2107 = vmatpush2.bf16.msra.mxu0 %v1762
  %2108 = vmatprep.subr.bf16.mxu0 %v1761
  %2109 = vmatpush2.bf16.msra.mxu0 %v1760
  %2110 = vmatprep.subr.bf16.mxu0 %v1759
  %2111 = vmatpush2.bf16.msra.mxu0 %v1758
  %2112 = vmatprep.subr.bf16.mxu0 %v1757
  %2113 = vmatpush2.bf16.msra.mxu0 %v1756
  %2114 = vmatprep.subr.bf16.mxu0 %v1755
  %2115 = vmatpush2.bf16.msra.mxu0 %v1754
  %2116 = vmatprep.subr.bf16.mxu0 %v1753
  %2117 = vmatpush2.bf16.msra.mxu0 %v1752
  %2118 = vmatprep.subr.bf16.mxu0 %v1751
  %2119 = vmatpush2.bf16.msra.mxu0 %v1750
  %2120 = vmatprep.mubr.bf16.mxu0 %v332
  %2121 = vmatmul.mubr.bf16.gmra.mxu0 %v331
  %v2122 = vpop.f32.mrf.mxu0
  %v2123 = vadd.f32 %v2010, %v2122
  %v2124 = vpop.f32.mrf.mxu0
  %v2125 = vadd.f32 %v2012, %v2124
  %v2126 = vpop.f32.mrf.mxu0
  %v2127 = vadd.f32 %v2014, %v2126
  %v2128 = vpop.f32.mrf.mxu0
  %v2129 = vadd.f32 %v2016, %v2128
  %2130 = vmatprep.mubr.bf16.mxu0 %v338
  %2131 = vmatmul.mubr.bf16.gmra.mxu0 %v337
  %v2132 = vpop.f32.mrf.mxu0
  %v2133 = vadd.f32 %v2020, %v2132
  %v2134 = vpop.f32.mrf.mxu0
  %v2135 = vadd.f32 %v2022, %v2134
  %v2136 = vpop.f32.mrf.mxu0
  %v2137 = vadd.f32 %v2024, %v2136
  %v2138 = vpop.f32.mrf.mxu0
  %v2139 = vadd.f32 %v2026, %v2138
  %2140 = vmatprep.mubr.bf16.mxu0 %v344
  %2141 = vmatmul.mubr.bf16.gmra.mxu0 %v343
  %v2142 = vpop.f32.mrf.mxu0
  %v2143 = vadd.f32 %v2030, %v2142
  %v2144 = vpop.f32.mrf.mxu0
  %v2145 = vadd.f32 %v2032, %v2144
  %v2146 = vpop.f32.mrf.mxu0
  %v2147 = vadd.f32 %v2034, %v2146
  %v2148 = vpop.f32.mrf.mxu0
  %v2149 = vadd.f32 %v2036, %v2148
  %2150 = vmatprep.mubr.bf16.mxu0 %v350
  %2151 = vmatmul.mubr.bf16.gmra.mxu0 %v349
  %v2152 = vpop.f32.mrf.mxu0
  %v2153 = vadd.f32 %v2040, %v2152
  %v2154 = vpop.f32.mrf.mxu0
  %v2155 = vadd.f32 %v2042, %v2154
  %v2156 = vpop.f32.mrf.mxu0
  %v2157 = vadd.f32 %v2044, %v2156
  %v2158 = vpop.f32.mrf.mxu0
  %v2159 = vadd.f32 %v2046, %v2158
  %2160 = vmatprep.mubr.bf16.mxu0 %v356
  %2161 = vmatmul.mubr.bf16.gmra.mxu0 %v355
  %v2162 = vpop.f32.mrf.mxu0
  %v2163 = vadd.f32 %v2050, %v2162
  %v2164 = vpop.f32.mrf.mxu0
  %v2165 = vadd.f32 %v2052, %v2164
  %v2166 = vpop.f32.mrf.mxu0
  %v2167 = vadd.f32 %v2054, %v2166
  %v2168 = vpop.f32.mrf.mxu0
  %v2169 = vadd.f32 %v2056, %v2168
  %2170 = vmatprep.mubr.bf16.mxu0 %v362
  %2171 = vmatmul.mubr.bf16.gmra.mxu0 %v361
  %v2172 = vpop.f32.mrf.mxu0
  %v2173 = vadd.f32 %v2060, %v2172
  %v2174 = vpop.f32.mrf.mxu0
  %v2175 = vadd.f32 %v2062, %v2174
  %v2176 = vpop.f32.mrf.mxu0
  %v2177 = vadd.f32 %v2064, %v2176
  %v2178 = vpop.f32.mrf.mxu0
  %v2179 = vadd.f32 %v2066, %v2178
  %2180 = vmatprep.mubr.bf16.mxu0 %v368
  %2181 = vmatmul.mubr.bf16.gmra.mxu0 %v367
  %v2182 = vpop.f32.mrf.mxu0
  %v2183 = vadd.f32 %v2070, %v2182
  %v2184 = vpop.f32.mrf.mxu0
  %v2185 = vadd.f32 %v2072, %v2184
  %v2186 = vpop.f32.mrf.mxu0
  %v2187 = vadd.f32 %v2074, %v2186
  %v2188 = vpop.f32.mrf.mxu0
  %v2189 = vadd.f32 %v2076, %v2188
  %2190 = vmatprep.mubr.bf16.mxu0 %v374
  %2191 = vmatmul.mubr.bf16.gmra.mxu0 %v373
  %v2192 = vpop.f32.mrf.mxu0
  %v2193 = vadd.f32 %v2080, %v2192
  %v2194 = vpop.f32.mrf.mxu0
  %v2195 = vadd.f32 %v2082, %v2194
  %v2196 = vpop.f32.mrf.mxu0
  %v2197 = vadd.f32 %v2084, %v2196
  %v2198 = vpop.f32.mrf.mxu0
  %v2199 = vadd.f32 %v2086, %v2198
  %2200 = vdwg.mxu0
  %v2201 = vmax.f32 %v2123, 0.0
  %v2202 = vmax.f32 %v2125, 0.0
  %v2203 = vmax.f32 %v2127, 0.0
  %v2204 = vmax.f32 %v2129, 0.0
  %v2205 = vmax.f32 %v2133, 0.0
  %v2206 = vmax.f32 %v2135, 0.0
  %v2207 = vmax.f32 %v2137, 0.0
  %v2208 = vmax.f32 %v2139, 0.0
  %v2209 = vmax.f32 %v2143, 0.0
  %v2210 = vmax.f32 %v2145, 0.0
  %v2211 = vmax.f32 %v2147, 0.0
  %v2212 = vmax.f32 %v2149, 0.0
  %v2213 = vmax.f32 %v2153, 0.0
  %v2214 = vmax.f32 %v2155, 0.0
  %v2215 = vmax.f32 %v2157, 0.0
  %v2216 = vmax.f32 %v2159, 0.0
  %v2217 = vmax.f32 %v2163, 0.0
  %v2218 = vmax.f32 %v2165, 0.0
  %v2219 = vmax.f32 %v2167, 0.0
  %v2220 = vmax.f32 %v2169, 0.0
  %v2221 = vmax.f32 %v2173, 0.0
  %v2222 = vmax.f32 %v2175, 0.0
  %v2223 = vmax.f32 %v2177, 0.0
  %v2224 = vmax.f32 %v2179, 0.0
  %v2225 = vmax.f32 %v2183, 0.0
  %v2226 = vmax.f32 %v2185, 0.0
  %v2227 = vmax.f32 %v2187, 0.0
  %v2228 = vmax.f32 %v2189, 0.0
  %v2229 = vmax.f32 %v2193, 0.0
  %v2230 = vmax.f32 %v2195, 0.0
  %v2231 = vmax.f32 %v2197, 0.0
  %v2232 = vmax.f32 %v2199, 0.0
  %v2233 = vpack.c.bf16 %v2203, %v2201
  %v2234 = vpack.c.bf16 %v2204, %v2202
  %v2235 = vpack.c.bf16 %v2207, %v2205
  %v2236 = vpack.c.bf16 %v2208, %v2206
  %v2237 = vpack.c.bf16 %v2211, %v2209
  %v2238 = vpack.c.bf16 %v2212, %v2210
  %v2239 = vpack.c.bf16 %v2215, %v2213
  %v2240 = vpack.c.bf16 %v2216, %v2214
  %v2241 = vpack.c.bf16 %v2219, %v2217
  %v2242 = vpack.c.bf16 %v2220, %v2218
  %v2243 = vpack.c.bf16 %v2223, %v2221
  %v2244 = vpack.c.bf16 %v2224, %v2222
  %v2245 = vpack.c.bf16 %v2227, %v2225
  %v2246 = vpack.c.bf16 %v2228, %v2226
  %v2247 = vpack.c.bf16 %v2231, %v2229
  %v2248 = vpack.c.bf16 %v2232, %v2230
  %v2249 = vld [vmem:[%s5] sm:$0xf]
  %v2250 = vld [vmem:[%s5 + $0x4] sm:$0xf]
  %v2251 = vld [vmem:[%s5 + $0x8] sm:$0xf]
  %v2252 = vld [vmem:[%s5 + $0xc] sm:$0xf]
  %v2253 = vld [vmem:[%s5 + $0x10] sm:$0xf]
  %v2254 = vld [vmem:[%s5 + $0x14] sm:$0xf]
  %v2255 = vld [vmem:[%s5 + $0x18] sm:$0xf]
  %v2256 = vld [vmem:[%s5 + $0x1c] sm:$0xf]
  %v2257 = vld [vmem:[%s5 + $0x20] sm:$0xf]
  %v2258 = vld [vmem:[%s5 + $0x24] sm:$0xf]
  %v2259 = vld [vmem:[%s5 + $0x28] sm:$0xf]
  %v2260 = vld [vmem:[%s5 + $0x2c] sm:$0xf]
  %v2261 = vld [vmem:[%s5 + $0x30] sm:$0xf]
  %v2262 = vld [vmem:[%s5 + $0x34] sm:$0xf]
  %v2263 = vld [vmem:[%s5 + $0x38] sm:$0xf]
  %v2264 = vld [vmem:[%s5 + $0x3c] sm:$0xf]
  %v2265 = vld [vmem:[%s5 + $0x40] sm:$0xf]
  %v2266 = vld [vmem:[%s5 + $0x44] sm:$0xf]
  %v2267 = vld [vmem:[%s5 + $0x48] sm:$0xf]
  %v2268 = vld [vmem:[%s5 + $0x4c] sm:$0xf]
  %v2269 = vld [vmem:[%s5 + $0x50] sm:$0xf]
  %v2270 = vld [vmem:[%s5 + $0x54] sm:$0xf]
  %v2271 = vld [vmem:[%s5 + $0x58] sm:$0xf]
  %v2272 = vld [vmem:[%s5 + $0x5c] sm:$0xf]
  %v2273 = vld [vmem:[%s5 + $0x60] sm:$0xf]
  %v2274 = vld [vmem:[%s5 + $0x64] sm:$0xf]
  %v2275 = vld [vmem:[%s5 + $0x68] sm:$0xf]
  %v2276 = vld [vmem:[%s5 + $0x6c] sm:$0xf]
  %v2277 = vld [vmem:[%s5 + $0x70] sm:$0xf]
  %v2278 = vld [vmem:[%s5 + $0x74] sm:$0xf]
  %v2279 = vld [vmem:[%s5 + $0x78] sm:$0xf]
  %v2280 = vld [vmem:[%s5 + $0x7c] sm:$0xf]
  %v2281 = vld [vmem:[%s6] sm:$0x1]
  %v2283 = vlaneseq
  %v2284 = vshrl.u32 %v2283, 7
  %v2285 = vsub.s32 0, %v2284
  %v2286 = vrot.slane %v2281, %v2285
  %v2320 = vunpack.c.l.b16 %v2249
  %v2321 = vunpack.c.l.b16 %v2250
  %v2322 = vunpack.c.l.b16 %v2251
  %v2323 = vunpack.c.l.b16 %v2252
  %v2324 = vunpack.c.l.b16 %v2253
  %v2325 = vunpack.c.l.b16 %v2254
  %v2326 = vunpack.c.l.b16 %v2255
  %v2327 = vunpack.c.l.b16 %v2256
  %v2328 = vunpack.c.l.b16 %v2257
  %v2329 = vunpack.c.l.b16 %v2258
  %v2330 = vunpack.c.l.b16 %v2259
  %v2331 = vunpack.c.l.b16 %v2260
  %v2332 = vunpack.c.l.b16 %v2261
  %v2333 = vunpack.c.l.b16 %v2262
  %v2334 = vunpack.c.l.b16 %v2263
  %v2335 = vunpack.c.l.b16 %v2264
  %v2336 = vunpack.c.l.b16 %v2265
  %v2337 = vunpack.c.l.b16 %v2266
  %v2338 = vunpack.c.l.b16 %v2267
  %v2339 = vunpack.c.l.b16 %v2268
  %v2340 = vunpack.c.l.b16 %v2269
  %v2341 = vunpack.c.l.b16 %v2270
  %v2342 = vunpack.c.l.b16 %v2271
  %v2343 = vunpack.c.l.b16 %v2272
  %v2344 = vunpack.c.l.b16 %v2273
  %v2345 = vunpack.c.l.b16 %v2274
  %v2346 = vunpack.c.l.b16 %v2275
  %v2347 = vunpack.c.l.b16 %v2276
  %v2348 = vunpack.c.l.b16 %v2277
  %v2349 = vunpack.c.l.b16 %v2278
  %v2350 = vunpack.c.l.b16 %v2279
  %v2351 = vunpack.c.l.b16 %v2280
  %v2352 = vpack.c.b16 %v2321, %v2320
  %v2353 = vpack.c.b16 %v2323, %v2322
  %v2354 = vpack.c.b16 %v2325, %v2324
  %v2355 = vpack.c.b16 %v2327, %v2326
  %v2356 = vpack.c.b16 %v2329, %v2328
  %v2357 = vpack.c.b16 %v2331, %v2330
  %v2358 = vpack.c.b16 %v2333, %v2332
  %v2359 = vpack.c.b16 %v2335, %v2334
  %v2360 = vpack.c.b16 %v2337, %v2336
  %v2361 = vpack.c.b16 %v2339, %v2338
  %v2362 = vpack.c.b16 %v2341, %v2340
  %v2363 = vpack.c.b16 %v2343, %v2342
  %v2364 = vpack.c.b16 %v2345, %v2344
  %v2365 = vpack.c.b16 %v2347, %v2346
  %v2366 = vpack.c.b16 %v2349, %v2348
  %v2367 = vpack.c.b16 %v2351, %v2350
  %2384 = vmatprep.subr.bf16.mxu0 0
  %2385 = vmatpush1.bf16.msra.mxu0 %v2359
  %2386 = vmatprep.subr.bf16.mxu0 0
  %2387 = vmatpush1.bf16.msra.mxu0 %v2358
  %2388 = vmatprep.subr.bf16.mxu0 0
  %2389 = vmatpush1.bf16.msra.mxu0 %v2357
  %2390 = vmatprep.subr.bf16.mxu0 0
  %2391 = vmatpush1.bf16.msra.mxu0 %v2356
  %2392 = vmatprep.subr.bf16.mxu0 0
  %2393 = vmatpush1.bf16.msra.mxu0 %v2355
  %2394 = vmatprep.subr.bf16.mxu0 0
  %2395 = vmatpush1.bf16.msra.mxu0 %v2354
  %2396 = vmatprep.subr.bf16.mxu0 0
  %2397 = vmatpush1.bf16.msra.mxu0 %v2353
  %2398 = vmatprep.subr.bf16.mxu0 0
  %2399 = vmatpush1.bf16.msra.mxu0 %v2352
  %2400 = vmatprep.subr.bf16.mxu0 0
  %2401 = vmatpush2.bf16.msra.mxu0 %v2367
  %2402 = vmatprep.subr.bf16.mxu0 0
  %2403 = vmatpush2.bf16.msra.mxu0 %v2366
  %2404 = vmatprep.subr.bf16.mxu0 0
  %2405 = vmatpush2.bf16.msra.mxu0 %v2365
  %2406 = vmatprep.subr.bf16.mxu0 0
  %2407 = vmatpush2.bf16.msra.mxu0 %v2364
  %2408 = vmatprep.subr.bf16.mxu0 0
  %2409 = vmatpush2.bf16.msra.mxu0 %v2363
  %2410 = vmatprep.subr.bf16.mxu0 0
  %2411 = vmatpush2.bf16.msra.mxu0 %v2362
  %2412 = vmatprep.subr.bf16.mxu0 0
  %2413 = vmatpush2.bf16.msra.mxu0 %v2361
  %2414 = vmatprep.subr.bf16.mxu0 0
  %2415 = vmatpush2.bf16.msra.mxu0 %v2360
  %2416 = vmatprep.mubr.bf16.mxu0 %v2234
  %2417 = vmatmul.mubr.bf16.gmra.mxu0 %v2233
  %v2418 = vpop.f32.mrf.mxu0
  %v2419 = vadd.f32 %v2286, %v2418
  %v2420 = vpop.f32.mrf.mxu0
  %v2421 = vpop.f32.mrf.mxu0
  %v2422 = vadd.f32 %v2286, %v2421
  %v2423 = vpop.f32.mrf.mxu0
  %2424 = vmatprep.mubr.bf16.mxu0 %v2236
  %2425 = vmatmul.mubr.bf16.gmra.mxu0 %v2235
  %v2426 = vpop.f32.mrf.mxu0
  %v2427 = vadd.f32 %v2286, %v2426
  %v2428 = vpop.f32.mrf.mxu0
  %v2429 = vpop.f32.mrf.mxu0
  %v2430 = vadd.f32 %v2286, %v2429
  %v2431 = vpop.f32.mrf.mxu0
  %2432 = vmatprep.mubr.bf16.mxu0 %v2238
  %2433 = vmatmul.mubr.bf16.gmra.mxu0 %v2237
  %v2434 = vpop.f32.mrf.mxu0
  %v2435 = vadd.f32 %v2286, %v2434
  %v2436 = vpop.f32.mrf.mxu0
  %v2437 = vpop.f32.mrf.mxu0
  %v2438 = vadd.f32 %v2286, %v2437
  %v2439 = vpop.f32.mrf.mxu0
  %2440 = vmatprep.mubr.bf16.mxu0 %v2240
  %2441 = vmatmul.mubr.bf16.gmra.mxu0 %v2239
  %v2442 = vpop.f32.mrf.mxu0
  %v2443 = vadd.f32 %v2286, %v2442
  %v2444 = vpop.f32.mrf.mxu0
  %v2445 = vpop.f32.mrf.mxu0
  %v2446 = vadd.f32 %v2286, %v2445
  %v2447 = vpop.f32.mrf.mxu0
  %2448 = vmatprep.mubr.bf16.mxu0 %v2242
  %2449 = vmatmul.mubr.bf16.gmra.mxu0 %v2241
  %v2450 = vpop.f32.mrf.mxu0
  %v2451 = vadd.f32 %v2286, %v2450
  %v2452 = vpop.f32.mrf.mxu0
  %v2453 = vpop.f32.mrf.mxu0
  %v2454 = vadd.f32 %v2286, %v2453
  %v2455 = vpop.f32.mrf.mxu0
  %2456 = vmatprep.mubr.bf16.mxu0 %v2244
  %2457 = vmatmul.mubr.bf16.gmra.mxu0 %v2243
  %v2458 = vpop.f32.mrf.mxu0
  %v2459 = vadd.f32 %v2286, %v2458
  %v2460 = vpop.f32.mrf.mxu0
  %v2461 = vpop.f32.mrf.mxu0
  %v2462 = vadd.f32 %v2286, %v2461
  %v2463 = vpop.f32.mrf.mxu0
  %2464 = vmatprep.mubr.bf16.mxu0 %v2246
  %2465 = vmatmul.mubr.bf16.gmra.mxu0 %v2245
  %v2466 = vpop.f32.mrf.mxu0
  %v2467 = vadd.f32 %v2286, %v2466
  %v2468 = vpop.f32.mrf.mxu0
  %v2469 = vpop.f32.mrf.mxu0
  %v2470 = vadd.f32 %v2286, %v2469
  %v2471 = vpop.f32.mrf.mxu0
  %2472 = vmatprep.mubr.bf16.mxu0 %v2248
  %2473 = vmatmul.mubr.bf16.gmra.mxu0 %v2247
  %v2474 = vpop.f32.mrf.mxu0
  %v2475 = vadd.f32 %v2286, %v2474
  %v2476 = vpop.f32.mrf.mxu0
  %v2477 = vpop.f32.mrf.mxu0
  %v2478 = vadd.f32 %v2286, %v2477
  %v2479 = vpop.f32.mrf.mxu0
  %2480 = vdwg.mxu0
  %2513 = vrot.lane.b32.xlu0 %v1242, 56
  %v2514 = vpop.permute.xlu0 %2513
  %2515 = vrot.lane.b32.xlu0 %v1243, 56
  %v2516 = vpop.permute.xlu0 %2515
  %2517 = vrot.lane.b32.xlu0 %v1244, 56
  %v2518 = vpop.permute.xlu0 %2517
  %2519 = vrot.lane.b32.xlu0 %v1245, 56
  %v2520 = vpop.permute.xlu0 %2519
  %2521 = vrot.lane.b32.xlu0 %v1246, 56
  %v2522 = vpop.permute.xlu0 %2521
  %2523 = vrot.lane.b32.xlu0 %v1247, 56
  %v2524 = vpop.permute.xlu0 %2523
  %2525 = vrot.lane.b32.xlu0 %v1248, 56
  %v2526 = vpop.permute.xlu0 %2525
  %2527 = vrot.lane.b32.xlu0 %v1249, 56
  %v2528 = vpop.permute.xlu0 %2527
  %2529 = vrot.lane.b32.xlu0 %v1250, 56
  %v2530 = vpop.permute.xlu0 %2529
  %2531 = vrot.lane.b32.xlu0 %v1251, 56
  %v2532 = vpop.permute.xlu0 %2531
  %2533 = vrot.lane.b32.xlu0 %v1252, 56
  %v2534 = vpop.permute.xlu0 %2533
  %2535 = vrot.lane.b32.xlu0 %v1253, 56
  %v2536 = vpop.permute.xlu0 %2535
  %2537 = vrot.lane.b32.xlu0 %v1254, 56
  %v2538 = vpop.permute.xlu0 %2537
  %2539 = vrot.lane.b32.xlu0 %v1255, 56
  %v2540 = vpop.permute.xlu0 %2539
  %2541 = vrot.lane.b32.xlu0 %v1256, 56
  %v2542 = vpop.permute.xlu0 %2541
  %2543 = vrot.lane.b32.xlu0 %v1257, 56
  %v2544 = vpop.permute.xlu0 %2543
  %2545 = vrot.lane.b32.xlu0 %v1258, 56
  %v2546 = vpop.permute.xlu0 %2545
  %2547 = vrot.lane.b32.xlu0 %v1259, 56
  %v2548 = vpop.permute.xlu0 %2547
  %2549 = vrot.lane.b32.xlu0 %v1260, 56
  %v2550 = vpop.permute.xlu0 %2549
  %2551 = vrot.lane.b32.xlu0 %v1261, 56
  %v2552 = vpop.permute.xlu0 %2551
  %2553 = vrot.lane.b32.xlu0 %v1262, 56
  %v2554 = vpop.permute.xlu0 %2553
  %2555 = vrot.lane.b32.xlu0 %v1263, 56
  %v2556 = vpop.permute.xlu0 %2555
  %2557 = vrot.lane.b32.xlu0 %v1264, 56
  %v2558 = vpop.permute.xlu0 %2557
  %2559 = vrot.lane.b32.xlu0 %v1265, 56
  %v2560 = vpop.permute.xlu0 %2559
  %2561 = vrot.lane.b32.xlu0 %v1266, 56
  %v2562 = vpop.permute.xlu0 %2561
  %2563 = vrot.lane.b32.xlu0 %v1267, 56
  %v2564 = vpop.permute.xlu0 %2563
  %2565 = vrot.lane.b32.xlu0 %v1268, 56
  %v2566 = vpop.permute.xlu0 %2565
  %2567 = vrot.lane.b32.xlu0 %v1269, 56
  %v2568 = vpop.permute.xlu0 %2567
  %2569 = vrot.lane.b32.xlu0 %v1270, 56
  %v2570 = vpop.permute.xlu0 %2569
  %2571 = vrot.lane.b32.xlu0 %v1271, 56
  %v2572 = vpop.permute.xlu0 %2571
  %2573 = vrot.lane.b32.xlu0 %v1272, 56
  %v2574 = vpop.permute.xlu0 %2573
  %2575 = vrot.lane.b32.xlu0 %v1273, 56
  %v2576 = vpop.permute.xlu0 %2575
  %vm2577 = vcmask 457728
  %v2578 = vsel %vm2577, %v2514, %v2516
  %v2579 = vsel %vm2577, %v2518, %v2520
  %v2580 = vsel %vm2577, %v2522, %v2524
  %v2581 = vsel %vm2577, %v2526, %v2528
  %v2582 = vsel %vm2577, %v2530, %v2532
  %v2583 = vsel %vm2577, %v2534, %v2536
  %v2584 = vsel %vm2577, %v2538, %v2540
  %v2585 = vsel %vm2577, %v2542, %v2544
  %v2586 = vsel %vm2577, %v2546, %v2548
  %v2587 = vsel %vm2577, %v2550, %v2552
  %v2588 = vsel %vm2577, %v2554, %v2556
  %v2589 = vsel %vm2577, %v2558, %v2560
  %v2590 = vsel %vm2577, %v2562, %v2564
  %v2591 = vsel %vm2577, %v2566, %v2568
  %v2592 = vsel %vm2577, %v2570, %v2572
  %v2593 = vsel %vm2577, %v2574, %v2576
  %v2626 = vsel %vm2577, %v2419, %v2514
  %v2627 = vsel %vm2577, %v2422, %v2518
  %v2628 = vsel %vm2577, %v2427, %v2522
  %v2629 = vsel %vm2577, %v2430, %v2526
  %v2630 = vsel %vm2577, %v2435, %v2530
  %v2631 = vsel %vm2577, %v2438, %v2534
  %v2632 = vsel %vm2577, %v2443, %v2538
  %v2633 = vsel %vm2577, %v2446, %v2542
  %v2634 = vsel %vm2577, %v2451, %v2546
  %v2635 = vsel %vm2577, %v2454, %v2550
  %v2636 = vsel %vm2577, %v2459, %v2554
  %v2637 = vsel %vm2577, %v2462, %v2558
  %v2638 = vsel %vm2577, %v2467, %v2562
  %v2639 = vsel %vm2577, %v2470, %v2566
  %v2640 = vsel %vm2577, %v2475, %v2570
  %v2641 = vsel %vm2577, %v2478, %v2574
  %2642 = vst [vmem:[%s7] sm:$0xff] %v2626
  %2643 = vst [vmem:[%s7 + $0x8] sm:$0xff] %v2578
  %2644 = vst [vmem:[%s7 + $0x10] sm:$0xff] %v2627
  %2645 = vst [vmem:[%s7 + $0x18] sm:$0xff] %v2579
  %2646 = vst [vmem:[%s7 + $0x20] sm:$0xff] %v2628
  %2647 = vst [vmem:[%s7 + $0x28] sm:$0xff] %v2580
  %2648 = vst [vmem:[%s7 + $0x30] sm:$0xff] %v2629
  %2649 = vst [vmem:[%s7 + $0x38] sm:$0xff] %v2581
  %2650 = vst [vmem:[%s7 + $0x40] sm:$0xff] %v2630
  %2651 = vst [vmem:[%s7 + $0x48] sm:$0xff] %v2582
  %2652 = vst [vmem:[%s7 + $0x50] sm:$0xff] %v2631
  %2653 = vst [vmem:[%s7 + $0x58] sm:$0xff] %v2583
  %2654 = vst [vmem:[%s7 + $0x60] sm:$0xff] %v2632
  %2655 = vst [vmem:[%s7 + $0x68] sm:$0xff] %v2584
  %2656 = vst [vmem:[%s7 + $0x70] sm:$0xff] %v2633
  %2657 = vst [vmem:[%s7 + $0x78] sm:$0xff] %v2585
  %2658 = vst [vmem:[%s7 + $0x80] sm:$0xff] %v2634
  %2659 = vst [vmem:[%s7 + $0x88] sm:$0xff] %v2586
  %2660 = vst [vmem:[%s7 + $0x90] sm:$0xff] %v2635
  %2661 = vst [vmem:[%s7 + $0x98] sm:$0xff] %v2587
  %2662 = vst [vmem:[%s7 + $0xa0] sm:$0xff] %v2636
  %2663 = vst [vmem:[%s7 + $0xa8] sm:$0xff] %v2588
  %2664 = vst [vmem:[%s7 + $0xb0] sm:$0xff] %v2637
  %2665 = vst [vmem:[%s7 + $0xb8] sm:$0xff] %v2589
  %2666 = vst [vmem:[%s7 + $0xc0] sm:$0xff] %v2638
  %2667 = vst [vmem:[%s7 + $0xc8] sm:$0xff] %v2590
  %2668 = vst [vmem:[%s7 + $0xd0] sm:$0xff] %v2639
  %2669 = vst [vmem:[%s7 + $0xd8] sm:$0xff] %v2591
  %2670 = vst [vmem:[%s7 + $0xe0] sm:$0xff] %v2640
  %2671 = vst [vmem:[%s7 + $0xe8] sm:$0xff] %v2592
  %2672 = vst [vmem:[%s7 + $0xf0] sm:$0xff] %v2641
  %2673 = vst [vmem:[%s7 + $0xf8] sm:$0xff] %v2593
  // Predicated region
  $region30: #{spatial_attention_pretrained_fe_forward.2} parent=0 // pred_check
    _
  $region31: #{spatial_attention_pretrained_fe_forward.2} parent=0 // pred_check_branch
    %2675 = sbr.rel (0) target = $region33
  $region32: #{spatial_attention_pretrained_fe_forward.2} parent=0 // pred_region
    _
  $region33: #{spatial_attention_pretrained_fe_forward.2} parent=0 // pred_fallthru
    _
  // Predicated region
  $region34: #{spatial_attention_pretrained_fe_forward.2} parent=0 // pred_check
    _
  $region35: #{spatial_attention_pretrained_fe_forward.2} parent=0 // pred_check_branch
    %2677 = sbr.rel (0) target = $region37
  $region36: #{spatial_attention_pretrained_fe_forward.2} parent=0 // pred_region
    _
  $region37: #{spatial_attention_pretrained_fe_forward.2} parent=0 // pred_fallthru
    _

</llo_original>
